<compile_context>
chip_gen: v7x
topology: tpu7x:2x2x1
jax: 0.10.0
libtpu: 0.0.40
codegen_flags: <defaults>
</compile_context>

<pallas_src>
import math
import jax
import jax.numpy as jnp
from jax import lax
from jax.experimental import pallas as pl
from jax.experimental.pallas import tpu as pltpu  # noqa: F401  (TPU backend)

# ----------------------------- config -------------------------------------------------
B        = 2            # batch
HORIZON  = 8            # horizon (decoder tokens T)
N_OBS    = 4            # n_obs_steps
N_EMB    = 64           # num_embedding_channels == cond_dim == n_emb
N_HEAD   = 4
HEAD_DIM = N_EMB // N_HEAD
N_LAYER  = 2            # module default is 8 (kept small for the demo); for 8 layers
                        # switch the static layer loop to lax.fori_loop over lyr_ref[l].
ACT_DIM  = 8            # action_dim == transformer input_dim == output_dim
FF_DIM   = 4 * N_EMB
T_COND   = 1 + N_OBS    # [time token, obs tokens]
LN_EPS   = 1e-5
NEG_INF  = -1e30

N_TOK    = B * HORIZON          # decoder rows (batch folded into sublanes)
M_TOK    = B * T_COND           # memory rows
HN       = N_HEAD * N_TOK       # head-folded decoder rows
HM       = N_HEAD * M_TOK       # head-folded memory rows
OUT_PAD  = 128                  # lane-dense output width (ACT_DIM zero-padded)

CONST_W  = FF_DIM               # const slab lane width (256)
LAYER_W  = max(3 * N_EMB, FF_DIM)


# ----------------------------- packed-slab layouts ------------------------------------
def _make_layout(pieces):
    """pieces: [(name, rows, cols)] -> ({name: (row_off, rows, cols)}, total_rows).
    Matrix pieces (rows >= 8) are 8-sublane aligned; 1-row biases are packed densely."""
    layout, off = {}, 0
    for name, rows, cols in pieces:
        if rows >= 8:
            off = -(-off // 8) * 8
        layout[name] = (off, rows, cols)
        off += rows
    return layout, -(-off // 8) * 8


_CONST_LAYOUT, _CONST_ROWS = _make_layout([
    ('cobs_b', 1, N_EMB), ('enc_b1', 1, FF_DIM), ('enc_b2', 1, N_EMB),
    ('lnf_g', 1, N_EMB), ('lnf_b', 1, N_EMB), ('head_b', 1, OUT_PAD),
    ('x_init', N_TOK, N_EMB),          # tile_B(pos_emb + input_emb_b)  (zero sample)
    ('cpos', M_TOK, N_EMB),            # tile_B(cond_pos_emb)
    ('obs_sel', M_TOK, N_EMB),         # 1 on obs rows, 0 on the time row
    ('cobs_w', N_EMB, N_EMB),
    ('enc_w1', N_EMB, FF_DIM),
    ('enc_w2', FF_DIM, N_EMB),
    ('self_mask', HN, HN),             # head-block & batch-block & causal additive mask
    ('cross_mask', HN, HM),            # head-block & batch-block & (t >= s-1) additive mask
    ('khead_self', HN, N_EMB),         # 0/1 head-lane selector for folded K/V rows
    ('khead_cross', HM, N_EMB),
    ('head_w', N_EMB, OUT_PAD),
])

_LAYER_LAYOUT, _LAYER_ROWS = _make_layout([
    ('ln1_g', 1, N_EMB), ('ln1_b', 1, N_EMB),
    ('ln2_g', 1, N_EMB), ('ln2_b', 1, N_EMB),
    ('ln3_g', 1, N_EMB), ('ln3_b', 1, N_EMB),
    ('sa_bqkv', 1, 3 * N_EMB), ('sa_bo', 1, N_EMB),
    ('ca_bq', 1, N_EMB), ('ca_bkv', 1, 2 * N_EMB), ('ca_bo', 1, N_EMB),
    ('ff_b1', 1, FF_DIM), ('ff_b2', 1, N_EMB),
    ('sa_wqkv', N_EMB, 3 * N_EMB),     # [Wq*scale | Wk | Wv]
    ('sa_wo', N_EMB, N_EMB),
    ('ca_wq', N_EMB, N_EMB),           # Wq*scale
    ('ca_wkv', N_EMB, 2 * N_EMB),      # [Wk | Wv]
    ('ca_wo', N_EMB, N_EMB),
    ('ff_w1', N_EMB, FF_DIM),
    ('ff_w2', FF_DIM, N_EMB),
])


# ----------------------------- in-kernel math helpers ----------------------------------
def _layernorm(x, g, b):
    mu = jnp.mean(x, axis=-1, keepdims=True)
    var = jnp.mean(jnp.square(x - mu), axis=-1, keepdims=True)
    return (x - mu) * lax.rsqrt(var + LN_EPS) * g + b


def _gelu(x):
    # tanh-approx GELU: transcendental goes to the EUP slot (see TODO at top re: exact erf)
    c = math.sqrt(2.0 / math.pi)
    return 0.5 * x * (1.0 + jnp.tanh(c * (x + 0.044715 * x * x * x)))


def _mish(x):
    sp = jnp.maximum(x, 0.0) + jnp.log(1.0 + jnp.exp(-jnp.abs(x)))  # stable softplus
    return x * jnp.tanh(sp)


def _softmax(x):
    m = jnp.max(x, axis=-1, keepdims=True)
    e = jnp.exp(x - m)
    return e * pl.reciprocal(jnp.sum(e, axis=-1, keepdims=True), approx=True)


# ----------------------------- the single fused Pallas kernel --------------------------
def _fused_forward_kernel(cond_in_ref, cst_ref, lyr_ref, o_ref):
    # static-offset slab slicers (offsets are Python ints shared with the host packer)
    def C(name):
        off, r, c = _CONST_LAYOUT[name]
        return cst_ref[off:off + r, 0:c]

    def Lw(l, name):
        off, r, c = _LAYER_LAYOUT[name]
        return lyr_ref[l, off:off + r, 0:c]

    # ---- condition tokens: time row passes through, obs rows get cond_obs_emb ---------
    cond_in = cond_in_ref[...]                                       # (M_TOK, D)
    obs_sel = C('obs_sel')                                           # (M_TOK, D) 0/1
    obs_proj = (jnp.dot(cond_in, C('cobs_w'), preferred_element_type=jnp.float32)
                + C('cobs_b'))
    cond = obs_sel * obs_proj + (1.0 - obs_sel) * cond_in + C('cpos')

    # ---- condition encoder (n_cond_layers == 0): Linear -> Mish -> Linear -------------
    h = jnp.dot(cond, C('enc_w1'), preferred_element_type=jnp.float32) + C('enc_b1')
    mem = (jnp.dot(_mish(h), C('enc_w2'), preferred_element_type=jnp.float32)
           + C('enc_b2'))                                            # (M_TOK, D)

    # ---- precomputed masks (const slab, no in-kernel iota chains) ----------------------
    self_mask = C('self_mask')       # (HN, HN)
    cross_mask = C('cross_mask')     # (HN, HM)
    kh_self = C('khead_self')        # (HN, D)
    kh_cross = C('khead_cross')      # (HM, D)

    # ---- decoder input: zero action sample -> input_emb bias + pos emb (precomputed) ---
    x = C('x_init')                                                  # (N_TOK, D)

    def attn(q, k, v, khead, amask, wo, bo):
        # q: (n, D) already Q-scaled; k, v: (m, D); heads folded into sublanes.
        n = q.shape[0]
        qt = jnp.concatenate([q] * N_HEAD, axis=0)                   # (H*n, D)
        kt = jnp.concatenate([k] * N_HEAD, axis=0) * khead           # (H*m, D), head lanes only
        vt = jnp.concatenate([v] * N_HEAD, axis=0) * khead
        s = lax.dot_general(qt, kt, (((1,), (1,)), ((), ())),
                            preferred_element_type=jnp.float32) + amask
        p = _softmax(s)                                              # off-head/off-batch -> 0
        ctxf = jnp.dot(p, vt, preferred_element_type=jnp.float32)    # (H*n, D) block-sparse
        ctx = ctxf[0:n]                                              # row-block sum == lane-
        for hh in range(1, N_HEAD):                                  # concat of head outputs
            ctx = ctx + ctxf[hh * n:(hh + 1) * n]
        return jnp.dot(ctx, wo, preferred_element_type=jnp.float32) + bo

    # ---- decoder trunk: pre-LN self-attn + cross-attn + GELU FFN -----------------------
    for l in range(N_LAYER):        # static unroll (N_LAYER=2); use fori_loop for 8 layers
        xn = _layernorm(x, Lw(l, 'ln1_g'), Lw(l, 'ln1_b'))
        qkv = (jnp.dot(xn, Lw(l, 'sa_wqkv'), preferred_element_type=jnp.float32)
               + Lw(l, 'sa_bqkv'))                                   # (N_TOK, 3D), one matmul
        x = x + attn(qkv[:, 0:N_EMB], qkv[:, N_EMB:2 * N_EMB], qkv[:, 2 * N_EMB:3 * N_EMB],
                     kh_self, self_mask, Lw(l, 'sa_wo'), Lw(l, 'sa_bo'))

        xn = _layernorm(x, Lw(l, 'ln2_g'), Lw(l, 'ln2_b'))
        q = (jnp.dot(xn, Lw(l, 'ca_wq'), preferred_element_type=jnp.float32)
             + Lw(l, 'ca_bq'))
        kv = (jnp.dot(mem, Lw(l, 'ca_wkv'), preferred_element_type=jnp.float32)
              + Lw(l, 'ca_bkv'))                                     # (M_TOK, 2D), one matmul
        x = x + attn(q, kv[:, 0:N_EMB], kv[:, N_EMB:2 * N_EMB],
                     kh_cross, cross_mask, Lw(l, 'ca_wo'), Lw(l, 'ca_bo'))

        xn = _layernorm(x, Lw(l, 'ln3_g'), Lw(l, 'ln3_b'))
        hh = _gelu(jnp.dot(xn, Lw(l, 'ff_w1'), preferred_element_type=jnp.float32)
                   + Lw(l, 'ff_b1'))
        x = x + (jnp.dot(hh, Lw(l, 'ff_w2'), preferred_element_type=jnp.float32)
                 + Lw(l, 'ff_b2'))

    # ---- final LayerNorm + head over ALL rows; lane-dense (N_TOK, 128) store ------------
    xn = _layernorm(x, C('lnf_g'), C('lnf_b'))
    o_ref[...] = (jnp.dot(xn, C('head_w'), preferred_element_type=jnp.float32)
                  + C('head_b'))


# ----------------------------- host-side constant builders -----------------------------
def _build_attn_constants():
    lane_head = jnp.arange(N_EMB) // HEAD_DIM                         # head id of each lane
    # decoder rows folded as (head, batch, t)
    ri = jnp.arange(HN)
    rh, rr = ri // N_TOK, ri % N_TOK
    rb, rt = rr // HORIZON, rr % HORIZON
    # self-attn: same head, same batch, causal
    ok_self = ((rh[:, None] == rh[None, :]) & (rb[:, None] == rb[None, :])
               & (rt[None, :] <= rt[:, None]))
    self_mask = jnp.where(ok_self, 0.0, NEG_INF).astype(jnp.float32)
    # memory cols folded as (head, batch, s)
    ci = jnp.arange(HM)
    ch, cr = ci // M_TOK, ci % M_TOK
    cb, cs = cr // T_COND, cr % T_COND
    ok_cross = ((rh[:, None] == ch[None, :]) & (rb[:, None] == cb[None, :])
                & (rt[:, None] >= cs[None, :] - 1))                   # memory mask t >= s-1
    cross_mask = jnp.where(ok_cross, 0.0, NEG_INF).astype(jnp.float32)
    khead_self = (lane_head[None, :] == rh[:, None]).astype(jnp.float32)
    khead_cross = (lane_head[None, :] == ch[:, None]).astype(jnp.float32)
    obs_sel = ((jnp.arange(M_TOK) % T_COND) != 0).astype(jnp.float32)
    obs_sel = jnp.broadcast_to(obs_sel[:, None], (M_TOK, N_EMB))
    return self_mask, cross_mask, khead_self, khead_cross, obs_sel


def _pack_slab(layout, total_rows, width, values):
    slab = jnp.zeros((total_rows, width), jnp.float32)
    for name, (off, r, c) in layout.items():
        v = jnp.asarray(values[name], jnp.float32).reshape(r, c)
        slab = slab.at[off:off + r, :c].set(v)
    return slab


def pack_params(params):
    """Pack module-style parameters into the two kernel slabs (done once, outside jit)."""
    qs = 1.0 / math.sqrt(HEAD_DIM)        # folded into Q projection weights & biases
    self_mask, cross_mask, khead_self, khead_cross, obs_sel = _build_attn_constants()

    const_vals = {
        'cobs_b': params['cond_obs_emb_b'],
        'enc_b1': params['enc_b1'], 'enc_b2': params['enc_b2'],
        'lnf_g': params['ln_f_g'], 'lnf_b': params['ln_f_b'],
        'head_b': jnp.zeros((1, OUT_PAD), jnp.float32).at[:, :ACT_DIM].set(params['head_b']),
        # zero diffusion sample => input_emb(sample) == input_emb_b (input_emb_w unused)
        'x_init': jnp.tile(params['pos_emb'] + params['input_emb_b'], (B, 1)),
        'cpos': jnp.tile(params['cond_pos_emb'], (B, 1)),
        'obs_sel': obs_sel,
        'cobs_w': params['cond_obs_emb_w'],
        'enc_w1': params['enc_w1'], 'enc_w2': params['enc_w2'],
        'self_mask': self_mask, 'cross_mask': cross_mask,
        'khead_self': khead_self, 'khead_cross': khead_cross,
        'head_w': jnp.zeros((N_EMB, OUT_PAD), jnp.float32).at[:, :ACT_DIM].set(params['head_w']),
    }
    const_slab = _pack_slab(_CONST_LAYOUT, _CONST_ROWS, CONST_W, const_vals)

    layer_slabs = []
    for l in range(N_LAYER):
        vals = {
            'ln1_g': params['ln1_g'][l], 'ln1_b': params['ln1_b'][l],
            'ln2_g': params['ln2_g'][l], 'ln2_b': params['ln2_b'][l],
            'ln3_g': params['ln3_g'][l], 'ln3_b': params['ln3_b'][l],
            'sa_wqkv': jnp.concatenate([params['sa_wq'][l] * qs,
                                        params['sa_wk'][l],
                                        params['sa_wv'][l]], axis=1),
            'sa_bqkv': jnp.concatenate([params['sa_bq'][l] * qs,
                                        params['sa_bk'][l],
                                        params['sa_bv'][l]], axis=1),
            'sa_wo': params['sa_wo'][l], 'sa_bo': params['sa_bo'][l],
            'ca_wq': params['ca_wq'][l] * qs, 'ca_bq': params['ca_bq'][l] * qs,
            'ca_wkv': jnp.concatenate([params['ca_wk'][l], params['ca_wv'][l]], axis=1),
            'ca_bkv': jnp.concatenate([params['ca_bk'][l], params['ca_bv'][l]], axis=1),
            'ca_wo': params['ca_wo'][l], 'ca_bo': params['ca_bo'][l],
            'ff_w1': params['ff_w1'][l], 'ff_b1': params['ff_b1'][l],
            'ff_w2': params['ff_w2'][l], 'ff_b2': params['ff_b2'][l],
        }
        layer_slabs.append(_pack_slab(_LAYER_LAYOUT, _LAYER_ROWS, LAYER_W, vals))
    return {'const': const_slab, 'layer': jnp.stack(layer_slabs, axis=0)}


# ----------------------------- parameters (deterministic) ------------------------------
def _init_params(key):
    keys = iter(jax.random.split(key, 256))

    def nrm(shape, scale=0.02):
        return (scale * jax.random.normal(next(keys), shape)).astype(jnp.float32)

    def stack(shape):
        return jnp.stack([nrm(shape) for _ in range(N_LAYER)], axis=0)

    ones_l = jnp.ones((N_LAYER, 1, N_EMB), jnp.float32)
    zeros_l = jnp.zeros((N_LAYER, 1, N_EMB), jnp.float32)
    p = {
        'input_emb_w': nrm((ACT_DIM, N_EMB)),   # unused: the action sample is always zero
        'input_emb_b': nrm((1, N_EMB)),
        'pos_emb': nrm((HORIZON, N_EMB)),
        'cond_pos_emb': nrm((T_COND, N_EMB)),
        'cond_obs_emb_w': nrm((N_EMB, N_EMB)), 'cond_obs_emb_b': nrm((1, N_EMB)),
        'enc_w1': nrm((N_EMB, FF_DIM)), 'enc_b1': nrm((1, FF_DIM)),
        'enc_w2': nrm((FF_DIM, N_EMB)), 'enc_b2': nrm((1, N_EMB)),
        'ln_f_g': jnp.ones((1, N_EMB), jnp.float32),
        'ln_f_b': jnp.zeros((1, N_EMB), jnp.float32),
        'head_w': nrm((N_EMB, ACT_DIM)), 'head_b': nrm((1, ACT_DIM)),
        'ln1_g': ones_l, 'ln1_b': zeros_l,
        'ln2_g': ones_l, 'ln2_b': zeros_l,
        'ln3_g': ones_l, 'ln3_b': zeros_l,
        'sa_wq': stack((N_EMB, N_EMB)), 'sa_bq': stack((1, N_EMB)),
        'sa_wk': stack((N_EMB, N_EMB)), 'sa_bk': stack((1, N_EMB)),
        'sa_wv': stack((N_EMB, N_EMB)), 'sa_bv': stack((1, N_EMB)),
        'sa_wo': stack((N_EMB, N_EMB)), 'sa_bo': stack((1, N_EMB)),
        'ca_wq': stack((N_EMB, N_EMB)), 'ca_bq': stack((1, N_EMB)),
        'ca_wk': stack((N_EMB, N_EMB)), 'ca_bk': stack((1, N_EMB)),
        'ca_wv': stack((N_EMB, N_EMB)), 'ca_bv': stack((1, N_EMB)),
        'ca_wo': stack((N_EMB, N_EMB)), 'ca_bo': stack((1, N_EMB)),
        'ff_w1': stack((N_EMB, FF_DIM)), 'ff_b1': stack((1, FF_DIM)),
        'ff_w2': stack((FF_DIM, N_EMB)), 'ff_b2': stack((1, N_EMB)),
    }
    return p


# ----------------------------- glue (plain JAX) -----------------------------------------
def _sinusoidal_time_emb(timesteps, dim):
    half = dim // 2
    freqs = jnp.exp(jnp.arange(half, dtype=jnp.float32) * (-math.log(10000.0) / (half - 1)))
    arg = timesteps[:, None].astype(jnp.float32) * freqs[None, :]
    return jnp.concatenate([jnp.sin(arg), jnp.cos(arg)], axis=-1)   # (B, dim)


def transformer_backbone_forward(packed, observation_embedding):
    assert observation_embedding.shape == (B, N_OBS, N_EMB)
    # TransformerBackbone.forward: zero action sample (folded into x_init) + zero timesteps
    timesteps = jnp.zeros((B,), jnp.float32)
    time_emb = _sinusoidal_time_emb(timesteps, N_EMB)                # (B, D)
    # interleave condition tokens per batch: row (b,0)=time, rows (b,1..N_OBS)=obs
    cond_in = jnp.concatenate(
        [time_emb[:, None, :], observation_embedding.astype(jnp.float32)], axis=1)
    cond_in = cond_in.reshape(M_TOK, N_EMB)                          # (B*T_COND, D)

    out = pl.pallas_call(
        _fused_forward_kernel,
        out_shape=jax.ShapeDtypeStruct((N_TOK, OUT_PAD), jnp.float32),
    )(cond_in, packed['const'], packed['layer'])

    # row/lane select outside the kernel (lane-dense store inside)
    return out.reshape(B, HORIZON, OUT_PAD)[:, N_OBS - 1, :ACT_DIM]


if __name__ == "__main__":
    key = jax.random.PRNGKey(0)
    pkey, okey = jax.random.split(key)
    params = _init_params(pkey)
    packed = pack_params(params)     # one-time host-side packing into 2 slabs
    # synthetic observation embedding the (abstract) ObservationEncoder would produce
    observation_embedding = jax.random.normal(okey, (B, N_OBS, N_EMB), dtype=jnp.float32)

    fwd = jax.jit(transformer_backbone_forward)
    actions = fwd(packed, observation_embedding)
    actions = jax.block_until_ready(actions)
    assert actions.shape == (B, ACT_DIM)
    assert bool(jnp.all(jnp.isfinite(actions)))
    print("KERNEL_OK")
</pallas_src>

<mosaic_0001>
module attributes {stable_mosaic.version = 11 : i64} {
  func.func @_fused_forward_kernel(%arg0: memref<10x64xf32, #tpu.memory_space<vmem>>, %arg1: memref<736x256xf32, #tpu.memory_space<vmem>>, %arg2: memref<2x656x256xf32, #tpu.memory_space<vmem>>, %arg3: memref<16x128xf32, #tpu.memory_space<vmem>>) attributes {dimension_semantics = [], scalar_prefetch = 0 : i64, scratch_operands = 0 : i64, tpu.core_type = #tpu.core_type<tc>} {
    %c0 = arith.constant 0 : index
    %c0_0 = arith.constant 0 : index
    %0 = vector.load %arg0[%c0, %c0_0] : memref<10x64xf32, #tpu.memory_space<vmem>>, vector<10x64xf32>
    %c40 = arith.constant 40 : index
    %c0_1 = arith.constant 0 : index
    %1 = vector.load %arg1[%c40, %c0_1] : memref<736x256xf32, #tpu.memory_space<vmem>>, vector<10x64xf32>
    %c56 = arith.constant 56 : index
    %c0_2 = arith.constant 0 : index
    %2 = vector.load %arg1[%c56, %c0_2] : memref<736x256xf32, #tpu.memory_space<vmem>>, vector<64x64xf32>
    %cst = arith.constant dense<0.000000e+00> : vector<10x64xf32>
    %3 = tpu.matmul %0, %2, %cst {dimension_numbers = #tpu.dot_dimension_numbers<[1], [0], [0], [1], [0, 0, 1, 1], [], []>} : vector<10x64xf32>, vector<64x64xf32>, vector<10x64xf32> -> vector<10x64xf32>
    %c0_3 = arith.constant 0 : index
    %c0_4 = arith.constant 0 : index
    %4 = vector.load %arg1[%c0_3, %c0_4] : memref<736x256xf32, #tpu.memory_space<vmem>>, vector<1x64xf32>
    %5 = vector.broadcast %4 : vector<1x64xf32> to vector<10x64xf32>
    %6 = arith.addf %3, %5 : vector<10x64xf32>
    %7 = arith.mulf %1, %6 : vector<10x64xf32>
    %cst_5 = arith.constant 1.000000e+00 : f32
    %8 = vector.broadcast %cst_5 : f32 to vector<10x64xf32>
    %9 = arith.subf %8, %1 : vector<10x64xf32>
    %10 = arith.mulf %9, %0 : vector<10x64xf32>
    %11 = arith.addf %7, %10 : vector<10x64xf32>
    %c24 = arith.constant 24 : index
    %c0_6 = arith.constant 0 : index
    %12 = vector.load %arg1[%c24, %c0_6] : memref<736x256xf32, #tpu.memory_space<vmem>>, vector<10x64xf32>
    %13 = arith.addf %11, %12 : vector<10x64xf32>
    %c120 = arith.constant 120 : index
    %c0_7 = arith.constant 0 : index
    %14 = vector.load %arg1[%c120, %c0_7] : memref<736x256xf32, #tpu.memory_space<vmem>>, vector<64x256xf32>
    %cst_8 = arith.constant dense<0.000000e+00> : vector<10x256xf32>
    %15 = tpu.matmul %13, %14, %cst_8 {dimension_numbers = #tpu.dot_dimension_numbers<[1], [0], [0], [1], [0, 0, 1, 1], [], []>} : vector<10x64xf32>, vector<64x256xf32>, vector<10x256xf32> -> vector<10x256xf32>
    %c1 = arith.constant 1 : index
    %c0_9 = arith.constant 0 : index
    %16 = vector.load %arg1[%c1, %c0_9] : memref<736x256xf32, #tpu.memory_space<vmem>>, vector<1x256xf32>
    %17 = vector.broadcast %16 : vector<1x256xf32> to vector<10x256xf32>
    %18 = arith.addf %15, %17 : vector<10x256xf32>
    %cst_10 = arith.constant 0.000000e+00 : f32
    %19 = vector.broadcast %cst_10 : f32 to vector<10x256xf32>
    %20 = arith.maximumf %18, %19 : vector<10x256xf32>
    %21 = math.absf %18 : vector<10x256xf32>
    %cst_11 = arith.constant 0.000000e+00 : f32
    %22 = vector.broadcast %cst_11 : f32 to vector<10x256xf32>
    %23 = arith.subf %22, %21 : vector<10x256xf32>
    %24 = math.exp %23 : vector<10x256xf32>
    %cst_12 = arith.constant 1.000000e+00 : f32
    %25 = vector.broadcast %cst_12 : f32 to vector<10x256xf32>
    %26 = arith.addf %25, %24 : vector<10x256xf32>
    %27 = math.log %26 : vector<10x256xf32>
    %28 = arith.addf %20, %27 : vector<10x256xf32>
    %29 = math.tanh %28 : vector<10x256xf32>
    %30 = arith.mulf %18, %29 : vector<10x256xf32>
    %c184 = arith.constant 184 : index
    %c0_13 = arith.constant 0 : index
    %31 = vector.load %arg1[%c184, %c0_13] : memref<736x256xf32, #tpu.memory_space<vmem>>, vector<256x64xf32>
    %cst_14 = arith.constant dense<0.000000e+00> : vector<10x64xf32>
    %32 = tpu.matmul %30, %31, %cst_14 {dimension_numbers = #tpu.dot_dimension_numbers<[1], [0], [0], [1], [0, 0, 1, 1], [], []>} : vector<10x256xf32>, vector<256x64xf32>, vector<10x64xf32> -> vector<10x64xf32>
    %c2 = arith.constant 2 : index
    %c0_15 = arith.constant 0 : index
    %33 = vector.load %arg1[%c2, %c0_15] : memref<736x256xf32, #tpu.memory_space<vmem>>, vector<1x64xf32>
    %34 = vector.broadcast %33 : vector<1x64xf32> to vector<10x64xf32>
    %35 = arith.addf %32, %34 : vector<10x64xf32>
    %c440 = arith.constant 440 : index
    %c0_16 = arith.constant 0 : index
    %36 = vector.load %arg1[%c440, %c0_16] : memref<736x256xf32, #tpu.memory_space<vmem>>, vector<64x64xf32>
    %c504 = arith.constant 504 : index
    %c0_17 = arith.constant 0 : index
    %37 = vector.load %arg1[%c504, %c0_17] : memref<736x256xf32, #tpu.memory_space<vmem>>, vector<64x40xf32>
    %c568 = arith.constant 568 : index
    %c0_18 = arith.constant 0 : index
    %38 = vector.load %arg1[%c568, %c0_18] : memref<736x256xf32, #tpu.memory_space<vmem>>, vector<64x64xf32>
    %c632 = arith.constant 632 : index
    %c0_19 = arith.constant 0 : index
    %39 = vector.load %arg1[%c632, %c0_19] : memref<736x256xf32, #tpu.memory_space<vmem>>, vector<40x64xf32>
    %c8 = arith.constant 8 : index
    %c0_20 = arith.constant 0 : index
    %40 = vector.load %arg1[%c8, %c0_20] : memref<736x256xf32, #tpu.memory_space<vmem>>, vector<16x64xf32>
    %c0_21 = arith.constant 0 : index
    %c0_22 = arith.constant 0 : index
    %c0_23 = arith.constant 0 : index
    %41 = vector.load %arg2[%c0_21, %c0_22, %c0_23] : memref<2x656x256xf32, #tpu.memory_space<vmem>>, vector<1x1x64xf32>
    %42 = vector.shape_cast %41 : vector<1x1x64xf32> to vector<1x64xf32>
    %c0_24 = arith.constant 0 : index
    %c1_25 = arith.constant 1 : index
    %c0_26 = arith.constant 0 : index
    %43 = vector.load %arg2[%c0_24, %c1_25, %c0_26] : memref<2x656x256xf32, #tpu.memory_space<vmem>>, vector<1x1x64xf32>
    %44 = vector.shape_cast %43 : vector<1x1x64xf32> to vector<1x64xf32>
    %cst_27 = arith.constant dense<0.000000e+00> : vector<16xf32>
    %45 = vector.multi_reduction <add>, %40, %cst_27 [1] : vector<16x64xf32> to vector<16xf32>
    %46 = vector.shape_cast %45 : vector<16xf32> to vector<16x1xf32>
    %cst_28 = arith.constant 6.400000e+01 : f32
    %47 = vector.broadcast %cst_28 : f32 to vector<16x1xf32>
    %48 = arith.divf %46, %47 : vector<16x1xf32>
    %49 = vector.broadcast %48 : vector<16x1xf32> to vector<16x64xf32>
    %50 = arith.subf %40, %49 : vector<16x64xf32>
    %51 = arith.mulf %50, %50 : vector<16x64xf32>
    %cst_29 = arith.constant dense<0.000000e+00> : vector<16xf32>
    %52 = vector.multi_reduction <add>, %51, %cst_29 [1] : vector<16x64xf32> to vector<16xf32>
    %53 = vector.shape_cast %52 : vector<16xf32> to vector<16x1xf32>
    %cst_30 = arith.constant 6.400000e+01 : f32
    %54 = vector.broadcast %cst_30 : f32 to vector<16x1xf32>
    %55 = arith.divf %53, %54 : vector<16x1xf32>
    %56 = vector.broadcast %48 : vector<16x1xf32> to vector<16x64xf32>
    %57 = arith.subf %40, %56 : vector<16x64xf32>
    %cst_31 = arith.constant 9.99999974E-6 : f32
    %58 = vector.broadcast %cst_31 : f32 to vector<16x1xf32>
    %59 = arith.addf %55, %58 : vector<16x1xf32>
    %60 = math.rsqrt %59 : vector<16x1xf32>
    %61 = vector.broadcast %60 : vector<16x1xf32> to vector<16x64xf32>
    %62 = arith.mulf %57, %61 : vector<16x64xf32>
    %63 = vector.broadcast %42 : vector<1x64xf32> to vector<16x64xf32>
    %64 = arith.mulf %62, %63 : vector<16x64xf32>
    %65 = vector.broadcast %44 : vector<1x64xf32> to vector<16x64xf32>
    %66 = arith.addf %64, %65 : vector<16x64xf32>
    %c0_32 = arith.constant 0 : index
    %c16 = arith.constant 16 : index
    %c0_33 = arith.constant 0 : index
    %67 = vector.load %arg2[%c0_32, %c16, %c0_33] : memref<2x656x256xf32, #tpu.memory_space<vmem>>, vector<1x64x192xf32>
    %68 = vector.shape_cast %67 : vector<1x64x192xf32> to vector<64x192xf32>
    %cst_34 = arith.constant dense<0.000000e+00> : vector<16x192xf32>
    %69 = tpu.matmul %66, %68, %cst_34 {dimension_numbers = #tpu.dot_dimension_numbers<[1], [0], [0], [1], [0, 0, 1, 1], [], []>} : vector<16x64xf32>, vector<64x192xf32>, vector<16x192xf32> -> vector<16x192xf32>
    %c0_35 = arith.constant 0 : index
    %c6 = arith.constant 6 : index
    %c0_36 = arith.constant 0 : index
    %70 = vector.load %arg2[%c0_35, %c6, %c0_36] : memref<2x656x256xf32, #tpu.memory_space<vmem>>, vector<1x1x192xf32>
    %71 = vector.shape_cast %70 : vector<1x1x192xf32> to vector<1x192xf32>
    %72 = vector.broadcast %71 : vector<1x192xf32> to vector<16x192xf32>
    %73 = arith.addf %69, %72 : vector<16x192xf32>
    %74 = vector.extract_strided_slice %73 {offsets = [0, 0], sizes = [16, 64], strides = [1, 1]} : vector<16x192xf32> to vector<16x64xf32>
    %75 = vector.extract_strided_slice %73 {offsets = [0, 64], sizes = [16, 64], strides = [1, 1]} : vector<16x192xf32> to vector<16x64xf32>
    %76 = vector.extract_strided_slice %73 {offsets = [0, 128], sizes = [16, 64], strides = [1, 1]} : vector<16x192xf32> to vector<16x64xf32>
    %c0_37 = arith.constant 0 : index
    %c80 = arith.constant 80 : index
    %c0_38 = arith.constant 0 : index
    %77 = vector.load %arg2[%c0_37, %c80, %c0_38] : memref<2x656x256xf32, #tpu.memory_space<vmem>>, vector<1x64x64xf32>
    %78 = vector.shape_cast %77 : vector<1x64x64xf32> to vector<64x64xf32>
    %c0_39 = arith.constant 0 : index
    %c7 = arith.constant 7 : index
    %c0_40 = arith.constant 0 : index
    %79 = vector.load %arg2[%c0_39, %c7, %c0_40] : memref<2x656x256xf32, #tpu.memory_space<vmem>>, vector<1x1x64xf32>
    %80 = vector.shape_cast %79 : vector<1x1x64xf32> to vector<1x64xf32>
    %81 = tpu.concatenate %74, %74, %74, %74 in 0 : vector<16x64xf32>, vector<16x64xf32>, vector<16x64xf32>, vector<16x64xf32> -> vector<64x64xf32>
    %82 = tpu.concatenate %75, %75, %75, %75 in 0 : vector<16x64xf32>, vector<16x64xf32>, vector<16x64xf32>, vector<16x64xf32> -> vector<64x64xf32>
    %83 = arith.mulf %82, %38 : vector<64x64xf32>
    %84 = tpu.concatenate %76, %76, %76, %76 in 0 : vector<16x64xf32>, vector<16x64xf32>, vector<16x64xf32>, vector<16x64xf32> -> vector<64x64xf32>
    %85 = arith.mulf %84, %38 : vector<64x64xf32>
    %cst_41 = arith.constant dense<0.000000e+00> : vector<64x64xf32>
    %86 = tpu.matmul %81, %83, %cst_41 {dimension_numbers = #tpu.dot_dimension_numbers<[1], [1], [0], [0], [0, 0, 1, 0], [], []>} : vector<64x64xf32>, vector<64x64xf32>, vector<64x64xf32> -> vector<64x64xf32>
    %87 = arith.addf %86, %36 : vector<64x64xf32>
    %cst_42 = arith.constant dense<0xFF800000> : vector<64xf32>
    %88 = vector.multi_reduction <maximumf>, %87, %cst_42 [1] : vector<64x64xf32> to vector<64xf32>
    %89 = vector.shape_cast %88 : vector<64xf32> to vector<64x1xf32>
    %90 = vector.broadcast %89 : vector<64x1xf32> to vector<64x64xf32>
    %91 = arith.subf %87, %90 : vector<64x64xf32>
    %92 = math.exp %91 : vector<64x64xf32>
    %cst_43 = arith.constant dense<0.000000e+00> : vector<64xf32>
    %93 = vector.multi_reduction <add>, %92, %cst_43 [1] : vector<64x64xf32> to vector<64xf32>
    %94 = vector.shape_cast %93 : vector<64xf32> to vector<64x1xf32>
    %95 = tpu.reciprocal %94 {approx = true} : vector<64x1xf32> -> vector<64x1xf32>
    %96 = vector.broadcast %95 : vector<64x1xf32> to vector<64x64xf32>
    %97 = arith.mulf %92, %96 : vector<64x64xf32>
    %cst_44 = arith.constant dense<0.000000e+00> : vector<64x64xf32>
    %98 = tpu.matmul %97, %85, %cst_44 {dimension_numbers = #tpu.dot_dimension_numbers<[1], [0], [0], [1], [0, 0, 1, 1], [], []>} : vector<64x64xf32>, vector<64x64xf32>, vector<64x64xf32> -> vector<64x64xf32>
    %99 = vector.extract_strided_slice %98 {offsets = [0, 0], sizes = [16, 64], strides = [1, 1]} : vector<64x64xf32> to vector<16x64xf32>
    %100 = vector.extract_strided_slice %98 {offsets = [16, 0], sizes = [16, 64], strides = [1, 1]} : vector<64x64xf32> to vector<16x64xf32>
    %101 = arith.addf %99, %100 : vector<16x64xf32>
    %102 = vector.extract_strided_slice %98 {offsets = [32, 0], sizes = [16, 64], strides = [1, 1]} : vector<64x64xf32> to vector<16x64xf32>
    %103 = arith.addf %101, %102 : vector<16x64xf32>
    %104 = vector.extract_strided_slice %98 {offsets = [48, 0], sizes = [16, 64], strides = [1, 1]} : vector<64x64xf32> to vector<16x64xf32>
    %105 = arith.addf %103, %104 : vector<16x64xf32>
    %cst_45 = arith.constant dense<0.000000e+00> : vector<16x64xf32>
    %106 = tpu.matmul %105, %78, %cst_45 {dimension_numbers = #tpu.dot_dimension_numbers<[1], [0], [0], [1], [0, 0, 1, 1], [], []>} : vector<16x64xf32>, vector<64x64xf32>, vector<16x64xf32> -> vector<16x64xf32>
    %107 = vector.broadcast %80 : vector<1x64xf32> to vector<16x64xf32>
    %108 = arith.addf %106, %107 : vector<16x64xf32>
    %109 = arith.addf %40, %108 : vector<16x64xf32>
    %c0_46 = arith.constant 0 : index
    %c2_47 = arith.constant 2 : index
    %c0_48 = arith.constant 0 : index
    %110 = vector.load %arg2[%c0_46, %c2_47, %c0_48] : memref<2x656x256xf32, #tpu.memory_space<vmem>>, vector<1x1x64xf32>
    %111 = vector.shape_cast %110 : vector<1x1x64xf32> to vector<1x64xf32>
    %c0_49 = arith.constant 0 : index
    %c3 = arith.constant 3 : index
    %c0_50 = arith.constant 0 : index
    %112 = vector.load %arg2[%c0_49, %c3, %c0_50] : memref<2x656x256xf32, #tpu.memory_space<vmem>>, vector<1x1x64xf32>
    %113 = vector.shape_cast %112 : vector<1x1x64xf32> to vector<1x64xf32>
    %cst_51 = arith.constant dense<0.000000e+00> : vector<16xf32>
    %114 = vector.multi_reduction <add>, %109, %cst_51 [1] : vector<16x64xf32> to vector<16xf32>
    %115 = vector.shape_cast %114 : vector<16xf32> to vector<16x1xf32>
    %cst_52 = arith.constant 6.400000e+01 : f32
    %116 = vector.broadcast %cst_52 : f32 to vector<16x1xf32>
    %117 = arith.divf %115, %116 : vector<16x1xf32>
    %118 = vector.broadcast %117 : vector<16x1xf32> to vector<16x64xf32>
    %119 = arith.subf %109, %118 : vector<16x64xf32>
    %120 = arith.mulf %119, %119 : vector<16x64xf32>
    %cst_53 = arith.constant dense<0.000000e+00> : vector<16xf32>
    %121 = vector.multi_reduction <add>, %120, %cst_53 [1] : vector<16x64xf32> to vector<16xf32>
    %122 = vector.shape_cast %121 : vector<16xf32> to vector<16x1xf32>
    %cst_54 = arith.constant 6.400000e+01 : f32
    %123 = vector.broadcast %cst_54 : f32 to vector<16x1xf32>
    %124 = arith.divf %122, %123 : vector<16x1xf32>
    %125 = vector.broadcast %117 : vector<16x1xf32> to vector<16x64xf32>
    %126 = arith.subf %109, %125 : vector<16x64xf32>
    %cst_55 = arith.constant 9.99999974E-6 : f32
    %127 = vector.broadcast %cst_55 : f32 to vector<16x1xf32>
    %128 = arith.addf %124, %127 : vector<16x1xf32>
    %129 = math.rsqrt %128 : vector<16x1xf32>
    %130 = vector.broadcast %129 : vector<16x1xf32> to vector<16x64xf32>
    %131 = arith.mulf %126, %130 : vector<16x64xf32>
    %132 = vector.broadcast %111 : vector<1x64xf32> to vector<16x64xf32>
    %133 = arith.mulf %131, %132 : vector<16x64xf32>
    %134 = vector.broadcast %113 : vector<1x64xf32> to vector<16x64xf32>
    %135 = arith.addf %133, %134 : vector<16x64xf32>
    %c0_56 = arith.constant 0 : index
    %c144 = arith.constant 144 : index
    %c0_57 = arith.constant 0 : index
    %136 = vector.load %arg2[%c0_56, %c144, %c0_57] : memref<2x656x256xf32, #tpu.memory_space<vmem>>, vector<1x64x64xf32>
    %137 = vector.shape_cast %136 : vector<1x64x64xf32> to vector<64x64xf32>
    %cst_58 = arith.constant dense<0.000000e+00> : vector<16x64xf32>
    %138 = tpu.matmul %135, %137, %cst_58 {dimension_numbers = #tpu.dot_dimension_numbers<[1], [0], [0], [1], [0, 0, 1, 1], [], []>} : vector<16x64xf32>, vector<64x64xf32>, vector<16x64xf32> -> vector<16x64xf32>
    %c0_59 = arith.constant 0 : index
    %c8_60 = arith.constant 8 : index
    %c0_61 = arith.constant 0 : index
    %139 = vector.load %arg2[%c0_59, %c8_60, %c0_61] : memref<2x656x256xf32, #tpu.memory_space<vmem>>, vector<1x1x64xf32>
    %140 = vector.shape_cast %139 : vector<1x1x64xf32> to vector<1x64xf32>
    %141 = vector.broadcast %140 : vector<1x64xf32> to vector<16x64xf32>
    %142 = arith.addf %138, %141 : vector<16x64xf32>
    %c0_62 = arith.constant 0 : index
    %c208 = arith.constant 208 : index
    %c0_63 = arith.constant 0 : index
    %143 = vector.load %arg2[%c0_62, %c208, %c0_63] : memref<2x656x256xf32, #tpu.memory_space<vmem>>, vector<1x64x128xf32>
    %144 = vector.shape_cast %143 : vector<1x64x128xf32> to vector<64x128xf32>
    %cst_64 = arith.constant dense<0.000000e+00> : vector<10x128xf32>
    %145 = tpu.matmul %35, %144, %cst_64 {dimension_numbers = #tpu.dot_dimension_numbers<[1], [0], [0], [1], [0, 0, 1, 1], [], []>} : vector<10x64xf32>, vector<64x128xf32>, vector<10x128xf32> -> vector<10x128xf32>
    %c0_65 = arith.constant 0 : index
    %c9 = arith.constant 9 : index
    %c0_66 = arith.constant 0 : index
    %146 = vector.load %arg2[%c0_65, %c9, %c0_66] : memref<2x656x256xf32, #tpu.memory_space<vmem>>, vector<1x1x128xf32>
    %147 = vector.shape_cast %146 : vector<1x1x128xf32> to vector<1x128xf32>
    %148 = vector.broadcast %147 : vector<1x128xf32> to vector<10x128xf32>
    %149 = arith.addf %145, %148 : vector<10x128xf32>
    %150 = vector.extract_strided_slice %149 {offsets = [0, 0], sizes = [10, 64], strides = [1, 1]} : vector<10x128xf32> to vector<10x64xf32>
    %151 = vector.extract_strided_slice %149 {offsets = [0, 64], sizes = [10, 64], strides = [1, 1]} : vector<10x128xf32> to vector<10x64xf32>
    %c0_67 = arith.constant 0 : index
    %c272 = arith.constant 272 : index
    %c0_68 = arith.constant 0 : index
    %152 = vector.load %arg2[%c0_67, %c272, %c0_68] : memref<2x656x256xf32, #tpu.memory_space<vmem>>, vector<1x64x64xf32>
    %153 = vector.shape_cast %152 : vector<1x64x64xf32> to vector<64x64xf32>
    %c0_69 = arith.constant 0 : index
    %c10 = arith.constant 10 : index
    %c0_70 = arith.constant 0 : index
    %154 = vector.load %arg2[%c0_69, %c10, %c0_70] : memref<2x656x256xf32, #tpu.memory_space<vmem>>, vector<1x1x64xf32>
    %155 = vector.shape_cast %154 : vector<1x1x64xf32> to vector<1x64xf32>
    %156 = tpu.concatenate %142, %142, %142, %142 in 0 : vector<16x64xf32>, vector<16x64xf32>, vector<16x64xf32>, vector<16x64xf32> -> vector<64x64xf32>
    %157 = tpu.concatenate %150, %150, %150, %150 in 0 : vector<10x64xf32>, vector<10x64xf32>, vector<10x64xf32>, vector<10x64xf32> -> vector<40x64xf32>
    %158 = arith.mulf %157, %39 : vector<40x64xf32>
    %159 = tpu.concatenate %151, %151, %151, %151 in 0 : vector<10x64xf32>, vector<10x64xf32>, vector<10x64xf32>, vector<10x64xf32> -> vector<40x64xf32>
    %160 = arith.mulf %159, %39 : vector<40x64xf32>
    %cst_71 = arith.constant dense<0.000000e+00> : vector<64x40xf32>
    %161 = tpu.matmul %156, %158, %cst_71 {dimension_numbers = #tpu.dot_dimension_numbers<[1], [1], [0], [0], [0, 0, 1, 0], [], []>} : vector<64x64xf32>, vector<40x64xf32>, vector<64x40xf32> -> vector<64x40xf32>
    %162 = arith.addf %161, %37 : vector<64x40xf32>
    %cst_72 = arith.constant dense<0xFF800000> : vector<64xf32>
    %163 = vector.multi_reduction <maximumf>, %162, %cst_72 [1] : vector<64x40xf32> to vector<64xf32>
    %164 = vector.shape_cast %163 : vector<64xf32> to vector<64x1xf32>
    %165 = vector.broadcast %164 : vector<64x1xf32> to vector<64x40xf32>
    %166 = arith.subf %162, %165 : vector<64x40xf32>
    %167 = math.exp %166 : vector<64x40xf32>
    %cst_73 = arith.constant dense<0.000000e+00> : vector<64xf32>
    %168 = vector.multi_reduction <add>, %167, %cst_73 [1] : vector<64x40xf32> to vector<64xf32>
    %169 = vector.shape_cast %168 : vector<64xf32> to vector<64x1xf32>
    %170 = tpu.reciprocal %169 {approx = true} : vector<64x1xf32> -> vector<64x1xf32>
    %171 = vector.broadcast %170 : vector<64x1xf32> to vector<64x40xf32>
    %172 = arith.mulf %167, %171 : vector<64x40xf32>
    %cst_74 = arith.constant dense<0.000000e+00> : vector<64x64xf32>
    %173 = tpu.matmul %172, %160, %cst_74 {dimension_numbers = #tpu.dot_dimension_numbers<[1], [0], [0], [1], [0, 0, 1, 1], [], []>} : vector<64x40xf32>, vector<40x64xf32>, vector<64x64xf32> -> vector<64x64xf32>
    %174 = vector.extract_strided_slice %173 {offsets = [0, 0], sizes = [16, 64], strides = [1, 1]} : vector<64x64xf32> to vector<16x64xf32>
    %175 = vector.extract_strided_slice %173 {offsets = [16, 0], sizes = [16, 64], strides = [1, 1]} : vector<64x64xf32> to vector<16x64xf32>
    %176 = arith.addf %174, %175 : vector<16x64xf32>
    %177 = vector.extract_strided_slice %173 {offsets = [32, 0], sizes = [16, 64], strides = [1, 1]} : vector<64x64xf32> to vector<16x64xf32>
    %178 = arith.addf %176, %177 : vector<16x64xf32>
    %179 = vector.extract_strided_slice %173 {offsets = [48, 0], sizes = [16, 64], strides = [1, 1]} : vector<64x64xf32> to vector<16x64xf32>
    %180 = arith.addf %178, %179 : vector<16x64xf32>
    %cst_75 = arith.constant dense<0.000000e+00> : vector<16x64xf32>
    %181 = tpu.matmul %180, %153, %cst_75 {dimension_numbers = #tpu.dot_dimension_numbers<[1], [0], [0], [1], [0, 0, 1, 1], [], []>} : vector<16x64xf32>, vector<64x64xf32>, vector<16x64xf32> -> vector<16x64xf32>
    %182 = vector.broadcast %155 : vector<1x64xf32> to vector<16x64xf32>
    %183 = arith.addf %181, %182 : vector<16x64xf32>
    %184 = arith.addf %109, %183 : vector<16x64xf32>
    %c0_76 = arith.constant 0 : index
    %c4 = arith.constant 4 : index
    %c0_77 = arith.constant 0 : index
    %185 = vector.load %arg2[%c0_76, %c4, %c0_77] : memref<2x656x256xf32, #tpu.memory_space<vmem>>, vector<1x1x64xf32>
    %186 = vector.shape_cast %185 : vector<1x1x64xf32> to vector<1x64xf32>
    %c0_78 = arith.constant 0 : index
    %c5 = arith.constant 5 : index
    %c0_79 = arith.constant 0 : index
    %187 = vector.load %arg2[%c0_78, %c5, %c0_79] : memref<2x656x256xf32, #tpu.memory_space<vmem>>, vector<1x1x64xf32>
    %188 = vector.shape_cast %187 : vector<1x1x64xf32> to vector<1x64xf32>
    %cst_80 = arith.constant dense<0.000000e+00> : vector<16xf32>
    %189 = vector.multi_reduction <add>, %184, %cst_80 [1] : vector<16x64xf32> to vector<16xf32>
    %190 = vector.shape_cast %189 : vector<16xf32> to vector<16x1xf32>
    %cst_81 = arith.constant 6.400000e+01 : f32
    %191 = vector.broadcast %cst_81 : f32 to vector<16x1xf32>
    %192 = arith.divf %190, %191 : vector<16x1xf32>
    %193 = vector.broadcast %192 : vector<16x1xf32> to vector<16x64xf32>
    %194 = arith.subf %184, %193 : vector<16x64xf32>
    %195 = arith.mulf %194, %194 : vector<16x64xf32>
    %cst_82 = arith.constant dense<0.000000e+00> : vector<16xf32>
    %196 = vector.multi_reduction <add>, %195, %cst_82 [1] : vector<16x64xf32> to vector<16xf32>
    %197 = vector.shape_cast %196 : vector<16xf32> to vector<16x1xf32>
    %cst_83 = arith.constant 6.400000e+01 : f32
    %198 = vector.broadcast %cst_83 : f32 to vector<16x1xf32>
    %199 = arith.divf %197, %198 : vector<16x1xf32>
    %200 = vector.broadcast %192 : vector<16x1xf32> to vector<16x64xf32>
    %201 = arith.subf %184, %200 : vector<16x64xf32>
    %cst_84 = arith.constant 9.99999974E-6 : f32
    %202 = vector.broadcast %cst_84 : f32 to vector<16x1xf32>
    %203 = arith.addf %199, %202 : vector<16x1xf32>
    %204 = math.rsqrt %203 : vector<16x1xf32>
    %205 = vector.broadcast %204 : vector<16x1xf32> to vector<16x64xf32>
    %206 = arith.mulf %201, %205 : vector<16x64xf32>
    %207 = vector.broadcast %186 : vector<1x64xf32> to vector<16x64xf32>
    %208 = arith.mulf %206, %207 : vector<16x64xf32>
    %209 = vector.broadcast %188 : vector<1x64xf32> to vector<16x64xf32>
    %210 = arith.addf %208, %209 : vector<16x64xf32>
    %c0_85 = arith.constant 0 : index
    %c336 = arith.constant 336 : index
    %c0_86 = arith.constant 0 : index
    %211 = vector.load %arg2[%c0_85, %c336, %c0_86] : memref<2x656x256xf32, #tpu.memory_space<vmem>>, vector<1x64x256xf32>
    %212 = vector.shape_cast %211 : vector<1x64x256xf32> to vector<64x256xf32>
    %cst_87 = arith.constant dense<0.000000e+00> : vector<16x256xf32>
    %213 = tpu.matmul %210, %212, %cst_87 {dimension_numbers = #tpu.dot_dimension_numbers<[1], [0], [0], [1], [0, 0, 1, 1], [], []>} : vector<16x64xf32>, vector<64x256xf32>, vector<16x256xf32> -> vector<16x256xf32>
    %c0_88 = arith.constant 0 : index
    %c11 = arith.constant 11 : index
    %c0_89 = arith.constant 0 : index
    %214 = vector.load %arg2[%c0_88, %c11, %c0_89] : memref<2x656x256xf32, #tpu.memory_space<vmem>>, vector<1x1x256xf32>
    %215 = vector.shape_cast %214 : vector<1x1x256xf32> to vector<1x256xf32>
    %216 = vector.broadcast %215 : vector<1x256xf32> to vector<16x256xf32>
    %217 = arith.addf %213, %216 : vector<16x256xf32>
    %cst_90 = arith.constant 5.000000e-01 : f32
    %218 = vector.broadcast %cst_90 : f32 to vector<16x256xf32>
    %219 = arith.mulf %218, %217 : vector<16x256xf32>
    %cst_91 = arith.constant 4.471500e-02 : f32
    %220 = vector.broadcast %cst_91 : f32 to vector<16x256xf32>
    %221 = arith.mulf %220, %217 : vector<16x256xf32>
    %222 = arith.mulf %221, %217 : vector<16x256xf32>
    %223 = arith.mulf %222, %217 : vector<16x256xf32>
    %224 = arith.addf %217, %223 : vector<16x256xf32>
    %cst_92 = arith.constant 0.797884583 : f32
    %225 = vector.broadcast %cst_92 : f32 to vector<16x256xf32>
    %226 = arith.mulf %225, %224 : vector<16x256xf32>
    %227 = math.tanh %226 : vector<16x256xf32>
    %cst_93 = arith.constant 1.000000e+00 : f32
    %228 = vector.broadcast %cst_93 : f32 to vector<16x256xf32>
    %229 = arith.addf %228, %227 : vector<16x256xf32>
    %230 = arith.mulf %219, %229 : vector<16x256xf32>
    %c0_94 = arith.constant 0 : index
    %c400 = arith.constant 400 : index
    %c0_95 = arith.constant 0 : index
    %231 = vector.load %arg2[%c0_94, %c400, %c0_95] : memref<2x656x256xf32, #tpu.memory_space<vmem>>, vector<1x256x64xf32>
    %232 = vector.shape_cast %231 : vector<1x256x64xf32> to vector<256x64xf32>
    %cst_96 = arith.constant dense<0.000000e+00> : vector<16x64xf32>
    %233 = tpu.matmul %230, %232, %cst_96 {dimension_numbers = #tpu.dot_dimension_numbers<[1], [0], [0], [1], [0, 0, 1, 1], [], []>} : vector<16x256xf32>, vector<256x64xf32>, vector<16x64xf32> -> vector<16x64xf32>
    %c0_97 = arith.constant 0 : index
    %c12 = arith.constant 12 : index
    %c0_98 = arith.constant 0 : index
    %234 = vector.load %arg2[%c0_97, %c12, %c0_98] : memref<2x656x256xf32, #tpu.memory_space<vmem>>, vector<1x1x64xf32>
    %235 = vector.shape_cast %234 : vector<1x1x64xf32> to vector<1x64xf32>
    %236 = vector.broadcast %235 : vector<1x64xf32> to vector<16x64xf32>
    %237 = arith.addf %233, %236 : vector<16x64xf32>
    %238 = arith.addf %184, %237 : vector<16x64xf32>
    %c1_99 = arith.constant 1 : index
    %c0_100 = arith.constant 0 : index
    %c0_101 = arith.constant 0 : index
    %239 = vector.load %arg2[%c1_99, %c0_100, %c0_101] : memref<2x656x256xf32, #tpu.memory_space<vmem>>, vector<1x1x64xf32>
    %240 = vector.shape_cast %239 : vector<1x1x64xf32> to vector<1x64xf32>
    %c1_102 = arith.constant 1 : index
    %c1_103 = arith.constant 1 : index
    %c0_104 = arith.constant 0 : index
    %241 = vector.load %arg2[%c1_102, %c1_103, %c0_104] : memref<2x656x256xf32, #tpu.memory_space<vmem>>, vector<1x1x64xf32>
    %242 = vector.shape_cast %241 : vector<1x1x64xf32> to vector<1x64xf32>
    %cst_105 = arith.constant dense<0.000000e+00> : vector<16xf32>
    %243 = vector.multi_reduction <add>, %238, %cst_105 [1] : vector<16x64xf32> to vector<16xf32>
    %244 = vector.shape_cast %243 : vector<16xf32> to vector<16x1xf32>
    %cst_106 = arith.constant 6.400000e+01 : f32
    %245 = vector.broadcast %cst_106 : f32 to vector<16x1xf32>
    %246 = arith.divf %244, %245 : vector<16x1xf32>
    %247 = vector.broadcast %246 : vector<16x1xf32> to vector<16x64xf32>
    %248 = arith.subf %238, %247 : vector<16x64xf32>
    %249 = arith.mulf %248, %248 : vector<16x64xf32>
    %cst_107 = arith.constant dense<0.000000e+00> : vector<16xf32>
    %250 = vector.multi_reduction <add>, %249, %cst_107 [1] : vector<16x64xf32> to vector<16xf32>
    %251 = vector.shape_cast %250 : vector<16xf32> to vector<16x1xf32>
    %cst_108 = arith.constant 6.400000e+01 : f32
    %252 = vector.broadcast %cst_108 : f32 to vector<16x1xf32>
    %253 = arith.divf %251, %252 : vector<16x1xf32>
    %254 = vector.broadcast %246 : vector<16x1xf32> to vector<16x64xf32>
    %255 = arith.subf %238, %254 : vector<16x64xf32>
    %cst_109 = arith.constant 9.99999974E-6 : f32
    %256 = vector.broadcast %cst_109 : f32 to vector<16x1xf32>
    %257 = arith.addf %253, %256 : vector<16x1xf32>
    %258 = math.rsqrt %257 : vector<16x1xf32>
    %259 = vector.broadcast %258 : vector<16x1xf32> to vector<16x64xf32>
    %260 = arith.mulf %255, %259 : vector<16x64xf32>
    %261 = vector.broadcast %240 : vector<1x64xf32> to vector<16x64xf32>
    %262 = arith.mulf %260, %261 : vector<16x64xf32>
    %263 = vector.broadcast %242 : vector<1x64xf32> to vector<16x64xf32>
    %264 = arith.addf %262, %263 : vector<16x64xf32>
    %c1_110 = arith.constant 1 : index
    %c16_111 = arith.constant 16 : index
    %c0_112 = arith.constant 0 : index
    %265 = vector.load %arg2[%c1_110, %c16_111, %c0_112] : memref<2x656x256xf32, #tpu.memory_space<vmem>>, vector<1x64x192xf32>
    %266 = vector.shape_cast %265 : vector<1x64x192xf32> to vector<64x192xf32>
    %cst_113 = arith.constant dense<0.000000e+00> : vector<16x192xf32>
    %267 = tpu.matmul %264, %266, %cst_113 {dimension_numbers = #tpu.dot_dimension_numbers<[1], [0], [0], [1], [0, 0, 1, 1], [], []>} : vector<16x64xf32>, vector<64x192xf32>, vector<16x192xf32> -> vector<16x192xf32>
    %c1_114 = arith.constant 1 : index
    %c6_115 = arith.constant 6 : index
    %c0_116 = arith.constant 0 : index
    %268 = vector.load %arg2[%c1_114, %c6_115, %c0_116] : memref<2x656x256xf32, #tpu.memory_space<vmem>>, vector<1x1x192xf32>
    %269 = vector.shape_cast %268 : vector<1x1x192xf32> to vector<1x192xf32>
    %270 = vector.broadcast %269 : vector<1x192xf32> to vector<16x192xf32>
    %271 = arith.addf %267, %270 : vector<16x192xf32>
    %272 = vector.extract_strided_slice %271 {offsets = [0, 0], sizes = [16, 64], strides = [1, 1]} : vector<16x192xf32> to vector<16x64xf32>
    %273 = vector.extract_strided_slice %271 {offsets = [0, 64], sizes = [16, 64], strides = [1, 1]} : vector<16x192xf32> to vector<16x64xf32>
    %274 = vector.extract_strided_slice %271 {offsets = [0, 128], sizes = [16, 64], strides = [1, 1]} : vector<16x192xf32> to vector<16x64xf32>
    %c1_117 = arith.constant 1 : index
    %c80_118 = arith.constant 80 : index
    %c0_119 = arith.constant 0 : index
    %275 = vector.load %arg2[%c1_117, %c80_118, %c0_119] : memref<2x656x256xf32, #tpu.memory_space<vmem>>, vector<1x64x64xf32>
    %276 = vector.shape_cast %275 : vector<1x64x64xf32> to vector<64x64xf32>
    %c1_120 = arith.constant 1 : index
    %c7_121 = arith.constant 7 : index
    %c0_122 = arith.constant 0 : index
    %277 = vector.load %arg2[%c1_120, %c7_121, %c0_122] : memref<2x656x256xf32, #tpu.memory_space<vmem>>, vector<1x1x64xf32>
    %278 = vector.shape_cast %277 : vector<1x1x64xf32> to vector<1x64xf32>
    %279 = tpu.concatenate %272, %272, %272, %272 in 0 : vector<16x64xf32>, vector<16x64xf32>, vector<16x64xf32>, vector<16x64xf32> -> vector<64x64xf32>
    %280 = tpu.concatenate %273, %273, %273, %273 in 0 : vector<16x64xf32>, vector<16x64xf32>, vector<16x64xf32>, vector<16x64xf32> -> vector<64x64xf32>
    %281 = arith.mulf %280, %38 : vector<64x64xf32>
    %282 = tpu.concatenate %274, %274, %274, %274 in 0 : vector<16x64xf32>, vector<16x64xf32>, vector<16x64xf32>, vector<16x64xf32> -> vector<64x64xf32>
    %283 = arith.mulf %282, %38 : vector<64x64xf32>
    %cst_123 = arith.constant dense<0.000000e+00> : vector<64x64xf32>
    %284 = tpu.matmul %279, %281, %cst_123 {dimension_numbers = #tpu.dot_dimension_numbers<[1], [1], [0], [0], [0, 0, 1, 0], [], []>} : vector<64x64xf32>, vector<64x64xf32>, vector<64x64xf32> -> vector<64x64xf32>
    %285 = arith.addf %284, %36 : vector<64x64xf32>
    %cst_124 = arith.constant dense<0xFF800000> : vector<64xf32>
    %286 = vector.multi_reduction <maximumf>, %285, %cst_124 [1] : vector<64x64xf32> to vector<64xf32>
    %287 = vector.shape_cast %286 : vector<64xf32> to vector<64x1xf32>
    %288 = vector.broadcast %287 : vector<64x1xf32> to vector<64x64xf32>
    %289 = arith.subf %285, %288 : vector<64x64xf32>
    %290 = math.exp %289 : vector<64x64xf32>
    %cst_125 = arith.constant dense<0.000000e+00> : vector<64xf32>
    %291 = vector.multi_reduction <add>, %290, %cst_125 [1] : vector<64x64xf32> to vector<64xf32>
    %292 = vector.shape_cast %291 : vector<64xf32> to vector<64x1xf32>
    %293 = tpu.reciprocal %292 {approx = true} : vector<64x1xf32> -> vector<64x1xf32>
    %294 = vector.broadcast %293 : vector<64x1xf32> to vector<64x64xf32>
    %295 = arith.mulf %290, %294 : vector<64x64xf32>
    %cst_126 = arith.constant dense<0.000000e+00> : vector<64x64xf32>
    %296 = tpu.matmul %295, %283, %cst_126 {dimension_numbers = #tpu.dot_dimension_numbers<[1], [0], [0], [1], [0, 0, 1, 1], [], []>} : vector<64x64xf32>, vector<64x64xf32>, vector<64x64xf32> -> vector<64x64xf32>
    %297 = vector.extract_strided_slice %296 {offsets = [0, 0], sizes = [16, 64], strides = [1, 1]} : vector<64x64xf32> to vector<16x64xf32>
    %298 = vector.extract_strided_slice %296 {offsets = [16, 0], sizes = [16, 64], strides = [1, 1]} : vector<64x64xf32> to vector<16x64xf32>
    %299 = arith.addf %297, %298 : vector<16x64xf32>
    %300 = vector.extract_strided_slice %296 {offsets = [32, 0], sizes = [16, 64], strides = [1, 1]} : vector<64x64xf32> to vector<16x64xf32>
    %301 = arith.addf %299, %300 : vector<16x64xf32>
    %302 = vector.extract_strided_slice %296 {offsets = [48, 0], sizes = [16, 64], strides = [1, 1]} : vector<64x64xf32> to vector<16x64xf32>
    %303 = arith.addf %301, %302 : vector<16x64xf32>
    %cst_127 = arith.constant dense<0.000000e+00> : vector<16x64xf32>
    %304 = tpu.matmul %303, %276, %cst_127 {dimension_numbers = #tpu.dot_dimension_numbers<[1], [0], [0], [1], [0, 0, 1, 1], [], []>} : vector<16x64xf32>, vector<64x64xf32>, vector<16x64xf32> -> vector<16x64xf32>
    %305 = vector.broadcast %278 : vector<1x64xf32> to vector<16x64xf32>
    %306 = arith.addf %304, %305 : vector<16x64xf32>
    %307 = arith.addf %238, %306 : vector<16x64xf32>
    %c1_128 = arith.constant 1 : index
    %c2_129 = arith.constant 2 : index
    %c0_130 = arith.constant 0 : index
    %308 = vector.load %arg2[%c1_128, %c2_129, %c0_130] : memref<2x656x256xf32, #tpu.memory_space<vmem>>, vector<1x1x64xf32>
    %309 = vector.shape_cast %308 : vector<1x1x64xf32> to vector<1x64xf32>
    %c1_131 = arith.constant 1 : index
    %c3_132 = arith.constant 3 : index
    %c0_133 = arith.constant 0 : index
    %310 = vector.load %arg2[%c1_131, %c3_132, %c0_133] : memref<2x656x256xf32, #tpu.memory_space<vmem>>, vector<1x1x64xf32>
    %311 = vector.shape_cast %310 : vector<1x1x64xf32> to vector<1x64xf32>
    %cst_134 = arith.constant dense<0.000000e+00> : vector<16xf32>
    %312 = vector.multi_reduction <add>, %307, %cst_134 [1] : vector<16x64xf32> to vector<16xf32>
    %313 = vector.shape_cast %312 : vector<16xf32> to vector<16x1xf32>
    %cst_135 = arith.constant 6.400000e+01 : f32
    %314 = vector.broadcast %cst_135 : f32 to vector<16x1xf32>
    %315 = arith.divf %313, %314 : vector<16x1xf32>
    %316 = vector.broadcast %315 : vector<16x1xf32> to vector<16x64xf32>
    %317 = arith.subf %307, %316 : vector<16x64xf32>
    %318 = arith.mulf %317, %317 : vector<16x64xf32>
    %cst_136 = arith.constant dense<0.000000e+00> : vector<16xf32>
    %319 = vector.multi_reduction <add>, %318, %cst_136 [1] : vector<16x64xf32> to vector<16xf32>
    %320 = vector.shape_cast %319 : vector<16xf32> to vector<16x1xf32>
    %cst_137 = arith.constant 6.400000e+01 : f32
    %321 = vector.broadcast %cst_137 : f32 to vector<16x1xf32>
    %322 = arith.divf %320, %321 : vector<16x1xf32>
    %323 = vector.broadcast %315 : vector<16x1xf32> to vector<16x64xf32>
    %324 = arith.subf %307, %323 : vector<16x64xf32>
    %cst_138 = arith.constant 9.99999974E-6 : f32
    %325 = vector.broadcast %cst_138 : f32 to vector<16x1xf32>
    %326 = arith.addf %322, %325 : vector<16x1xf32>
    %327 = math.rsqrt %326 : vector<16x1xf32>
    %328 = vector.broadcast %327 : vector<16x1xf32> to vector<16x64xf32>
    %329 = arith.mulf %324, %328 : vector<16x64xf32>
    %330 = vector.broadcast %309 : vector<1x64xf32> to vector<16x64xf32>
    %331 = arith.mulf %329, %330 : vector<16x64xf32>
    %332 = vector.broadcast %311 : vector<1x64xf32> to vector<16x64xf32>
    %333 = arith.addf %331, %332 : vector<16x64xf32>
    %c1_139 = arith.constant 1 : index
    %c144_140 = arith.constant 144 : index
    %c0_141 = arith.constant 0 : index
    %334 = vector.load %arg2[%c1_139, %c144_140, %c0_141] : memref<2x656x256xf32, #tpu.memory_space<vmem>>, vector<1x64x64xf32>
    %335 = vector.shape_cast %334 : vector<1x64x64xf32> to vector<64x64xf32>
    %cst_142 = arith.constant dense<0.000000e+00> : vector<16x64xf32>
    %336 = tpu.matmul %333, %335, %cst_142 {dimension_numbers = #tpu.dot_dimension_numbers<[1], [0], [0], [1], [0, 0, 1, 1], [], []>} : vector<16x64xf32>, vector<64x64xf32>, vector<16x64xf32> -> vector<16x64xf32>
    %c1_143 = arith.constant 1 : index
    %c8_144 = arith.constant 8 : index
    %c0_145 = arith.constant 0 : index
    %337 = vector.load %arg2[%c1_143, %c8_144, %c0_145] : memref<2x656x256xf32, #tpu.memory_space<vmem>>, vector<1x1x64xf32>
    %338 = vector.shape_cast %337 : vector<1x1x64xf32> to vector<1x64xf32>
    %339 = vector.broadcast %338 : vector<1x64xf32> to vector<16x64xf32>
    %340 = arith.addf %336, %339 : vector<16x64xf32>
    %c1_146 = arith.constant 1 : index
    %c208_147 = arith.constant 208 : index
    %c0_148 = arith.constant 0 : index
    %341 = vector.load %arg2[%c1_146, %c208_147, %c0_148] : memref<2x656x256xf32, #tpu.memory_space<vmem>>, vector<1x64x128xf32>
    %342 = vector.shape_cast %341 : vector<1x64x128xf32> to vector<64x128xf32>
    %cst_149 = arith.constant dense<0.000000e+00> : vector<10x128xf32>
    %343 = tpu.matmul %35, %342, %cst_149 {dimension_numbers = #tpu.dot_dimension_numbers<[1], [0], [0], [1], [0, 0, 1, 1], [], []>} : vector<10x64xf32>, vector<64x128xf32>, vector<10x128xf32> -> vector<10x128xf32>
    %c1_150 = arith.constant 1 : index
    %c9_151 = arith.constant 9 : index
    %c0_152 = arith.constant 0 : index
    %344 = vector.load %arg2[%c1_150, %c9_151, %c0_152] : memref<2x656x256xf32, #tpu.memory_space<vmem>>, vector<1x1x128xf32>
    %345 = vector.shape_cast %344 : vector<1x1x128xf32> to vector<1x128xf32>
    %346 = vector.broadcast %345 : vector<1x128xf32> to vector<10x128xf32>
    %347 = arith.addf %343, %346 : vector<10x128xf32>
    %348 = vector.extract_strided_slice %347 {offsets = [0, 0], sizes = [10, 64], strides = [1, 1]} : vector<10x128xf32> to vector<10x64xf32>
    %349 = vector.extract_strided_slice %347 {offsets = [0, 64], sizes = [10, 64], strides = [1, 1]} : vector<10x128xf32> to vector<10x64xf32>
    %c1_153 = arith.constant 1 : index
    %c272_154 = arith.constant 272 : index
    %c0_155 = arith.constant 0 : index
    %350 = vector.load %arg2[%c1_153, %c272_154, %c0_155] : memref<2x656x256xf32, #tpu.memory_space<vmem>>, vector<1x64x64xf32>
    %351 = vector.shape_cast %350 : vector<1x64x64xf32> to vector<64x64xf32>
    %c1_156 = arith.constant 1 : index
    %c10_157 = arith.constant 10 : index
    %c0_158 = arith.constant 0 : index
    %352 = vector.load %arg2[%c1_156, %c10_157, %c0_158] : memref<2x656x256xf32, #tpu.memory_space<vmem>>, vector<1x1x64xf32>
    %353 = vector.shape_cast %352 : vector<1x1x64xf32> to vector<1x64xf32>
    %354 = tpu.concatenate %340, %340, %340, %340 in 0 : vector<16x64xf32>, vector<16x64xf32>, vector<16x64xf32>, vector<16x64xf32> -> vector<64x64xf32>
    %355 = tpu.concatenate %348, %348, %348, %348 in 0 : vector<10x64xf32>, vector<10x64xf32>, vector<10x64xf32>, vector<10x64xf32> -> vector<40x64xf32>
    %356 = arith.mulf %355, %39 : vector<40x64xf32>
    %357 = tpu.concatenate %349, %349, %349, %349 in 0 : vector<10x64xf32>, vector<10x64xf32>, vector<10x64xf32>, vector<10x64xf32> -> vector<40x64xf32>
    %358 = arith.mulf %357, %39 : vector<40x64xf32>
    %cst_159 = arith.constant dense<0.000000e+00> : vector<64x40xf32>
    %359 = tpu.matmul %354, %356, %cst_159 {dimension_numbers = #tpu.dot_dimension_numbers<[1], [1], [0], [0], [0, 0, 1, 0], [], []>} : vector<64x64xf32>, vector<40x64xf32>, vector<64x40xf32> -> vector<64x40xf32>
    %360 = arith.addf %359, %37 : vector<64x40xf32>
    %cst_160 = arith.constant dense<0xFF800000> : vector<64xf32>
    %361 = vector.multi_reduction <maximumf>, %360, %cst_160 [1] : vector<64x40xf32> to vector<64xf32>
    %362 = vector.shape_cast %361 : vector<64xf32> to vector<64x1xf32>
    %363 = vector.broadcast %362 : vector<64x1xf32> to vector<64x40xf32>
    %364 = arith.subf %360, %363 : vector<64x40xf32>
    %365 = math.exp %364 : vector<64x40xf32>
    %cst_161 = arith.constant dense<0.000000e+00> : vector<64xf32>
    %366 = vector.multi_reduction <add>, %365, %cst_161 [1] : vector<64x40xf32> to vector<64xf32>
    %367 = vector.shape_cast %366 : vector<64xf32> to vector<64x1xf32>
    %368 = tpu.reciprocal %367 {approx = true} : vector<64x1xf32> -> vector<64x1xf32>
    %369 = vector.broadcast %368 : vector<64x1xf32> to vector<64x40xf32>
    %370 = arith.mulf %365, %369 : vector<64x40xf32>
    %cst_162 = arith.constant dense<0.000000e+00> : vector<64x64xf32>
    %371 = tpu.matmul %370, %358, %cst_162 {dimension_numbers = #tpu.dot_dimension_numbers<[1], [0], [0], [1], [0, 0, 1, 1], [], []>} : vector<64x40xf32>, vector<40x64xf32>, vector<64x64xf32> -> vector<64x64xf32>
    %372 = vector.extract_strided_slice %371 {offsets = [0, 0], sizes = [16, 64], strides = [1, 1]} : vector<64x64xf32> to vector<16x64xf32>
    %373 = vector.extract_strided_slice %371 {offsets = [16, 0], sizes = [16, 64], strides = [1, 1]} : vector<64x64xf32> to vector<16x64xf32>
    %374 = arith.addf %372, %373 : vector<16x64xf32>
    %375 = vector.extract_strided_slice %371 {offsets = [32, 0], sizes = [16, 64], strides = [1, 1]} : vector<64x64xf32> to vector<16x64xf32>
    %376 = arith.addf %374, %375 : vector<16x64xf32>
    %377 = vector.extract_strided_slice %371 {offsets = [48, 0], sizes = [16, 64], strides = [1, 1]} : vector<64x64xf32> to vector<16x64xf32>
    %378 = arith.addf %376, %377 : vector<16x64xf32>
    %cst_163 = arith.constant dense<0.000000e+00> : vector<16x64xf32>
    %379 = tpu.matmul %378, %351, %cst_163 {dimension_numbers = #tpu.dot_dimension_numbers<[1], [0], [0], [1], [0, 0, 1, 1], [], []>} : vector<16x64xf32>, vector<64x64xf32>, vector<16x64xf32> -> vector<16x64xf32>
    %380 = vector.broadcast %353 : vector<1x64xf32> to vector<16x64xf32>
    %381 = arith.addf %379, %380 : vector<16x64xf32>
    %382 = arith.addf %307, %381 : vector<16x64xf32>
    %c1_164 = arith.constant 1 : index
    %c4_165 = arith.constant 4 : index
    %c0_166 = arith.constant 0 : index
    %383 = vector.load %arg2[%c1_164, %c4_165, %c0_166] : memref<2x656x256xf32, #tpu.memory_space<vmem>>, vector<1x1x64xf32>
    %384 = vector.shape_cast %383 : vector<1x1x64xf32> to vector<1x64xf32>
    %c1_167 = arith.constant 1 : index
    %c5_168 = arith.constant 5 : index
    %c0_169 = arith.constant 0 : index
    %385 = vector.load %arg2[%c1_167, %c5_168, %c0_169] : memref<2x656x256xf32, #tpu.memory_space<vmem>>, vector<1x1x64xf32>
    %386 = vector.shape_cast %385 : vector<1x1x64xf32> to vector<1x64xf32>
    %cst_170 = arith.constant dense<0.000000e+00> : vector<16xf32>
    %387 = vector.multi_reduction <add>, %382, %cst_170 [1] : vector<16x64xf32> to vector<16xf32>
    %388 = vector.shape_cast %387 : vector<16xf32> to vector<16x1xf32>
    %cst_171 = arith.constant 6.400000e+01 : f32
    %389 = vector.broadcast %cst_171 : f32 to vector<16x1xf32>
    %390 = arith.divf %388, %389 : vector<16x1xf32>
    %391 = vector.broadcast %390 : vector<16x1xf32> to vector<16x64xf32>
    %392 = arith.subf %382, %391 : vector<16x64xf32>
    %393 = arith.mulf %392, %392 : vector<16x64xf32>
    %cst_172 = arith.constant dense<0.000000e+00> : vector<16xf32>
    %394 = vector.multi_reduction <add>, %393, %cst_172 [1] : vector<16x64xf32> to vector<16xf32>
    %395 = vector.shape_cast %394 : vector<16xf32> to vector<16x1xf32>
    %cst_173 = arith.constant 6.400000e+01 : f32
    %396 = vector.broadcast %cst_173 : f32 to vector<16x1xf32>
    %397 = arith.divf %395, %396 : vector<16x1xf32>
    %398 = vector.broadcast %390 : vector<16x1xf32> to vector<16x64xf32>
    %399 = arith.subf %382, %398 : vector<16x64xf32>
    %cst_174 = arith.constant 9.99999974E-6 : f32
    %400 = vector.broadcast %cst_174 : f32 to vector<16x1xf32>
    %401 = arith.addf %397, %400 : vector<16x1xf32>
    %402 = math.rsqrt %401 : vector<16x1xf32>
    %403 = vector.broadcast %402 : vector<16x1xf32> to vector<16x64xf32>
    %404 = arith.mulf %399, %403 : vector<16x64xf32>
    %405 = vector.broadcast %384 : vector<1x64xf32> to vector<16x64xf32>
    %406 = arith.mulf %404, %405 : vector<16x64xf32>
    %407 = vector.broadcast %386 : vector<1x64xf32> to vector<16x64xf32>
    %408 = arith.addf %406, %407 : vector<16x64xf32>
    %c1_175 = arith.constant 1 : index
    %c336_176 = arith.constant 336 : index
    %c0_177 = arith.constant 0 : index
    %409 = vector.load %arg2[%c1_175, %c336_176, %c0_177] : memref<2x656x256xf32, #tpu.memory_space<vmem>>, vector<1x64x256xf32>
    %410 = vector.shape_cast %409 : vector<1x64x256xf32> to vector<64x256xf32>
    %cst_178 = arith.constant dense<0.000000e+00> : vector<16x256xf32>
    %411 = tpu.matmul %408, %410, %cst_178 {dimension_numbers = #tpu.dot_dimension_numbers<[1], [0], [0], [1], [0, 0, 1, 1], [], []>} : vector<16x64xf32>, vector<64x256xf32>, vector<16x256xf32> -> vector<16x256xf32>
    %c1_179 = arith.constant 1 : index
    %c11_180 = arith.constant 11 : index
    %c0_181 = arith.constant 0 : index
    %412 = vector.load %arg2[%c1_179, %c11_180, %c0_181] : memref<2x656x256xf32, #tpu.memory_space<vmem>>, vector<1x1x256xf32>
    %413 = vector.shape_cast %412 : vector<1x1x256xf32> to vector<1x256xf32>
    %414 = vector.broadcast %413 : vector<1x256xf32> to vector<16x256xf32>
    %415 = arith.addf %411, %414 : vector<16x256xf32>
    %cst_182 = arith.constant 5.000000e-01 : f32
    %416 = vector.broadcast %cst_182 : f32 to vector<16x256xf32>
    %417 = arith.mulf %416, %415 : vector<16x256xf32>
    %cst_183 = arith.constant 4.471500e-02 : f32
    %418 = vector.broadcast %cst_183 : f32 to vector<16x256xf32>
    %419 = arith.mulf %418, %415 : vector<16x256xf32>
    %420 = arith.mulf %419, %415 : vector<16x256xf32>
    %421 = arith.mulf %420, %415 : vector<16x256xf32>
    %422 = arith.addf %415, %421 : vector<16x256xf32>
    %cst_184 = arith.constant 0.797884583 : f32
    %423 = vector.broadcast %cst_184 : f32 to vector<16x256xf32>
    %424 = arith.mulf %423, %422 : vector<16x256xf32>
    %425 = math.tanh %424 : vector<16x256xf32>
    %cst_185 = arith.constant 1.000000e+00 : f32
    %426 = vector.broadcast %cst_185 : f32 to vector<16x256xf32>
    %427 = arith.addf %426, %425 : vector<16x256xf32>
    %428 = arith.mulf %417, %427 : vector<16x256xf32>
    %c1_186 = arith.constant 1 : index
    %c400_187 = arith.constant 400 : index
    %c0_188 = arith.constant 0 : index
    %429 = vector.load %arg2[%c1_186, %c400_187, %c0_188] : memref<2x656x256xf32, #tpu.memory_space<vmem>>, vector<1x256x64xf32>
    %430 = vector.shape_cast %429 : vector<1x256x64xf32> to vector<256x64xf32>
    %cst_189 = arith.constant dense<0.000000e+00> : vector<16x64xf32>
    %431 = tpu.matmul %428, %430, %cst_189 {dimension_numbers = #tpu.dot_dimension_numbers<[1], [0], [0], [1], [0, 0, 1, 1], [], []>} : vector<16x256xf32>, vector<256x64xf32>, vector<16x64xf32> -> vector<16x64xf32>
    %c1_190 = arith.constant 1 : index
    %c12_191 = arith.constant 12 : index
    %c0_192 = arith.constant 0 : index
    %432 = vector.load %arg2[%c1_190, %c12_191, %c0_192] : memref<2x656x256xf32, #tpu.memory_space<vmem>>, vector<1x1x64xf32>
    %433 = vector.shape_cast %432 : vector<1x1x64xf32> to vector<1x64xf32>
    %434 = vector.broadcast %433 : vector<1x64xf32> to vector<16x64xf32>
    %435 = arith.addf %431, %434 : vector<16x64xf32>
    %436 = arith.addf %382, %435 : vector<16x64xf32>
    %c3_193 = arith.constant 3 : index
    %c0_194 = arith.constant 0 : index
    %437 = vector.load %arg1[%c3_193, %c0_194] : memref<736x256xf32, #tpu.memory_space<vmem>>, vector<1x64xf32>
    %c4_195 = arith.constant 4 : index
    %c0_196 = arith.constant 0 : index
    %438 = vector.load %arg1[%c4_195, %c0_196] : memref<736x256xf32, #tpu.memory_space<vmem>>, vector<1x64xf32>
    %cst_197 = arith.constant dense<0.000000e+00> : vector<16xf32>
    %439 = vector.multi_reduction <add>, %436, %cst_197 [1] : vector<16x64xf32> to vector<16xf32>
    %440 = vector.shape_cast %439 : vector<16xf32> to vector<16x1xf32>
    %cst_198 = arith.constant 6.400000e+01 : f32
    %441 = vector.broadcast %cst_198 : f32 to vector<16x1xf32>
    %442 = arith.divf %440, %441 : vector<16x1xf32>
    %443 = vector.broadcast %442 : vector<16x1xf32> to vector<16x64xf32>
    %444 = arith.subf %436, %443 : vector<16x64xf32>
    %445 = arith.mulf %444, %444 : vector<16x64xf32>
    %cst_199 = arith.constant dense<0.000000e+00> : vector<16xf32>
    %446 = vector.multi_reduction <add>, %445, %cst_199 [1] : vector<16x64xf32> to vector<16xf32>
    %447 = vector.shape_cast %446 : vector<16xf32> to vector<16x1xf32>
    %cst_200 = arith.constant 6.400000e+01 : f32
    %448 = vector.broadcast %cst_200 : f32 to vector<16x1xf32>
    %449 = arith.divf %447, %448 : vector<16x1xf32>
    %450 = vector.broadcast %442 : vector<16x1xf32> to vector<16x64xf32>
    %451 = arith.subf %436, %450 : vector<16x64xf32>
    %cst_201 = arith.constant 9.99999974E-6 : f32
    %452 = vector.broadcast %cst_201 : f32 to vector<16x1xf32>
    %453 = arith.addf %449, %452 : vector<16x1xf32>
    %454 = math.rsqrt %453 : vector<16x1xf32>
    %455 = vector.broadcast %454 : vector<16x1xf32> to vector<16x64xf32>
    %456 = arith.mulf %451, %455 : vector<16x64xf32>
    %457 = vector.broadcast %437 : vector<1x64xf32> to vector<16x64xf32>
    %458 = arith.mulf %456, %457 : vector<16x64xf32>
    %459 = vector.broadcast %438 : vector<1x64xf32> to vector<16x64xf32>
    %460 = arith.addf %458, %459 : vector<16x64xf32>
    %c672 = arith.constant 672 : index
    %c0_202 = arith.constant 0 : index
    %461 = vector.load %arg1[%c672, %c0_202] : memref<736x256xf32, #tpu.memory_space<vmem>>, vector<64x128xf32>
    %cst_203 = arith.constant dense<0.000000e+00> : vector<16x128xf32>
    %462 = tpu.matmul %460, %461, %cst_203 {dimension_numbers = #tpu.dot_dimension_numbers<[1], [0], [0], [1], [0, 0, 1, 1], [], []>} : vector<16x64xf32>, vector<64x128xf32>, vector<16x128xf32> -> vector<16x128xf32>
    %c5_204 = arith.constant 5 : index
    %c0_205 = arith.constant 0 : index
    %463 = vector.load %arg1[%c5_204, %c0_205] : memref<736x256xf32, #tpu.memory_space<vmem>>, vector<1x128xf32>
    %464 = vector.broadcast %463 : vector<1x128xf32> to vector<16x128xf32>
    %465 = arith.addf %462, %464 : vector<16x128xf32>
    %c0_206 = arith.constant 0 : index
    %c0_207 = arith.constant 0 : index
    %466 = vector.load %arg3[%c0_206, %c0_207] : memref<16x128xf32, #tpu.memory_space<vmem>>, vector<16x128xf32>
    tpu.vector_store %arg3[%c0_206, %c0_207], %465 {strides = array<i32>} : memref<16x128xf32, #tpu.memory_space<vmem>>, vector<16x128xf32>,
    return
  }
}

</mosaic_0001>

<llo_original>
// kernel: transformer_backbone_forward.1
$region0: #{transformer_backbone_forward.1}
  #allocation0 [shape = 'u32[]', space=smem, size = 0x4, offset = 0x4, fixed_abs, tag = 'smem constant byte address 0x4 - core index']
  #allocation1 [shape = 'u32[144,128]{1,0:T(1,128)}', space=vmem, size = 0x12000, scoped, tag = 'internal scratch']
  %s0 = inlined_call_operand.vmem [shape: f32[10,64], index: 0, kind: input, shape index: {}]
  %s1 = inlined_call_operand.hbm [shape: f32[736,256], index: 1, kind: input, shape index: {}]
  %s2 = inlined_call_operand.hbm [shape: f32[2,656,256], index: 2, kind: input, shape index: {}]
  %s3 = inlined_call_operand.vmem [shape: f32[16,128], index: 3, kind: output, shape index: {}]
  %s4 = sld [smem:[#allocation0]]
  $region30: #{transformer_backbone_forward.1} parent=0
    _
  %s6 = ssub.s32 1, %s4
  %s7 = scalar_select 0, %s6, %s4
  $region1: #{transformer_backbone_forward.1} parent=0
    #allocation2 [shape = 'u8[753664]{0}', space=vmem, size = 0xb8000, scoped, tag = 'input window, operand 1, single buffered']
    #allocation3 [shape = 's32[1]{0}', space=sflag, size = 0x4, scoped, tag = 'scoped memory for transformer_backbone_forward.1']
    #allocation4 [shape = 'u8[1343488]{0}', space=vmem, size = 0x148000, scoped, tag = 'input window, operand 2, single buffered']
    #allocation5 [shape = 's32[1]{0}', space=sflag, size = 0x4, scoped, tag = 'scoped memory for transformer_backbone_forward.1']
    %8 = vsyncpa [#allocation3], 0
    %9 = vsyncpa [#allocation5], 0
    // Predicated region
    $region2: #{transformer_backbone_forward.1} parent=1 // pred_check
      _
    $region3: #{transformer_backbone_forward.1} parent=1 // pred_check_branch
      %11 = sbr.rel (0) target = $region5
    $region4: #{transformer_backbone_forward.1} parent=1 // pred_region
      _
    $region5: #{transformer_backbone_forward.1} parent=1 // pred_fallthru
      _
    // Predicated region
    $region6: #{transformer_backbone_forward.1} parent=1 // pred_check
      _
    $region7: #{transformer_backbone_forward.1} parent=1 // pred_check_branch
      %13 = sbr.rel (0) target = $region9
    $region8: #{transformer_backbone_forward.1} parent=1 // pred_region
      %s15 = ssub.s32 23552, 23552
      %16 = vsyncadd [#allocation3], %s15
      %s17 = sshll.u32 [#allocation2], 4
      %s18 = int_to_ptr.vmem [resolvable:$true] %s17
      %23 = dma.hbm_to_vmem [thread:$0]  %s1, 23552, %s18, [#allocation3], 256, 256, 16
    $region9: #{transformer_backbone_forward.1} parent=1 // pred_fallthru
      _
    // Predicated region
    $region10: #{transformer_backbone_forward.1} parent=1 // pred_check
      _
    $region11: #{transformer_backbone_forward.1} parent=1 // pred_check_branch
      %25 = sbr.rel (0) target = $region13
    $region12: #{transformer_backbone_forward.1} parent=1 // pred_region
      %s27 = ssub.s32 41984, 41984
      %28 = vsyncadd [#allocation5], %s27
      %s29 = sshll.u32 [#allocation4], 4
      %s30 = int_to_ptr.vmem [resolvable:$true] %s29
      %35 = dma.hbm_to_vmem [thread:$0]  %s2, 41984, %s30, [#allocation5], 256, 256, 16
    $region13: #{transformer_backbone_forward.1} parent=1 // pred_fallthru
      _
    // Predicated region
    $region14: #{transformer_backbone_forward.1} parent=1 // pred_check
      _
    $region15: #{transformer_backbone_forward.1} parent=1 // pred_check_branch
      %37 = sbr.rel (0) target = $region17
    $region16: #{transformer_backbone_forward.1} parent=1 // pred_region
      %38 = dma.done [#allocation3], 23552
    $region17: #{transformer_backbone_forward.1} parent=1 // pred_fallthru
      _
    // Predicated region
    $region18: #{transformer_backbone_forward.1} parent=1 // pred_check
      _
    $region19: #{transformer_backbone_forward.1} parent=1 // pred_check_branch
      %40 = sbr.rel (0) target = $region21
    $region20: #{transformer_backbone_forward.1} parent=1 // pred_region
      %41 = dma.done [#allocation5], 41984
    $region21: #{transformer_backbone_forward.1} parent=1 // pred_fallthru
      _
    %v42 = vld [vmem:[%s0] sm:$0xff]
    %v43 = vld [vmem:[%s0 + $0x8] sm:$0x3]
    %v44 = vld [vmem:[#allocation2 + $0x50] sm:$0xff]
    %v45 = vld [vmem:[#allocation2 + $0x60] sm:$0x3]
    %v46 = vld [vmem:[#allocation2 + $0x70] sm:$0xff]
    %v47 = vld [vmem:[#allocation2 + $0x80] sm:$0xff]
    %v48 = vld [vmem:[#allocation2 + $0x90] sm:$0xff]
    %v49 = vld [vmem:[#allocation2 + $0xa0] sm:$0xff]
    %v50 = vld [vmem:[#allocation2 + $0xb0] sm:$0xff]
    %v51 = vld [vmem:[#allocation2 + $0xc0] sm:$0xff]
    %v52 = vld [vmem:[#allocation2 + $0xd0] sm:$0xff]
    %v53 = vld [vmem:[#allocation2 + $0xe0] sm:$0xff]
    %v54 = vld [vmem:[#allocation2] ss:$0 sm:$0xff]
    %vm55 = vcmask 523264
    %v57 = vsel %vm55, %v42, 0
    %v60 = vsel %vm55, %v43, 0
    %62 = vmatprep.subr.mxu0 0.0
    %63 = vmatpush1.msra.mxu0 %v46
    %64 = vmatprep.subr.mxu0 0.0
    %65 = vmatpush1.msra.mxu0 %v47
    %66 = vmatprep.subr.mxu0 0.0
    %67 = vmatpush1.msra.mxu0 %v48
    %68 = vmatprep.subr.mxu0 0.0
    %69 = vmatpush1.msra.mxu0 %v49
    %70 = vmatprep.subr.mxu0 0.0
    %71 = vmatpush1.msra.mxu0 %v50
    %72 = vmatprep.subr.mxu0 0.0
    %73 = vmatpush1.msra.mxu0 %v51
    %74 = vmatprep.subr.mxu0 0.0
    %75 = vmatpush1.msra.mxu0 %v52
    %76 = vmatprep.subr.mxu0 0.0
    %77 = vmatpush1.msra.mxu0 %v53
    %78 = vmatprep.subr.mxu0 0.0
    %79 = vmatpush1.msra.mxu0 0.0
    %80 = vmatprep.subr.mxu0 0.0
    %81 = vmatpush1.msra.mxu0 0.0
    %82 = vmatprep.subr.mxu0 0.0
    %83 = vmatpush1.msra.mxu0 0.0
    %84 = vmatprep.subr.mxu0 0.0
    %85 = vmatpush1.msra.mxu0 0.0
    %86 = vmatprep.subr.mxu0 0.0
    %87 = vmatpush1.msra.mxu0 0.0
    %88 = vmatprep.subr.mxu0 0.0
    %89 = vmatpush1.msra.mxu0 0.0
    %90 = vmatprep.subr.mxu0 0.0
    %91 = vmatpush1.msra.mxu0 0.0
    %92 = vmatprep.subr.mxu0 0.0
    %93 = vmatpush1.msra.mxu0 0.0
    %94 = vmatprep.subr.mxu0 0.0
    %95 = vmatpush1.msra.mxu0 0.0
    %96 = vmatprep.subr.mxu0 0.0
    %97 = vmatpush1.msra.mxu0 0.0
    %98 = vmatprep.subr.mxu0 0.0
    %99 = vmatpush1.msra.mxu0 0.0
    %100 = vmatprep.subr.mxu0 0.0
    %101 = vmatpush1.msra.mxu0 0.0
    %102 = vmatprep.subr.mxu0 0.0
    %103 = vmatpush1.msra.mxu0 0.0
    %104 = vmatprep.subr.mxu0 0.0
    %105 = vmatpush1.msra.mxu0 0.0
    %106 = vmatprep.subr.mxu0 0.0
    %107 = vmatpush1.msra.mxu0 0.0
    %108 = vmatprep.subr.mxu0 0.0
    %109 = vmatpush1.msra.mxu0 0.0
    %110 = vmatprep.subr.mxu0 0.0
    %111 = vmatpush1.msra.mxu0 0.0
    %112 = vmatprep.subr.mxu0 0.0
    %113 = vmatpush1.msra.mxu0 0.0
    %114 = vmatprep.subr.mxu0 0.0
    %115 = vmatpush1.msra.mxu0 0.0
    %116 = vmatprep.subr.mxu0 0.0
    %117 = vmatpush1.msra.mxu0 0.0
    %118 = vmatprep.subr.mxu0 0.0
    %119 = vmatpush1.msra.mxu0 0.0
    %120 = vmatprep.subr.mxu0 0.0
    %121 = vmatpush1.msra.mxu0 0.0
    %122 = vmatprep.subr.mxu0 0.0
    %123 = vmatpush1.msra.mxu0 0.0
    %124 = vmatprep.subr.mxu0 0.0
    %125 = vmatpush1.msra.mxu0 0.0
    %126 = vmatprep.mubr.f32.mxu0 0.0
    %127 = vmatmul.mubr.f32.gmra.mrb[0].mxu0 %v57
    %v128 = vpop.f32.mrb[0].mxu0
    %v129 = vadd.f32 %v54, %v128
    %v130 = vpop.f32.mrb[0].mxu0
    %131 = vmatprep.mubr.f32.mxu0 0.0
    %132 = vmatmul.mubr.f32.gmra.mrb[0].mxu0 %v60
    %v133 = vpop.f32.mrb[0].mxu0
    %v134 = vadd.f32 %v54, %v133
    %v135 = vpop.f32.mrb[0].mxu0
    %136 = vdwg.mxu0
    %v137 = vmul.f32 %v44, %v129
    %v138 = vmul.f32 %v45, %v134
    %v139 = vsub.f32 1.0, %v44
    %v140 = vsub.f32 1.0, %v45
    %v141 = vmul.f32 %v139, %v42
    %v142 = vmul.f32 %v140, %v43
    %v143 = vadd.f32 %v137, %v141
    %v144 = vadd.f32 %v138, %v142
    %v145 = vld [vmem:[#allocation2 + $0x30] sm:$0xff]
    %v146 = vld [vmem:[#allocation2 + $0x40] sm:$0x3]
    %v147 = vadd.f32 %v143, %v145
    %v148 = vadd.f32 %v144, %v146
    %v149 = vld [vmem:[#allocation2 + $0xf0] sm:$0xff]
    %v150 = vld [vmem:[#allocation2 + $0xf8] sm:$0xff]
    %v151 = vld [vmem:[#allocation2 + $0x100] sm:$0xff]
    %v152 = vld [vmem:[#allocation2 + $0x108] sm:$0xff]
    %v153 = vld [vmem:[#allocation2 + $0x110] sm:$0xff]
    %v154 = vld [vmem:[#allocation2 + $0x118] sm:$0xff]
    %v155 = vld [vmem:[#allocation2 + $0x120] sm:$0xff]
    %v156 = vld [vmem:[#allocation2 + $0x128] sm:$0xff]
    %v157 = vld [vmem:[#allocation2 + $0x130] sm:$0xff]
    %v158 = vld [vmem:[#allocation2 + $0x138] sm:$0xff]
    %v159 = vld [vmem:[#allocation2 + $0x140] sm:$0xff]
    %v160 = vld [vmem:[#allocation2 + $0x148] sm:$0xff]
    %v161 = vld [vmem:[#allocation2 + $0x150] sm:$0xff]
    %v162 = vld [vmem:[#allocation2 + $0x158] sm:$0xff]
    %v163 = vld [vmem:[#allocation2 + $0x160] sm:$0xff]
    %v164 = vld [vmem:[#allocation2 + $0x168] sm:$0xff]
    %s165 = scalar_lea.vmem [#allocation2], 1
    %v166 = vld [vmem:[%s165] ss:$8 sm:$0x3]
    %v168 = vlaneseq
    %v169 = vshrl.u32 %v168, 7
    %v170 = vsub.s32 0, %v169
    %v171 = vrot.slane %v166, %v170
    %v172 = vlaneseq
    %v173 = vshrl.u32 %v172, 7
    %v174 = vsub.s32 1, %v173
    %v175 = vrot.slane %v166, %v174
    %v179 = vsel %vm55, %v147, 0
    %v182 = vsel %vm55, %v148, 0
    %184 = vmatprep.subr.mxu0 %v150
    %185 = vmatpush1.msra.mxu0 %v149
    %186 = vmatprep.subr.mxu0 %v152
    %187 = vmatpush1.msra.mxu0 %v151
    %188 = vmatprep.subr.mxu0 %v154
    %189 = vmatpush1.msra.mxu0 %v153
    %190 = vmatprep.subr.mxu0 %v156
    %191 = vmatpush1.msra.mxu0 %v155
    %192 = vmatprep.subr.mxu0 %v158
    %193 = vmatpush1.msra.mxu0 %v157
    %194 = vmatprep.subr.mxu0 %v160
    %195 = vmatpush1.msra.mxu0 %v159
    %196 = vmatprep.subr.mxu0 %v162
    %197 = vmatpush1.msra.mxu0 %v161
    %198 = vmatprep.subr.mxu0 %v164
    %199 = vmatpush1.msra.mxu0 %v163
    %200 = vmatprep.subr.mxu0 0.0
    %201 = vmatpush1.msra.mxu0 0.0
    %202 = vmatprep.subr.mxu0 0.0
    %203 = vmatpush1.msra.mxu0 0.0
    %204 = vmatprep.subr.mxu0 0.0
    %205 = vmatpush1.msra.mxu0 0.0
    %206 = vmatprep.subr.mxu0 0.0
    %207 = vmatpush1.msra.mxu0 0.0
    %208 = vmatprep.subr.mxu0 0.0
    %209 = vmatpush1.msra.mxu0 0.0
    %210 = vmatprep.subr.mxu0 0.0
    %211 = vmatpush1.msra.mxu0 0.0
    %212 = vmatprep.subr.mxu0 0.0
    %213 = vmatpush1.msra.mxu0 0.0
    %214 = vmatprep.subr.mxu0 0.0
    %215 = vmatpush1.msra.mxu0 0.0
    %216 = vmatprep.subr.mxu0 0.0
    %217 = vmatpush1.msra.mxu0 0.0
    %218 = vmatprep.subr.mxu0 0.0
    %219 = vmatpush1.msra.mxu0 0.0
    %220 = vmatprep.subr.mxu0 0.0
    %221 = vmatpush1.msra.mxu0 0.0
    %222 = vmatprep.subr.mxu0 0.0
    %223 = vmatpush1.msra.mxu0 0.0
    %224 = vmatprep.subr.mxu0 0.0
    %225 = vmatpush1.msra.mxu0 0.0
    %226 = vmatprep.subr.mxu0 0.0
    %227 = vmatpush1.msra.mxu0 0.0
    %228 = vmatprep.subr.mxu0 0.0
    %229 = vmatpush1.msra.mxu0 0.0
    %230 = vmatprep.subr.mxu0 0.0
    %231 = vmatpush1.msra.mxu0 0.0
    %232 = vmatprep.subr.mxu0 0.0
    %233 = vmatpush1.msra.mxu0 0.0
    %234 = vmatprep.subr.mxu0 0.0
    %235 = vmatpush1.msra.mxu0 0.0
    %236 = vmatprep.subr.mxu0 0.0
    %237 = vmatpush1.msra.mxu0 0.0
    %238 = vmatprep.subr.mxu0 0.0
    %239 = vmatpush1.msra.mxu0 0.0
    %240 = vmatprep.subr.mxu0 0.0
    %241 = vmatpush1.msra.mxu0 0.0
    %242 = vmatprep.subr.mxu0 0.0
    %243 = vmatpush1.msra.mxu0 0.0
    %244 = vmatprep.subr.mxu0 0.0
    %245 = vmatpush1.msra.mxu0 0.0
    %246 = vmatprep.subr.mxu0 0.0
    %247 = vmatpush1.msra.mxu0 0.0
    %248 = vmatprep.mubr.f32.mxu0 0.0
    %249 = vmatmul.mubr.f32.gmra.mrb[0].mxu0 %v179
    %v250 = vpop.f32.mrb[0].mxu0
    %v251 = vadd.f32 %v171, %v250
    %v252 = vpop.f32.mrb[0].mxu0
    %v253 = vadd.f32 %v175, %v252
    %254 = vmatprep.mubr.f32.mxu0 0.0
    %255 = vmatmul.mubr.f32.gmra.mrb[0].mxu0 %v182
    %v256 = vpop.f32.mrb[0].mxu0
    %v257 = vadd.f32 %v171, %v256
    %v258 = vpop.f32.mrb[0].mxu0
    %v259 = vadd.f32 %v175, %v258
    %260 = vdwg.mxu0
    %v261 = vmax.f32 %v251, 0.0
    %v262 = vmax.f32 %v253, 0.0
    %v263 = vmax.f32 %v257, 0.0
    %v264 = vmax.f32 %v259, 0.0
    %v265 = vand.u32 2147483647, %v251
    %v266 = vand.u32 2147483647, %v253
    %v267 = vand.u32 2147483647, %v257
    %v268 = vand.u32 2147483647, %v259
    %v269 = vsub.f32 0.0, %v265
    %v270 = vsub.f32 0.0, %v266
    %v271 = vsub.f32 0.0, %v267
    %v272 = vsub.f32 0.0, %v268
    %v273 = vmul.f32 %v269, 1.442695
    %v274 = vpow.pop %v273
    %v275 = vmul.f32 %v270, 1.442695
    %v276 = vpow.pop %v275
    %v277 = vmul.f32 %v271, 1.442695
    %v278 = vpow.pop %v277
    %v279 = vmul.f32 %v272, 1.442695
    %v280 = vpow.pop %v279
    %v281 = vadd.f32 %v274, 1.0
    %v282 = vadd.f32 %v276, 1.0
    %v283 = vadd.f32 %v278, 1.0
    %v284 = vadd.f32 %v280, 1.0
    %v285 = vlog2.pop %v281
    %v286 = vmul.f32 %v285, 0.6931472
    %v287 = vlog2.pop %v282
    %v288 = vmul.f32 %v287, 0.6931472
    %v289 = vlog2.pop %v283
    %v290 = vmul.f32 %v289, 0.6931472
    %v291 = vlog2.pop %v284
    %v292 = vmul.f32 %v291, 0.6931472
    %v293 = vadd.f32 %v261, %v286
    %v294 = vadd.f32 %v262, %v288
    %v295 = vadd.f32 %v263, %v290
    %v296 = vadd.f32 %v264, %v292
    %v297 = vtanh.pop %v293
    %v298 = vtanh.pop %v294
    %v299 = vtanh.pop %v295
    %v300 = vtanh.pop %v296
    %v301 = vmul.f32 %v251, %v297
    %v302 = vmul.f32 %v253, %v298
    %v303 = vmul.f32 %v257, %v299
    %v304 = vmul.f32 %v259, %v300
    %v305 = vld [vmem:[#allocation2 + $0x170] sm:$0xff]
    %v306 = vld [vmem:[#allocation2 + $0x180] sm:$0xff]
    %v307 = vld [vmem:[#allocation2 + $0x190] sm:$0xff]
    %v308 = vld [vmem:[#allocation2 + $0x1a0] sm:$0xff]
    %v309 = vld [vmem:[#allocation2 + $0x1b0] sm:$0xff]
    %v310 = vld [vmem:[#allocation2 + $0x1c0] sm:$0xff]
    %v311 = vld [vmem:[#allocation2 + $0x1d0] sm:$0xff]
    %v312 = vld [vmem:[#allocation2 + $0x1e0] sm:$0xff]
    %v313 = vld [vmem:[#allocation2 + $0x1f0] sm:$0xff]
    %v314 = vld [vmem:[#allocation2 + $0x200] sm:$0xff]
    %v315 = vld [vmem:[#allocation2 + $0x210] sm:$0xff]
    %v316 = vld [vmem:[#allocation2 + $0x220] sm:$0xff]
    %v317 = vld [vmem:[#allocation2 + $0x230] sm:$0xff]
    %v318 = vld [vmem:[#allocation2 + $0x240] sm:$0xff]
    %v319 = vld [vmem:[#allocation2 + $0x250] sm:$0xff]
    %v320 = vld [vmem:[#allocation2 + $0x260] sm:$0xff]
    %v321 = vld [vmem:[#allocation2 + $0x270] sm:$0xff]
    %v322 = vld [vmem:[#allocation2 + $0x280] sm:$0xff]
    %v323 = vld [vmem:[#allocation2 + $0x290] sm:$0xff]
    %v324 = vld [vmem:[#allocation2 + $0x2a0] sm:$0xff]
    %v325 = vld [vmem:[#allocation2 + $0x2b0] sm:$0xff]
    %v326 = vld [vmem:[#allocation2 + $0x2c0] sm:$0xff]
    %v327 = vld [vmem:[#allocation2 + $0x2d0] sm:$0xff]
    %v328 = vld [vmem:[#allocation2 + $0x2e0] sm:$0xff]
    %v329 = vld [vmem:[#allocation2 + $0x2f0] sm:$0xff]
    %v330 = vld [vmem:[#allocation2 + $0x300] sm:$0xff]
    %v331 = vld [vmem:[#allocation2 + $0x310] sm:$0xff]
    %v332 = vld [vmem:[#allocation2 + $0x320] sm:$0xff]
    %v333 = vld [vmem:[#allocation2 + $0x330] sm:$0xff]
    %v334 = vld [vmem:[#allocation2 + $0x340] sm:$0xff]
    %v335 = vld [vmem:[#allocation2 + $0x350] sm:$0xff]
    %v336 = vld [vmem:[#allocation2 + $0x360] sm:$0xff]
    %v337 = vld [vmem:[#allocation2 + $0x2] ss:$0 sm:$0xff]
    %338 = vmatprep.subr.mxu0 0.0
    %339 = vmatpush1.msra.mxu0 %v305
    %340 = vmatprep.subr.mxu0 0.0
    %341 = vmatpush1.msra.mxu0 %v306
    %342 = vmatprep.subr.mxu0 0.0
    %343 = vmatpush1.msra.mxu0 %v307
    %344 = vmatprep.subr.mxu0 0.0
    %345 = vmatpush1.msra.mxu0 %v308
    %346 = vmatprep.subr.mxu0 0.0
    %347 = vmatpush1.msra.mxu0 %v309
    %348 = vmatprep.subr.mxu0 0.0
    %349 = vmatpush1.msra.mxu0 %v310
    %350 = vmatprep.subr.mxu0 0.0
    %351 = vmatpush1.msra.mxu0 %v311
    %352 = vmatprep.subr.mxu0 0.0
    %353 = vmatpush1.msra.mxu0 %v312
    %354 = vmatprep.subr.mxu0 0.0
    %355 = vmatpush1.msra.mxu0 %v313
    %356 = vmatprep.subr.mxu0 0.0
    %357 = vmatpush1.msra.mxu0 %v314
    %358 = vmatprep.subr.mxu0 0.0
    %359 = vmatpush1.msra.mxu0 %v315
    %360 = vmatprep.subr.mxu0 0.0
    %361 = vmatpush1.msra.mxu0 %v316
    %362 = vmatprep.subr.mxu0 0.0
    %363 = vmatpush1.msra.mxu0 %v317
    %364 = vmatprep.subr.mxu0 0.0
    %365 = vmatpush1.msra.mxu0 %v318
    %366 = vmatprep.subr.mxu0 0.0
    %367 = vmatpush1.msra.mxu0 %v319
    %368 = vmatprep.subr.mxu0 0.0
    %369 = vmatpush1.msra.mxu0 %v320
    %370 = vmatprep.subr.mxu0 0.0
    %371 = vmatpush1.msra.mxu0 %v321
    %372 = vmatprep.subr.mxu0 0.0
    %373 = vmatpush1.msra.mxu0 %v322
    %374 = vmatprep.subr.mxu0 0.0
    %375 = vmatpush1.msra.mxu0 %v323
    %376 = vmatprep.subr.mxu0 0.0
    %377 = vmatpush1.msra.mxu0 %v324
    %378 = vmatprep.subr.mxu0 0.0
    %379 = vmatpush1.msra.mxu0 %v325
    %380 = vmatprep.subr.mxu0 0.0
    %381 = vmatpush1.msra.mxu0 %v326
    %382 = vmatprep.subr.mxu0 0.0
    %383 = vmatpush1.msra.mxu0 %v327
    %384 = vmatprep.subr.mxu0 0.0
    %385 = vmatpush1.msra.mxu0 %v328
    %386 = vmatprep.subr.mxu0 0.0
    %387 = vmatpush1.msra.mxu0 %v329
    %388 = vmatprep.subr.mxu0 0.0
    %389 = vmatpush1.msra.mxu0 %v330
    %390 = vmatprep.subr.mxu0 0.0
    %391 = vmatpush1.msra.mxu0 %v331
    %392 = vmatprep.subr.mxu0 0.0
    %393 = vmatpush1.msra.mxu0 %v332
    %394 = vmatprep.subr.mxu0 0.0
    %395 = vmatpush1.msra.mxu0 %v333
    %396 = vmatprep.subr.mxu0 0.0
    %397 = vmatpush1.msra.mxu0 %v334
    %398 = vmatprep.subr.mxu0 0.0
    %399 = vmatpush1.msra.mxu0 %v335
    %400 = vmatprep.subr.mxu0 0.0
    %401 = vmatpush1.msra.mxu0 %v336
    %402 = vmatprep.mubr.f32.mxu0 %v302
    %403 = vmatmul.mubr.f32.gmra.mrb[0].mxu0 %v301
    %v404 = vpop.f32.mrb[0].mxu0
    %v405 = vadd.f32 %v337, %v404
    %v406 = vpop.f32.mrb[0].mxu0
    %407 = vmatprep.mubr.f32.mxu0 %v304
    %408 = vmatmul.mubr.f32.gmra.mrb[0].mxu0 %v303
    %v409 = vpop.f32.mrb[0].mxu0
    %v410 = vadd.f32 %v337, %v409
    %v411 = vpop.f32.mrb[0].mxu0
    %412 = vdwg.mxu0
    %v413 = vld [vmem:[#allocation2 + $0x370] sm:$0xff]
    %v414 = vld [vmem:[#allocation2 + $0x380] sm:$0xff]
    %v415 = vld [vmem:[#allocation2 + $0x390] sm:$0xff]
    %v416 = vld [vmem:[#allocation2 + $0x3a0] sm:$0xff]
    %v417 = vld [vmem:[#allocation2 + $0x3b0] sm:$0xff]
    %v418 = vld [vmem:[#allocation2 + $0x3c0] sm:$0xff]
    %v419 = vld [vmem:[#allocation2 + $0x3d0] sm:$0xff]
    %v420 = vld [vmem:[#allocation2 + $0x3e0] sm:$0xff]
    %v421 = vld [vmem:[#allocation2 + $0x3f0] sm:$0xff]
    %v422 = vld [vmem:[#allocation2 + $0x400] sm:$0xff]
    %v423 = vld [vmem:[#allocation2 + $0x410] sm:$0xff]
    %v424 = vld [vmem:[#allocation2 + $0x420] sm:$0xff]
    %v425 = vld [vmem:[#allocation2 + $0x430] sm:$0xff]
    %v426 = vld [vmem:[#allocation2 + $0x440] sm:$0xff]
    %v427 = vld [vmem:[#allocation2 + $0x450] sm:$0xff]
    %v428 = vld [vmem:[#allocation2 + $0x460] sm:$0xff]
    %v429 = vld [vmem:[#allocation2 + $0x470] sm:$0xff]
    %v430 = vld [vmem:[#allocation2 + $0x480] sm:$0xff]
    %v431 = vld [vmem:[#allocation2 + $0x490] sm:$0xff]
    %v432 = vld [vmem:[#allocation2 + $0x4a0] sm:$0xff]
    %v433 = vld [vmem:[#allocation2 + $0x4b0] sm:$0xff]
    %v434 = vld [vmem:[#allocation2 + $0x4c0] sm:$0xff]
    %v435 = vld [vmem:[#allocation2 + $0x4d0] sm:$0xff]
    %v436 = vld [vmem:[#allocation2 + $0x4e0] sm:$0xff]
    %v437 = vld [vmem:[#allocation2 + $0x4f0] sm:$0xff]
    %v438 = vld [vmem:[#allocation2 + $0x500] sm:$0xff]
    %v439 = vld [vmem:[#allocation2 + $0x510] sm:$0xff]
    %v440 = vld [vmem:[#allocation2 + $0x520] sm:$0xff]
    %v441 = vld [vmem:[#allocation2 + $0x530] sm:$0xff]
    %v442 = vld [vmem:[#allocation2 + $0x10] sm:$0xff]
    %v443 = vld [vmem:[#allocation2 + $0x20] sm:$0xff]
    %v444 = vld [vmem:[#allocation4] ss:$0 sm:$0xff]
    %v445 = vld [vmem:[#allocation4 + $0x1] ss:$0 sm:$0xff]
    %v446 = vsel %vm55, %v442, 0.0
    %447 = vadd.xlane.f32.xlu0 %v446
    %v448 = vpop.xlane.xlu0 %447
    %v449 = vsel %vm55, %v443, 0.0
    %450 = vadd.xlane.f32.xlu0 %v449
    %v451 = vpop.xlane.xlu0 %450
    %v452 = vrcp.pop 64.0
    %v453 = vmul.f32 %v448, %v452
    %v454 = vmul.f32 %v451, %v452
    %v455 = vsub.f32 %v442, %v453
    %v456 = vsub.f32 %v443, %v454
    %v457 = vmul.f32 %v455, %v455
    %v458 = vmul.f32 %v456, %v456
    %v459 = vsel %vm55, %v457, 0.0
    %460 = vadd.xlane.f32.xlu0 %v459
    %v461 = vpop.xlane.xlu0 %460
    %v462 = vsel %vm55, %v458, 0.0
    %463 = vadd.xlane.f32.xlu0 %v462
    %v464 = vpop.xlane.xlu0 %463
    %v465 = vmul.f32 %v461, %v452
    %v466 = vmul.f32 %v464, %v452
    %v467 = vadd.f32 %v465, 1e-05
    %v468 = vadd.f32 %v466, 1e-05
    %v469 = vrsqrt.pop %v467
    %v470 = vrsqrt.pop %v468
    %v471 = vmul.f32 %v455, %v469
    %v472 = vmul.f32 %v456, %v470
    %v473 = vmul.f32 %v471, %v444
    %v474 = vmul.f32 %v472, %v444
    %v475 = vadd.f32 %v473, %v445
    %v476 = vadd.f32 %v474, %v445
    %v477 = vld [vmem:[#allocation4 + $0x20] sm:$0xff]
    %v478 = vld [vmem:[#allocation4 + $0x28] sm:$0xff]
    %v479 = vld [vmem:[#allocation4 + $0x30] sm:$0xff]
    %v480 = vld [vmem:[#allocation4 + $0x38] sm:$0xff]
    %v481 = vld [vmem:[#allocation4 + $0x40] sm:$0xff]
    %v482 = vld [vmem:[#allocation4 + $0x48] sm:$0xff]
    %v483 = vld [vmem:[#allocation4 + $0x50] sm:$0xff]
    %v484 = vld [vmem:[#allocation4 + $0x58] sm:$0xff]
    %v485 = vld [vmem:[#allocation4 + $0x60] sm:$0xff]
    %v486 = vld [vmem:[#allocation4 + $0x68] sm:$0xff]
    %v487 = vld [vmem:[#allocation4 + $0x70] sm:$0xff]
    %v488 = vld [vmem:[#allocation4 + $0x78] sm:$0xff]
    %v489 = vld [vmem:[#allocation4 + $0x80] sm:$0xff]
    %v490 = vld [vmem:[#allocation4 + $0x88] sm:$0xff]
    %v491 = vld [vmem:[#allocation4 + $0x90] sm:$0xff]
    %v492 = vld [vmem:[#allocation4 + $0x98] sm:$0xff]
    %s493 = scalar_lea.vmem [#allocation4], 6
    %v494 = vld [vmem:[%s493] ss:$8 sm:$0x3]
    %v496 = vlaneseq
    %v497 = vshrl.u32 %v496, 7
    %v498 = vsub.s32 0, %v497
    %v499 = vrot.slane %v494, %v498
    %v500 = vlaneseq
    %v501 = vshrl.u32 %v500, 7
    %v502 = vsub.s32 1, %v501
    %v503 = vrot.slane %v494, %v502
    %v507 = vsel %vm55, %v475, 0
    %v510 = vsel %vm55, %v476, 0
    %512 = vmatprep.subr.mxu0 %v478
    %513 = vmatpush1.msra.mxu0 %v477
    %514 = vmatprep.subr.mxu0 %v480
    %515 = vmatpush1.msra.mxu0 %v479
    %516 = vmatprep.subr.mxu0 %v482
    %517 = vmatpush1.msra.mxu0 %v481
    %518 = vmatprep.subr.mxu0 %v484
    %519 = vmatpush1.msra.mxu0 %v483
    %520 = vmatprep.subr.mxu0 %v486
    %521 = vmatpush1.msra.mxu0 %v485
    %522 = vmatprep.subr.mxu0 %v488
    %523 = vmatpush1.msra.mxu0 %v487
    %524 = vmatprep.subr.mxu0 %v490
    %525 = vmatpush1.msra.mxu0 %v489
    %526 = vmatprep.subr.mxu0 %v492
    %527 = vmatpush1.msra.mxu0 %v491
    %528 = vmatprep.subr.mxu0 0.0
    %529 = vmatpush1.msra.mxu0 0.0
    %530 = vmatprep.subr.mxu0 0.0
    %531 = vmatpush1.msra.mxu0 0.0
    %532 = vmatprep.subr.mxu0 0.0
    %533 = vmatpush1.msra.mxu0 0.0
    %534 = vmatprep.subr.mxu0 0.0
    %535 = vmatpush1.msra.mxu0 0.0
    %536 = vmatprep.subr.mxu0 0.0
    %537 = vmatpush1.msra.mxu0 0.0
    %538 = vmatprep.subr.mxu0 0.0
    %539 = vmatpush1.msra.mxu0 0.0
    %540 = vmatprep.subr.mxu0 0.0
    %541 = vmatpush1.msra.mxu0 0.0
    %542 = vmatprep.subr.mxu0 0.0
    %543 = vmatpush1.msra.mxu0 0.0
    %544 = vmatprep.subr.mxu0 0.0
    %545 = vmatpush1.msra.mxu0 0.0
    %546 = vmatprep.subr.mxu0 0.0
    %547 = vmatpush1.msra.mxu0 0.0
    %548 = vmatprep.subr.mxu0 0.0
    %549 = vmatpush1.msra.mxu0 0.0
    %550 = vmatprep.subr.mxu0 0.0
    %551 = vmatpush1.msra.mxu0 0.0
    %552 = vmatprep.subr.mxu0 0.0
    %553 = vmatpush1.msra.mxu0 0.0
    %554 = vmatprep.subr.mxu0 0.0
    %555 = vmatpush1.msra.mxu0 0.0
    %556 = vmatprep.subr.mxu0 0.0
    %557 = vmatpush1.msra.mxu0 0.0
    %558 = vmatprep.subr.mxu0 0.0
    %559 = vmatpush1.msra.mxu0 0.0
    %560 = vmatprep.subr.mxu0 0.0
    %561 = vmatpush1.msra.mxu0 0.0
    %562 = vmatprep.subr.mxu0 0.0
    %563 = vmatpush1.msra.mxu0 0.0
    %564 = vmatprep.subr.mxu0 0.0
    %565 = vmatpush1.msra.mxu0 0.0
    %566 = vmatprep.subr.mxu0 0.0
    %567 = vmatpush1.msra.mxu0 0.0
    %568 = vmatprep.subr.mxu0 0.0
    %569 = vmatpush1.msra.mxu0 0.0
    %570 = vmatprep.subr.mxu0 0.0
    %571 = vmatpush1.msra.mxu0 0.0
    %572 = vmatprep.subr.mxu0 0.0
    %573 = vmatpush1.msra.mxu0 0.0
    %574 = vmatprep.subr.mxu0 0.0
    %575 = vmatpush1.msra.mxu0 0.0
    %576 = vmatprep.mubr.f32.mxu0 0.0
    %577 = vmatmul.mubr.f32.gmra.mrb[0].mxu0 %v507
    %v578 = vpop.f32.mrb[0].mxu0
    %v579 = vadd.f32 %v499, %v578
    %v580 = vpop.f32.mrb[0].mxu0
    %v581 = vadd.f32 %v503, %v580
    %582 = vmatprep.mubr.f32.mxu0 0.0
    %583 = vmatmul.mubr.f32.gmra.mrb[0].mxu0 %v510
    %v584 = vpop.f32.mrb[0].mxu0
    %v585 = vadd.f32 %v499, %v584
    %v586 = vpop.f32.mrb[0].mxu0
    %v587 = vadd.f32 %v503, %v586
    %588 = vdwg.mxu0
    %v589 = vld [vmem:[#allocation4 + $0xa0] sm:$0xff]
    %v590 = vld [vmem:[#allocation4 + $0xb0] sm:$0xff]
    %v591 = vld [vmem:[#allocation4 + $0xc0] sm:$0xff]
    %v592 = vld [vmem:[#allocation4 + $0xd0] sm:$0xff]
    %v593 = vld [vmem:[#allocation4 + $0xe0] sm:$0xff]
    %v594 = vld [vmem:[#allocation4 + $0xf0] sm:$0xff]
    %v595 = vld [vmem:[#allocation4 + $0x100] sm:$0xff]
    %v596 = vld [vmem:[#allocation4 + $0x110] sm:$0xff]
    %v597 = vld [vmem:[#allocation4 + $0x7] ss:$0 sm:$0xff]
    %606 = vrot.lane.b32.xlu0 %v429, 64
    %v607 = vpop.permute.xlu0 %606
    %608 = vrot.lane.b32.xlu0 %v430, 64
    %v609 = vpop.permute.xlu0 %608
    %610 = vrot.lane.b32.xlu0 %v431, 64
    %v611 = vpop.permute.xlu0 %610
    %612 = vrot.lane.b32.xlu0 %v432, 64
    %v613 = vpop.permute.xlu0 %612
    %614 = vrot.lane.b32.xlu0 %v433, 64
    %v615 = vpop.permute.xlu0 %614
    %616 = vrot.lane.b32.xlu0 %v434, 64
    %v617 = vpop.permute.xlu0 %616
    %618 = vrot.lane.b32.xlu0 %v435, 64
    %v619 = vpop.permute.xlu0 %618
    %620 = vrot.lane.b32.xlu0 %v436, 64
    %v621 = vpop.permute.xlu0 %620
    %v630 = vmul.f32 %v579, %v607
    %v631 = vmul.f32 %v585, %v609
    %v632 = vmul.f32 %v579, %v611
    %v633 = vmul.f32 %v585, %v613
    %v634 = vmul.f32 %v579, %v615
    %v635 = vmul.f32 %v585, %v617
    %v636 = vmul.f32 %v579, %v619
    %v637 = vmul.f32 %v585, %v621
    %v638 = vmul.f32 %v581, %v429
    %v639 = vmul.f32 %v587, %v430
    %v640 = vmul.f32 %v581, %v431
    %v641 = vmul.f32 %v587, %v432
    %v642 = vmul.f32 %v581, %v433
    %v643 = vmul.f32 %v587, %v434
    %v644 = vmul.f32 %v581, %v435
    %v645 = vmul.f32 %v587, %v436
    %654 = vrot.lane.b32.xlu0 %v630, 64
    %v655 = vpop.permute.xlu0 %654
    %656 = vrot.lane.b32.xlu0 %v631, 64
    %v657 = vpop.permute.xlu0 %656
    %658 = vrot.lane.b32.xlu0 %v632, 64
    %v659 = vpop.permute.xlu0 %658
    %660 = vrot.lane.b32.xlu0 %v633, 64
    %v661 = vpop.permute.xlu0 %660
    %662 = vrot.lane.b32.xlu0 %v634, 64
    %v663 = vpop.permute.xlu0 %662
    %664 = vrot.lane.b32.xlu0 %v635, 64
    %v665 = vpop.permute.xlu0 %664
    %666 = vrot.lane.b32.xlu0 %v636, 64
    %v667 = vpop.permute.xlu0 %666
    %668 = vrot.lane.b32.xlu0 %v637, 64
    %v669 = vpop.permute.xlu0 %668
    %v671 = vsel %vm55, %v579, 0
    %v674 = vsel %vm55, %v585, 0
    %v676 = vsel %vm55, %v655, 0
    %v678 = vsel %vm55, %v657, 0
    %v680 = vsel %vm55, %v659, 0
    %v682 = vsel %vm55, %v661, 0
    %v684 = vsel %vm55, %v663, 0
    %v686 = vsel %vm55, %v665, 0
    %v688 = vsel %vm55, %v667, 0
    %v690 = vsel %vm55, %v669, 0
    %692 = vmatprep.subr.mxu0 0.0
    %693 = vmatpush1.xpose.msra.mxu0 %v676
    %694 = vmatprep.subr.mxu0 0.0
    %695 = vmatpush1.xpose.msra.mxu0 %v678
    %696 = vmatprep.subr.mxu0 0.0
    %697 = vmatpush1.xpose.msra.mxu0 %v680
    %698 = vmatprep.subr.mxu0 0.0
    %699 = vmatpush1.xpose.msra.mxu0 %v682
    %700 = vmatprep.subr.mxu0 0.0
    %701 = vmatpush1.xpose.msra.mxu0 %v684
    %702 = vmatprep.subr.mxu0 0.0
    %703 = vmatpush1.xpose.msra.mxu0 %v686
    %704 = vmatprep.subr.mxu0 0.0
    %705 = vmatpush1.xpose.msra.mxu0 %v688
    %706 = vmatprep.subr.mxu0 0.0
    %707 = vmatpush1.xpose.msra.mxu0 %v690
    %708 = vmatprep.subr.mxu0 0.0
    %709 = vmatpush1.xpose.msra.mxu0 0.0
    %710 = vmatprep.subr.mxu0 0.0
    %711 = vmatpush1.xpose.msra.mxu0 0.0
    %712 = vmatprep.subr.mxu0 0.0
    %713 = vmatpush1.xpose.msra.mxu0 0.0
    %714 = vmatprep.subr.mxu0 0.0
    %715 = vmatpush1.xpose.msra.mxu0 0.0
    %716 = vmatprep.subr.mxu0 0.0
    %717 = vmatpush1.xpose.msra.mxu0 0.0
    %718 = vmatprep.subr.mxu0 0.0
    %719 = vmatpush1.xpose.msra.mxu0 0.0
    %720 = vmatprep.subr.mxu0 0.0
    %721 = vmatpush1.xpose.msra.mxu0 0.0
    %722 = vmatprep.subr.mxu0 0.0
    %723 = vmatpush1.xpose.msra.mxu0 0.0
    %724 = vmatprep.subr.mxu0 0.0
    %725 = vmatpush1.xpose.msra.mxu0 0.0
    %726 = vmatprep.subr.mxu0 0.0
    %727 = vmatpush1.xpose.msra.mxu0 0.0
    %728 = vmatprep.subr.mxu0 0.0
    %729 = vmatpush1.xpose.msra.mxu0 0.0
    %730 = vmatprep.subr.mxu0 0.0
    %731 = vmatpush1.xpose.msra.mxu0 0.0
    %732 = vmatprep.subr.mxu0 0.0
    %733 = vmatpush1.xpose.msra.mxu0 0.0
    %734 = vmatprep.subr.mxu0 0.0
    %735 = vmatpush1.xpose.msra.mxu0 0.0
    %736 = vmatprep.subr.mxu0 0.0
    %737 = vmatpush1.xpose.msra.mxu0 0.0
    %738 = vmatprep.subr.mxu0 0.0
    %739 = vmatpush1.xpose.msra.mxu0 0.0
    %740 = vmatprep.subr.mxu0 0.0
    %741 = vmatpush1.xpose.msra.mxu0 0.0
    %742 = vmatprep.subr.mxu0 0.0
    %743 = vmatpush1.xpose.msra.mxu0 0.0
    %744 = vmatprep.subr.mxu0 0.0
    %745 = vmatpush1.xpose.msra.mxu0 0.0
    %746 = vmatprep.subr.mxu0 0.0
    %747 = vmatpush1.xpose.msra.mxu0 0.0
    %748 = vmatprep.subr.mxu0 0.0
    %749 = vmatpush1.xpose.msra.mxu0 0.0
    %750 = vmatprep.subr.mxu0 0.0
    %751 = vmatpush1.xpose.msra.mxu0 0.0
    %752 = vmatprep.subr.mxu0 0.0
    %753 = vmatpush1.xpose.msra.mxu0 0.0
    %754 = vmatprep.subr.mxu0 0.0
    %755 = vmatpush1.xpose.msra.mxu0 0.0
    %756 = vmatprep.mubr.f32.mxu0 0.0
    %757 = vmatmul.mubr.f32.gmra.mrb[0].mxu0 %v671
    %v758 = vpop.f32.mrb[0].mxu0
    %v759 = vadd.f32 %v413, %v758
    %v760 = vpop.f32.mrb[0].mxu0
    %761 = vmatprep.mubr.f32.mxu0 0.0
    %762 = vmatmul.mubr.f32.gmra.mrb[0].mxu0 %v674
    %v763 = vpop.f32.mrb[0].mxu0
    %v764 = vadd.f32 %v414, %v763
    %v765 = vpop.f32.mrb[0].mxu0
    %766 = vmatprep.mubr.f32.mxu0 0.0
    %767 = vmatmul.mubr.f32.gmra.mrb[0].mxu0 %v671
    %v768 = vpop.f32.mrb[0].mxu0
    %v769 = vadd.f32 %v415, %v768
    %v770 = vpop.f32.mrb[0].mxu0
    %771 = vmatprep.mubr.f32.mxu0 0.0
    %772 = vmatmul.mubr.f32.gmra.mrb[0].mxu0 %v674
    %v773 = vpop.f32.mrb[0].mxu0
    %v774 = vadd.f32 %v416, %v773
    %v775 = vpop.f32.mrb[0].mxu0
    %776 = vmatprep.mubr.f32.mxu0 0.0
    %777 = vmatmul.mubr.f32.gmra.mrb[0].mxu0 %v671
    %v778 = vpop.f32.mrb[0].mxu0
    %v779 = vadd.f32 %v417, %v778
    %v780 = vpop.f32.mrb[0].mxu0
    %781 = vmatprep.mubr.f32.mxu0 0.0
    %782 = vmatmul.mubr.f32.gmra.mrb[0].mxu0 %v674
    %v783 = vpop.f32.mrb[0].mxu0
    %v784 = vadd.f32 %v418, %v783
    %v785 = vpop.f32.mrb[0].mxu0
    %786 = vmatprep.mubr.f32.mxu0 0.0
    %787 = vmatmul.mubr.f32.gmra.mrb[0].mxu0 %v671
    %v788 = vpop.f32.mrb[0].mxu0
    %v789 = vadd.f32 %v419, %v788
    %v790 = vpop.f32.mrb[0].mxu0
    %791 = vmatprep.mubr.f32.mxu0 0.0
    %792 = vmatmul.mubr.f32.gmra.mrb[0].mxu0 %v674
    %v793 = vpop.f32.mrb[0].mxu0
    %v794 = vadd.f32 %v420, %v793
    %v795 = vpop.f32.mrb[0].mxu0
    %796 = vdwg.mxu0
    %v797 = vsel %vm55, %v759, -inf
    %798 = vmax.xlane.f32.xlu0 %v797
    %v799 = vpop.xlane.xlu0 %798
    %v800 = vsel %vm55, %v764, -inf
    %801 = vmax.xlane.f32.xlu0 %v800
    %v802 = vpop.xlane.xlu0 %801
    %v803 = vsel %vm55, %v769, -inf
    %804 = vmax.xlane.f32.xlu0 %v803
    %v805 = vpop.xlane.xlu0 %804
    %v806 = vsel %vm55, %v774, -inf
    %807 = vmax.xlane.f32.xlu0 %v806
    %v808 = vpop.xlane.xlu0 %807
    %v809 = vsel %vm55, %v779, -inf
    %810 = vmax.xlane.f32.xlu0 %v809
    %v811 = vpop.xlane.xlu0 %810
    %v812 = vsel %vm55, %v784, -inf
    %813 = vmax.xlane.f32.xlu0 %v812
    %v814 = vpop.xlane.xlu0 %813
    %v815 = vsel %vm55, %v789, -inf
    %816 = vmax.xlane.f32.xlu0 %v815
    %v817 = vpop.xlane.xlu0 %816
    %v818 = vsel %vm55, %v794, -inf
    %819 = vmax.xlane.f32.xlu0 %v818
    %v820 = vpop.xlane.xlu0 %819
    %v821 = vsub.f32 %v759, %v799
    %v822 = vsub.f32 %v764, %v802
    %v823 = vsub.f32 %v769, %v805
    %v824 = vsub.f32 %v774, %v808
    %v825 = vsub.f32 %v779, %v811
    %v826 = vsub.f32 %v784, %v814
    %v827 = vsub.f32 %v789, %v817
    %v828 = vsub.f32 %v794, %v820
    %v829 = vmul.f32 %v821, 1.442695
    %v830 = vpow.pop %v829
    %v831 = vmul.f32 %v822, 1.442695
    %v832 = vpow.pop %v831
    %v833 = vmul.f32 %v823, 1.442695
    %v834 = vpow.pop %v833
    %v835 = vmul.f32 %v824, 1.442695
    %v836 = vpow.pop %v835
    %v837 = vmul.f32 %v825, 1.442695
    %v838 = vpow.pop %v837
    %v839 = vmul.f32 %v826, 1.442695
    %v840 = vpow.pop %v839
    %v841 = vmul.f32 %v827, 1.442695
    %v842 = vpow.pop %v841
    %v843 = vmul.f32 %v828, 1.442695
    %v844 = vpow.pop %v843
    %v845 = vsel %vm55, %v830, 0.0
    %846 = vadd.xlane.f32.xlu0 %v845
    %v847 = vpop.xlane.xlu0 %846
    %v848 = vsel %vm55, %v832, 0.0
    %849 = vadd.xlane.f32.xlu0 %v848
    %v850 = vpop.xlane.xlu0 %849
    %v851 = vsel %vm55, %v834, 0.0
    %852 = vadd.xlane.f32.xlu0 %v851
    %v853 = vpop.xlane.xlu0 %852
    %v854 = vsel %vm55, %v836, 0.0
    %855 = vadd.xlane.f32.xlu0 %v854
    %v856 = vpop.xlane.xlu0 %855
    %v857 = vsel %vm55, %v838, 0.0
    %858 = vadd.xlane.f32.xlu0 %v857
    %v859 = vpop.xlane.xlu0 %858
    %v860 = vsel %vm55, %v840, 0.0
    %861 = vadd.xlane.f32.xlu0 %v860
    %v862 = vpop.xlane.xlu0 %861
    %v863 = vsel %vm55, %v842, 0.0
    %864 = vadd.xlane.f32.xlu0 %v863
    %v865 = vpop.xlane.xlu0 %864
    %v866 = vsel %vm55, %v844, 0.0
    %867 = vadd.xlane.f32.xlu0 %v866
    %v868 = vpop.xlane.xlu0 %867
    %v869 = vrcp.pop %v847
    %v870 = vrcp.pop %v850
    %v871 = vrcp.pop %v853
    %v872 = vrcp.pop %v856
    %v873 = vrcp.pop %v859
    %v874 = vrcp.pop %v862
    %v875 = vrcp.pop %v865
    %v876 = vrcp.pop %v868
    %v877 = vmul.f32 %v830, %v869
    %v878 = vmul.f32 %v832, %v870
    %v879 = vmul.f32 %v834, %v871
    %v880 = vmul.f32 %v836, %v872
    %v881 = vmul.f32 %v838, %v873
    %v882 = vmul.f32 %v840, %v874
    %v883 = vmul.f32 %v842, %v875
    %v884 = vmul.f32 %v844, %v876
    %v886 = vsel %vm55, %v877, 0
    %v889 = vsel %vm55, %v878, 0
    %v892 = vsel %vm55, %v879, 0
    %v895 = vsel %vm55, %v880, 0
    %v898 = vsel %vm55, %v881, 0
    %v901 = vsel %vm55, %v882, 0
    %v904 = vsel %vm55, %v883, 0
    %v907 = vsel %vm55, %v884, 0
    %909 = vmatprep.subr.mxu0 0.0
    %910 = vmatpush1.msra.mxu0 %v638
    %911 = vmatprep.subr.mxu0 0.0
    %912 = vmatpush1.msra.mxu0 %v639
    %913 = vmatprep.subr.mxu0 0.0
    %914 = vmatpush1.msra.mxu0 %v640
    %915 = vmatprep.subr.mxu0 0.0
    %916 = vmatpush1.msra.mxu0 %v641
    %917 = vmatprep.subr.mxu0 0.0
    %918 = vmatpush1.msra.mxu0 %v642
    %919 = vmatprep.subr.mxu0 0.0
    %920 = vmatpush1.msra.mxu0 %v643
    %921 = vmatprep.subr.mxu0 0.0
    %922 = vmatpush1.msra.mxu0 %v644
    %923 = vmatprep.subr.mxu0 0.0
    %924 = vmatpush1.msra.mxu0 %v645
    %925 = vmatprep.subr.mxu0 0.0
    %926 = vmatpush1.msra.mxu0 0.0
    %927 = vmatprep.subr.mxu0 0.0
    %928 = vmatpush1.msra.mxu0 0.0
    %929 = vmatprep.subr.mxu0 0.0
    %930 = vmatpush1.msra.mxu0 0.0
    %931 = vmatprep.subr.mxu0 0.0
    %932 = vmatpush1.msra.mxu0 0.0
    %933 = vmatprep.subr.mxu0 0.0
    %934 = vmatpush1.msra.mxu0 0.0
    %935 = vmatprep.subr.mxu0 0.0
    %936 = vmatpush1.msra.mxu0 0.0
    %937 = vmatprep.subr.mxu0 0.0
    %938 = vmatpush1.msra.mxu0 0.0
    %939 = vmatprep.subr.mxu0 0.0
    %940 = vmatpush1.msra.mxu0 0.0
    %941 = vmatprep.subr.mxu0 0.0
    %942 = vmatpush1.msra.mxu0 0.0
    %943 = vmatprep.subr.mxu0 0.0
    %944 = vmatpush1.msra.mxu0 0.0
    %945 = vmatprep.subr.mxu0 0.0
    %946 = vmatpush1.msra.mxu0 0.0
    %947 = vmatprep.subr.mxu0 0.0
    %948 = vmatpush1.msra.mxu0 0.0
    %949 = vmatprep.subr.mxu0 0.0
    %950 = vmatpush1.msra.mxu0 0.0
    %951 = vmatprep.subr.mxu0 0.0
    %952 = vmatpush1.msra.mxu0 0.0
    %953 = vmatprep.subr.mxu0 0.0
    %954 = vmatpush1.msra.mxu0 0.0
    %955 = vmatprep.subr.mxu0 0.0
    %956 = vmatpush1.msra.mxu0 0.0
    %957 = vmatprep.subr.mxu0 0.0
    %958 = vmatpush1.msra.mxu0 0.0
    %959 = vmatprep.subr.mxu0 0.0
    %960 = vmatpush1.msra.mxu0 0.0
    %961 = vmatprep.subr.mxu0 0.0
    %962 = vmatpush1.msra.mxu0 0.0
    %963 = vmatprep.subr.mxu0 0.0
    %964 = vmatpush1.msra.mxu0 0.0
    %965 = vmatprep.subr.mxu0 0.0
    %966 = vmatpush1.msra.mxu0 0.0
    %967 = vmatprep.subr.mxu0 0.0
    %968 = vmatpush1.msra.mxu0 0.0
    %969 = vmatprep.subr.mxu0 0.0
    %970 = vmatpush1.msra.mxu0 0.0
    %971 = vmatprep.subr.mxu0 0.0
    %972 = vmatpush1.msra.mxu0 0.0
    %973 = vmatprep.mubr.f32.mxu0 0.0
    %974 = vmatmul.mubr.f32.gmra.mrb[0].mxu0 %v886
    %v975 = vpop.f32.mrb[0].mxu0
    %v976 = vadd.f32 0.0, %v975
    %v977 = vpop.f32.mrb[0].mxu0
    %978 = vmatprep.mubr.f32.mxu0 0.0
    %979 = vmatmul.mubr.f32.gmra.mrb[0].mxu0 %v889
    %v980 = vpop.f32.mrb[0].mxu0
    %v981 = vadd.f32 0.0, %v980
    %v982 = vpop.f32.mrb[0].mxu0
    %983 = vmatprep.mubr.f32.mxu0 0.0
    %984 = vmatmul.mubr.f32.gmra.mrb[0].mxu0 %v892
    %v985 = vpop.f32.mrb[0].mxu0
    %v986 = vadd.f32 0.0, %v985
    %v987 = vpop.f32.mrb[0].mxu0
    %988 = vmatprep.mubr.f32.mxu0 0.0
    %989 = vmatmul.mubr.f32.gmra.mrb[0].mxu0 %v895
    %v990 = vpop.f32.mrb[0].mxu0
    %v991 = vadd.f32 0.0, %v990
    %v992 = vpop.f32.mrb[0].mxu0
    %993 = vmatprep.mubr.f32.mxu0 0.0
    %994 = vmatmul.mubr.f32.gmra.mrb[0].mxu0 %v898
    %v995 = vpop.f32.mrb[0].mxu0
    %v996 = vadd.f32 0.0, %v995
    %v997 = vpop.f32.mrb[0].mxu0
    %998 = vmatprep.mubr.f32.mxu0 0.0
    %999 = vmatmul.mubr.f32.gmra.mrb[0].mxu0 %v901
    %v1000 = vpop.f32.mrb[0].mxu0
    %v1001 = vadd.f32 0.0, %v1000
    %v1002 = vpop.f32.mrb[0].mxu0
    %1003 = vmatprep.mubr.f32.mxu0 0.0
    %1004 = vmatmul.mubr.f32.gmra.mrb[0].mxu0 %v904
    %v1005 = vpop.f32.mrb[0].mxu0
    %v1006 = vadd.f32 0.0, %v1005
    %v1007 = vpop.f32.mrb[0].mxu0
    %1008 = vmatprep.mubr.f32.mxu0 0.0
    %1009 = vmatmul.mubr.f32.gmra.mrb[0].mxu0 %v907
    %v1010 = vpop.f32.mrb[0].mxu0
    %v1011 = vadd.f32 0.0, %v1010
    %v1012 = vpop.f32.mrb[0].mxu0
    %1013 = vdwg.mxu0
    %v1014 = vadd.f32 %v976, %v986
    %v1015 = vadd.f32 %v981, %v991
    %v1016 = vadd.f32 %v1014, %v996
    %v1017 = vadd.f32 %v1015, %v1001
    %v1018 = vadd.f32 %v1016, %v1006
    %v1019 = vadd.f32 %v1017, %v1011
    %v1021 = vsel %vm55, %v1018, 0
    %v1024 = vsel %vm55, %v1019, 0
    %1026 = vmatprep.subr.mxu0 0.0
    %1027 = vmatpush1.msra.mxu0 %v589
    %1028 = vmatprep.subr.mxu0 0.0
    %1029 = vmatpush1.msra.mxu0 %v590
    %1030 = vmatprep.subr.mxu0 0.0
    %1031 = vmatpush1.msra.mxu0 %v591
    %1032 = vmatprep.subr.mxu0 0.0
    %1033 = vmatpush1.msra.mxu0 %v592
    %1034 = vmatprep.subr.mxu0 0.0
    %1035 = vmatpush1.msra.mxu0 %v593
    %1036 = vmatprep.subr.mxu0 0.0
    %1037 = vmatpush1.msra.mxu0 %v594
    %1038 = vmatprep.subr.mxu0 0.0
    %1039 = vmatpush1.msra.mxu0 %v595
    %1040 = vmatprep.subr.mxu0 0.0
    %1041 = vmatpush1.msra.mxu0 %v596
    %1042 = vmatprep.subr.mxu0 0.0
    %1043 = vmatpush1.msra.mxu0 0.0
    %1044 = vmatprep.subr.mxu0 0.0
    %1045 = vmatpush1.msra.mxu0 0.0
    %1046 = vmatprep.subr.mxu0 0.0
    %1047 = vmatpush1.msra.mxu0 0.0
    %1048 = vmatprep.subr.mxu0 0.0
    %1049 = vmatpush1.msra.mxu0 0.0
    %1050 = vmatprep.subr.mxu0 0.0
    %1051 = vmatpush1.msra.mxu0 0.0
    %1052 = vmatprep.subr.mxu0 0.0
    %1053 = vmatpush1.msra.mxu0 0.0
    %1054 = vmatprep.subr.mxu0 0.0
    %1055 = vmatpush1.msra.mxu0 0.0
    %1056 = vmatprep.subr.mxu0 0.0
    %1057 = vmatpush1.msra.mxu0 0.0
    %1058 = vmatprep.subr.mxu0 0.0
    %1059 = vmatpush1.msra.mxu0 0.0
    %1060 = vmatprep.subr.mxu0 0.0
    %1061 = vmatpush1.msra.mxu0 0.0
    %1062 = vmatprep.subr.mxu0 0.0
    %1063 = vmatpush1.msra.mxu0 0.0
    %1064 = vmatprep.subr.mxu0 0.0
    %1065 = vmatpush1.msra.mxu0 0.0
    %1066 = vmatprep.subr.mxu0 0.0
    %1067 = vmatpush1.msra.mxu0 0.0
    %1068 = vmatprep.subr.mxu0 0.0
    %1069 = vmatpush1.msra.mxu0 0.0
    %1070 = vmatprep.subr.mxu0 0.0
    %1071 = vmatpush1.msra.mxu0 0.0
    %1072 = vmatprep.subr.mxu0 0.0
    %1073 = vmatpush1.msra.mxu0 0.0
    %1074 = vmatprep.subr.mxu0 0.0
    %1075 = vmatpush1.msra.mxu0 0.0
    %1076 = vmatprep.subr.mxu0 0.0
    %1077 = vmatpush1.msra.mxu0 0.0
    %1078 = vmatprep.subr.mxu0 0.0
    %1079 = vmatpush1.msra.mxu0 0.0
    %1080 = vmatprep.subr.mxu0 0.0
    %1081 = vmatpush1.msra.mxu0 0.0
    %1082 = vmatprep.subr.mxu0 0.0
    %1083 = vmatpush1.msra.mxu0 0.0
    %1084 = vmatprep.subr.mxu0 0.0
    %1085 = vmatpush1.msra.mxu0 0.0
    %1086 = vmatprep.subr.mxu0 0.0
    %1087 = vmatpush1.msra.mxu0 0.0
    %1088 = vmatprep.subr.mxu0 0.0
    %1089 = vmatpush1.msra.mxu0 0.0
    %1090 = vmatprep.mubr.f32.mxu0 0.0
    %1091 = vmatmul.mubr.f32.gmra.mrb[0].mxu0 %v1021
    %v1092 = vpop.f32.mrb[0].mxu0
    %v1093 = vadd.f32 %v597, %v1092
    %v1094 = vpop.f32.mrb[0].mxu0
    %1095 = vmatprep.mubr.f32.mxu0 0.0
    %1096 = vmatmul.mubr.f32.gmra.mrb[0].mxu0 %v1024
    %v1097 = vpop.f32.mrb[0].mxu0
    %v1098 = vadd.f32 %v597, %v1097
    %v1099 = vpop.f32.mrb[0].mxu0
    %1100 = vdwg.mxu0
    %v1101 = vadd.f32 %v442, %v1093
    %v1102 = vadd.f32 %v443, %v1098
    %v1103 = vld [vmem:[#allocation4 + $0x2] ss:$0 sm:$0xff]
    %v1104 = vld [vmem:[#allocation4 + $0x3] ss:$0 sm:$0xff]
    %v1105 = vsel %vm55, %v1101, 0.0
    %1106 = vadd.xlane.f32.xlu0 %v1105
    %v1107 = vpop.xlane.xlu0 %1106
    %v1108 = vsel %vm55, %v1102, 0.0
    %1109 = vadd.xlane.f32.xlu0 %v1108
    %v1110 = vpop.xlane.xlu0 %1109
    %v1111 = vmul.f32 %v1107, %v452
    %v1112 = vmul.f32 %v1110, %v452
    %v1113 = vsub.f32 %v1101, %v1111
    %v1114 = vsub.f32 %v1102, %v1112
    %v1115 = vmul.f32 %v1113, %v1113
    %v1116 = vmul.f32 %v1114, %v1114
    %v1117 = vsel %vm55, %v1115, 0.0
    %1118 = vadd.xlane.f32.xlu0 %v1117
    %v1119 = vpop.xlane.xlu0 %1118
    %v1120 = vsel %vm55, %v1116, 0.0
    %1121 = vadd.xlane.f32.xlu0 %v1120
    %v1122 = vpop.xlane.xlu0 %1121
    %v1123 = vmul.f32 %v1119, %v452
    %v1124 = vmul.f32 %v1122, %v452
    %v1125 = vadd.f32 %v1123, 1e-05
    %v1126 = vadd.f32 %v1124, 1e-05
    %v1127 = vrsqrt.pop %v1125
    %v1128 = vrsqrt.pop %v1126
    %v1129 = vmul.f32 %v1113, %v1127
    %v1130 = vmul.f32 %v1114, %v1128
    %v1131 = vmul.f32 %v1129, %v1103
    %v1132 = vmul.f32 %v1130, %v1103
    %v1133 = vadd.f32 %v1131, %v1104
    %v1134 = vadd.f32 %v1132, %v1104
    %v1135 = vld [vmem:[#allocation4 + $0x120] sm:$0xff]
    %v1136 = vld [vmem:[#allocation4 + $0x130] sm:$0xff]
    %v1137 = vld [vmem:[#allocation4 + $0x140] sm:$0xff]
    %v1138 = vld [vmem:[#allocation4 + $0x150] sm:$0xff]
    %v1139 = vld [vmem:[#allocation4 + $0x160] sm:$0xff]
    %v1140 = vld [vmem:[#allocation4 + $0x170] sm:$0xff]
    %v1141 = vld [vmem:[#allocation4 + $0x180] sm:$0xff]
    %v1142 = vld [vmem:[#allocation4 + $0x190] sm:$0xff]
    %v1143 = vld [vmem:[#allocation4 + $0x10] ss:$0 sm:$0xff]
    %v1145 = vsel %vm55, %v1133, 0
    %v1148 = vsel %vm55, %v1134, 0
    %1150 = vmatprep.subr.mxu0 0.0
    %1151 = vmatpush1.msra.mxu0 %v1135
    %1152 = vmatprep.subr.mxu0 0.0
    %1153 = vmatpush1.msra.mxu0 %v1136
    %1154 = vmatprep.subr.mxu0 0.0
    %1155 = vmatpush1.msra.mxu0 %v1137
    %1156 = vmatprep.subr.mxu0 0.0
    %1157 = vmatpush1.msra.mxu0 %v1138
    %1158 = vmatprep.subr.mxu0 0.0
    %1159 = vmatpush1.msra.mxu0 %v1139
    %1160 = vmatprep.subr.mxu0 0.0
    %1161 = vmatpush1.msra.mxu0 %v1140
    %1162 = vmatprep.subr.mxu0 0.0
    %1163 = vmatpush1.msra.mxu0 %v1141
    %1164 = vmatprep.subr.mxu0 0.0
    %1165 = vmatpush1.msra.mxu0 %v1142
    %1166 = vmatprep.subr.mxu0 0.0
    %1167 = vmatpush1.msra.mxu0 0.0
    %1168 = vmatprep.subr.mxu0 0.0
    %1169 = vmatpush1.msra.mxu0 0.0
    %1170 = vmatprep.subr.mxu0 0.0
    %1171 = vmatpush1.msra.mxu0 0.0
    %1172 = vmatprep.subr.mxu0 0.0
    %1173 = vmatpush1.msra.mxu0 0.0
    %1174 = vmatprep.subr.mxu0 0.0
    %1175 = vmatpush1.msra.mxu0 0.0
    %1176 = vmatprep.subr.mxu0 0.0
    %1177 = vmatpush1.msra.mxu0 0.0
    %1178 = vmatprep.subr.mxu0 0.0
    %1179 = vmatpush1.msra.mxu0 0.0
    %1180 = vmatprep.subr.mxu0 0.0
    %1181 = vmatpush1.msra.mxu0 0.0
    %1182 = vmatprep.subr.mxu0 0.0
    %1183 = vmatpush1.msra.mxu0 0.0
    %1184 = vmatprep.subr.mxu0 0.0
    %1185 = vmatpush1.msra.mxu0 0.0
    %1186 = vmatprep.subr.mxu0 0.0
    %1187 = vmatpush1.msra.mxu0 0.0
    %1188 = vmatprep.subr.mxu0 0.0
    %1189 = vmatpush1.msra.mxu0 0.0
    %1190 = vmatprep.subr.mxu0 0.0
    %1191 = vmatpush1.msra.mxu0 0.0
    %1192 = vmatprep.subr.mxu0 0.0
    %1193 = vmatpush1.msra.mxu0 0.0
    %1194 = vmatprep.subr.mxu0 0.0
    %1195 = vmatpush1.msra.mxu0 0.0
    %1196 = vmatprep.subr.mxu0 0.0
    %1197 = vmatpush1.msra.mxu0 0.0
    %1198 = vmatprep.subr.mxu0 0.0
    %1199 = vmatpush1.msra.mxu0 0.0
    %1200 = vmatprep.subr.mxu0 0.0
    %1201 = vmatpush1.msra.mxu0 0.0
    %1202 = vmatprep.subr.mxu0 0.0
    %1203 = vmatpush1.msra.mxu0 0.0
    %1204 = vmatprep.subr.mxu0 0.0
    %1205 = vmatpush1.msra.mxu0 0.0
    %1206 = vmatprep.subr.mxu0 0.0
    %1207 = vmatpush1.msra.mxu0 0.0
    %1208 = vmatprep.subr.mxu0 0.0
    %1209 = vmatpush1.msra.mxu0 0.0
    %1210 = vmatprep.subr.mxu0 0.0
    %1211 = vmatpush1.msra.mxu0 0.0
    %1212 = vmatprep.subr.mxu0 0.0
    %1213 = vmatpush1.msra.mxu0 0.0
    %1214 = vmatprep.mubr.f32.mxu0 0.0
    %1215 = vmatmul.mubr.f32.gmra.mrb[0].mxu0 %v1145
    %v1216 = vpop.f32.mrb[0].mxu0
    %v1217 = vadd.f32 %v1143, %v1216
    %v1218 = vpop.f32.mrb[0].mxu0
    %1219 = vmatprep.mubr.f32.mxu0 0.0
    %1220 = vmatmul.mubr.f32.gmra.mrb[0].mxu0 %v1148
    %v1221 = vpop.f32.mrb[0].mxu0
    %v1222 = vadd.f32 %v1143, %v1221
    %v1223 = vpop.f32.mrb[0].mxu0
    %1224 = vdwg.mxu0
    %v1225 = vld [vmem:[#allocation4 + $0x1a0] sm:$0xff]
    %v1226 = vld [vmem:[#allocation4 + $0x1b0] sm:$0xff]
    %v1227 = vld [vmem:[#allocation4 + $0x1c0] sm:$0xff]
    %v1228 = vld [vmem:[#allocation4 + $0x1d0] sm:$0xff]
    %v1229 = vld [vmem:[#allocation4 + $0x1e0] sm:$0xff]
    %v1230 = vld [vmem:[#allocation4 + $0x1f0] sm:$0xff]
    %v1231 = vld [vmem:[#allocation4 + $0x200] sm:$0xff]
    %v1232 = vld [vmem:[#allocation4 + $0x210] sm:$0xff]
    %v1233 = vld [vmem:[#allocation4 + $0x11] ss:$0 sm:$0xff]
    %v1235 = vsel %vm55, %v405, 0
    %v1238 = vsel %vm55, %v410, 0
    %1240 = vmatprep.subr.mxu0 0.0
    %1241 = vmatpush1.msra.mxu0 %v1225
    %1242 = vmatprep.subr.mxu0 0.0
    %1243 = vmatpush1.msra.mxu0 %v1226
    %1244 = vmatprep.subr.mxu0 0.0
    %1245 = vmatpush1.msra.mxu0 %v1227
    %1246 = vmatprep.subr.mxu0 0.0
    %1247 = vmatpush1.msra.mxu0 %v1228
    %1248 = vmatprep.subr.mxu0 0.0
    %1249 = vmatpush1.msra.mxu0 %v1229
    %1250 = vmatprep.subr.mxu0 0.0
    %1251 = vmatpush1.msra.mxu0 %v1230
    %1252 = vmatprep.subr.mxu0 0.0
    %1253 = vmatpush1.msra.mxu0 %v1231
    %1254 = vmatprep.subr.mxu0 0.0
    %1255 = vmatpush1.msra.mxu0 %v1232
    %1256 = vmatprep.subr.mxu0 0.0
    %1257 = vmatpush1.msra.mxu0 0.0
    %1258 = vmatprep.subr.mxu0 0.0
    %1259 = vmatpush1.msra.mxu0 0.0
    %1260 = vmatprep.subr.mxu0 0.0
    %1261 = vmatpush1.msra.mxu0 0.0
    %1262 = vmatprep.subr.mxu0 0.0
    %1263 = vmatpush1.msra.mxu0 0.0
    %1264 = vmatprep.subr.mxu0 0.0
    %1265 = vmatpush1.msra.mxu0 0.0
    %1266 = vmatprep.subr.mxu0 0.0
    %1267 = vmatpush1.msra.mxu0 0.0
    %1268 = vmatprep.subr.mxu0 0.0
    %1269 = vmatpush1.msra.mxu0 0.0
    %1270 = vmatprep.subr.mxu0 0.0
    %1271 = vmatpush1.msra.mxu0 0.0
    %1272 = vmatprep.subr.mxu0 0.0
    %1273 = vmatpush1.msra.mxu0 0.0
    %1274 = vmatprep.subr.mxu0 0.0
    %1275 = vmatpush1.msra.mxu0 0.0
    %1276 = vmatprep.subr.mxu0 0.0
    %1277 = vmatpush1.msra.mxu0 0.0
    %1278 = vmatprep.subr.mxu0 0.0
    %1279 = vmatpush1.msra.mxu0 0.0
    %1280 = vmatprep.subr.mxu0 0.0
    %1281 = vmatpush1.msra.mxu0 0.0
    %1282 = vmatprep.subr.mxu0 0.0
    %1283 = vmatpush1.msra.mxu0 0.0
    %1284 = vmatprep.subr.mxu0 0.0
    %1285 = vmatpush1.msra.mxu0 0.0
    %1286 = vmatprep.subr.mxu0 0.0
    %1287 = vmatpush1.msra.mxu0 0.0
    %1288 = vmatprep.subr.mxu0 0.0
    %1289 = vmatpush1.msra.mxu0 0.0
    %1290 = vmatprep.subr.mxu0 0.0
    %1291 = vmatpush1.msra.mxu0 0.0
    %1292 = vmatprep.subr.mxu0 0.0
    %1293 = vmatpush1.msra.mxu0 0.0
    %1294 = vmatprep.subr.mxu0 0.0
    %1295 = vmatpush1.msra.mxu0 0.0
    %1296 = vmatprep.subr.mxu0 0.0
    %1297 = vmatpush1.msra.mxu0 0.0
    %1298 = vmatprep.subr.mxu0 0.0
    %1299 = vmatpush1.msra.mxu0 0.0
    %1300 = vmatprep.subr.mxu0 0.0
    %1301 = vmatpush1.msra.mxu0 0.0
    %1302 = vmatprep.subr.mxu0 0.0
    %1303 = vmatpush1.msra.mxu0 0.0
    %1304 = vmatprep.mubr.f32.mxu0 0.0
    %1305 = vmatmul.mubr.f32.gmra.mrb[0].mxu0 %v1235
    %v1306 = vpop.f32.mrb[0].mxu0
    %v1307 = vadd.f32 %v1233, %v1306
    %v1308 = vpop.f32.mrb[0].mxu0
    %1309 = vmatprep.mubr.f32.mxu0 0.0
    %1310 = vmatmul.mubr.f32.gmra.mrb[0].mxu0 %v1238
    %v1311 = vpop.f32.mrb[0].mxu0
    %v1312 = vadd.f32 %v1233, %v1311
    %v1313 = vpop.f32.mrb[0].mxu0
    %1314 = vdwg.mxu0
    %v1315 = vld [vmem:[#allocation4 + $0x220] sm:$0xff]
    %v1316 = vld [vmem:[#allocation4 + $0x230] sm:$0xff]
    %v1317 = vld [vmem:[#allocation4 + $0x240] sm:$0xff]
    %v1318 = vld [vmem:[#allocation4 + $0x250] sm:$0xff]
    %v1319 = vld [vmem:[#allocation4 + $0x260] sm:$0xff]
    %v1320 = vld [vmem:[#allocation4 + $0x270] sm:$0xff]
    %v1321 = vld [vmem:[#allocation4 + $0x280] sm:$0xff]
    %v1322 = vld [vmem:[#allocation4 + $0x290] sm:$0xff]
    %v1323 = vld [vmem:[#allocation4 + $0x12] ss:$0 sm:$0xff]
    %vm1326 = vcmask 1041408
    %v1327 = vrot.slane %v1307, 6
    %v1328 = vrot.slane %v1312, 6
    %v1329 = vsel %vm1326, %v1327, %v1328
    %vm1332 = vcmask 1043456
    %v1333 = vrot.slane %v1307, 4
    %v1334 = vrot.slane %v1312, 4
    %v1335 = vsel %vm1332, %v1333, %v1334
    %vm1338 = vcmask 1045504
    %v1339 = vrot.slane %v1307, 2
    %v1340 = vrot.slane %v1312, 2
    %v1341 = vsel %vm1338, %v1339, %v1340
    %v1344 = vsel %vm1326, %v1312, %v1327
    %v1345 = vsel %vm1332, %v1329, %v1333
    %v1346 = vsel %vm1338, %v1335, %v1339
    %v1347 = vmul.f32 %v1307, %v437
    %v1348 = vmul.f32 %v1344, %v438
    %v1349 = vmul.f32 %v1345, %v439
    %v1350 = vmul.f32 %v1346, %v440
    %v1351 = vmul.f32 %v1341, %v441
    %1357 = vrot.lane.b32.xlu0 %v437, 64
    %v1358 = vpop.permute.xlu0 %1357
    %1359 = vrot.lane.b32.xlu0 %v438, 64
    %v1360 = vpop.permute.xlu0 %1359
    %1361 = vrot.lane.b32.xlu0 %v439, 64
    %v1362 = vpop.permute.xlu0 %1361
    %1363 = vrot.lane.b32.xlu0 %v440, 64
    %v1364 = vpop.permute.xlu0 %1363
    %1365 = vrot.lane.b32.xlu0 %v441, 64
    %v1366 = vpop.permute.xlu0 %1365
    %v1372 = vmul.f32 %v1307, %v1358
    %v1373 = vmul.f32 %v1344, %v1360
    %v1374 = vmul.f32 %v1345, %v1362
    %v1375 = vmul.f32 %v1346, %v1364
    %v1376 = vmul.f32 %v1341, %v1366
    %v1378 = vsel %vm55, %v1217, 0
    %v1381 = vsel %vm55, %v1222, 0
    %v1384 = vsel %vm55, %v1347, 0
    %v1387 = vsel %vm55, %v1348, 0
    %v1390 = vsel %vm55, %v1349, 0
    %v1393 = vsel %vm55, %v1350, 0
    %v1396 = vsel %vm55, %v1351, 0
    %1398 = vmatprep.subr.mxu0 0.0
    %1399 = vmatpush1.xpose.msra.mxu0 %v1384
    %1400 = vmatprep.subr.mxu0 0.0
    %1401 = vmatpush1.xpose.msra.mxu0 %v1387
    %1402 = vmatprep.subr.mxu0 0.0
    %1403 = vmatpush1.xpose.msra.mxu0 %v1390
    %1404 = vmatprep.subr.mxu0 0.0
    %1405 = vmatpush1.xpose.msra.mxu0 %v1393
    %1406 = vmatprep.subr.mxu0 0.0
    %1407 = vmatpush1.xpose.msra.mxu0 %v1396
    %1408 = vmatprep.subr.mxu0 0.0
    %1409 = vmatpush1.xpose.msra.mxu0 0.0
    %1410 = vmatprep.subr.mxu0 0.0
    %1411 = vmatpush1.xpose.msra.mxu0 0.0
    %1412 = vmatprep.subr.mxu0 0.0
    %1413 = vmatpush1.xpose.msra.mxu0 0.0
    %1414 = vmatprep.subr.mxu0 0.0
    %1415 = vmatpush1.xpose.msra.mxu0 0.0
    %1416 = vmatprep.subr.mxu0 0.0
    %1417 = vmatpush1.xpose.msra.mxu0 0.0
    %1418 = vmatprep.subr.mxu0 0.0
    %1419 = vmatpush1.xpose.msra.mxu0 0.0
    %1420 = vmatprep.subr.mxu0 0.0
    %1421 = vmatpush1.xpose.msra.mxu0 0.0
    %1422 = vmatprep.subr.mxu0 0.0
    %1423 = vmatpush1.xpose.msra.mxu0 0.0
    %1424 = vmatprep.subr.mxu0 0.0
    %1425 = vmatpush1.xpose.msra.mxu0 0.0
    %1426 = vmatprep.subr.mxu0 0.0
    %1427 = vmatpush1.xpose.msra.mxu0 0.0
    %1428 = vmatprep.subr.mxu0 0.0
    %1429 = vmatpush1.xpose.msra.mxu0 0.0
    %1430 = vmatprep.subr.mxu0 0.0
    %1431 = vmatpush1.xpose.msra.mxu0 0.0
    %1432 = vmatprep.subr.mxu0 0.0
    %1433 = vmatpush1.xpose.msra.mxu0 0.0
    %1434 = vmatprep.subr.mxu0 0.0
    %1435 = vmatpush1.xpose.msra.mxu0 0.0
    %1436 = vmatprep.subr.mxu0 0.0
    %1437 = vmatpush1.xpose.msra.mxu0 0.0
    %1438 = vmatprep.subr.mxu0 0.0
    %1439 = vmatpush1.xpose.msra.mxu0 0.0
    %1440 = vmatprep.subr.mxu0 0.0
    %1441 = vmatpush1.xpose.msra.mxu0 0.0
    %1442 = vmatprep.subr.mxu0 0.0
    %1443 = vmatpush1.xpose.msra.mxu0 0.0
    %1444 = vmatprep.subr.mxu0 0.0
    %1445 = vmatpush1.xpose.msra.mxu0 0.0
    %1446 = vmatprep.subr.mxu0 0.0
    %1447 = vmatpush1.xpose.msra.mxu0 0.0
    %1448 = vmatprep.subr.mxu0 0.0
    %1449 = vmatpush1.xpose.msra.mxu0 0.0
    %1450 = vmatprep.subr.mxu0 0.0
    %1451 = vmatpush1.xpose.msra.mxu0 0.0
    %1452 = vmatprep.subr.mxu0 0.0
    %1453 = vmatpush1.xpose.msra.mxu0 0.0
    %1454 = vmatprep.subr.mxu0 0.0
    %1455 = vmatpush1.xpose.msra.mxu0 0.0
    %1456 = vmatprep.subr.mxu0 0.0
    %1457 = vmatpush1.xpose.msra.mxu0 0.0
    %1458 = vmatprep.subr.mxu0 0.0
    %1459 = vmatpush1.xpose.msra.mxu0 0.0
    %1460 = vmatprep.subr.mxu0 0.0
    %1461 = vmatpush1.xpose.msra.mxu0 0.0
    %1462 = vmatprep.mubr.f32.mxu0 0.0
    %1463 = vmatmul.mubr.f32.gmra.mrb[0].mxu0 %v1378
    %v1464 = vpop.f32.mrb[0].mxu0
    %v1465 = vadd.f32 %v421, %v1464
    %v1466 = vpop.f32.mrb[0].mxu0
    %1467 = vmatprep.mubr.f32.mxu0 0.0
    %1468 = vmatmul.mubr.f32.gmra.mrb[0].mxu0 %v1381
    %v1469 = vpop.f32.mrb[0].mxu0
    %v1470 = vadd.f32 %v422, %v1469
    %v1471 = vpop.f32.mrb[0].mxu0
    %1472 = vmatprep.mubr.f32.mxu0 0.0
    %1473 = vmatmul.mubr.f32.gmra.mrb[0].mxu0 %v1378
    %v1474 = vpop.f32.mrb[0].mxu0
    %v1475 = vadd.f32 %v423, %v1474
    %v1476 = vpop.f32.mrb[0].mxu0
    %1477 = vmatprep.mubr.f32.mxu0 0.0
    %1478 = vmatmul.mubr.f32.gmra.mrb[0].mxu0 %v1381
    %v1479 = vpop.f32.mrb[0].mxu0
    %v1480 = vadd.f32 %v424, %v1479
    %v1481 = vpop.f32.mrb[0].mxu0
    %1482 = vmatprep.mubr.f32.mxu0 0.0
    %1483 = vmatmul.mubr.f32.gmra.mrb[0].mxu0 %v1378
    %v1484 = vpop.f32.mrb[0].mxu0
    %v1485 = vadd.f32 %v425, %v1484
    %v1486 = vpop.f32.mrb[0].mxu0
    %1487 = vmatprep.mubr.f32.mxu0 0.0
    %1488 = vmatmul.mubr.f32.gmra.mrb[0].mxu0 %v1381
    %v1489 = vpop.f32.mrb[0].mxu0
    %v1490 = vadd.f32 %v426, %v1489
    %v1491 = vpop.f32.mrb[0].mxu0
    %1492 = vmatprep.mubr.f32.mxu0 0.0
    %1493 = vmatmul.mubr.f32.gmra.mrb[0].mxu0 %v1378
    %v1494 = vpop.f32.mrb[0].mxu0
    %v1495 = vadd.f32 %v427, %v1494
    %v1496 = vpop.f32.mrb[0].mxu0
    %1497 = vmatprep.mubr.f32.mxu0 0.0
    %1498 = vmatmul.mubr.f32.gmra.mrb[0].mxu0 %v1381
    %v1499 = vpop.f32.mrb[0].mxu0
    %v1500 = vadd.f32 %v428, %v1499
    %v1501 = vpop.f32.mrb[0].mxu0
    %1502 = vdwg.mxu0
    %vm1503 = vcmask 326656
    %v1504 = vsel %vm1503, %v1465, -inf
    %1505 = vmax.xlane.f32.xlu0 %v1504
    %v1506 = vpop.xlane.xlu0 %1505
    %v1507 = vsel %vm1503, %v1470, -inf
    %1508 = vmax.xlane.f32.xlu0 %v1507
    %v1509 = vpop.xlane.xlu0 %1508
    %v1510 = vsel %vm1503, %v1475, -inf
    %1511 = vmax.xlane.f32.xlu0 %v1510
    %v1512 = vpop.xlane.xlu0 %1511
    %v1513 = vsel %vm1503, %v1480, -inf
    %1514 = vmax.xlane.f32.xlu0 %v1513
    %v1515 = vpop.xlane.xlu0 %1514
    %v1516 = vsel %vm1503, %v1485, -inf
    %1517 = vmax.xlane.f32.xlu0 %v1516
    %v1518 = vpop.xlane.xlu0 %1517
    %v1519 = vsel %vm1503, %v1490, -inf
    %1520 = vmax.xlane.f32.xlu0 %v1519
    %v1521 = vpop.xlane.xlu0 %1520
    %v1522 = vsel %vm1503, %v1495, -inf
    %1523 = vmax.xlane.f32.xlu0 %v1522
    %v1524 = vpop.xlane.xlu0 %1523
    %v1525 = vsel %vm1503, %v1500, -inf
    %1526 = vmax.xlane.f32.xlu0 %v1525
    %v1527 = vpop.xlane.xlu0 %1526
    %v1528 = vsub.f32 %v1465, %v1506
    %v1529 = vsub.f32 %v1470, %v1509
    %v1530 = vsub.f32 %v1475, %v1512
    %v1531 = vsub.f32 %v1480, %v1515
    %v1532 = vsub.f32 %v1485, %v1518
    %v1533 = vsub.f32 %v1490, %v1521
    %v1534 = vsub.f32 %v1495, %v1524
    %v1535 = vsub.f32 %v1500, %v1527
    %v1536 = vmul.f32 %v1528, 1.442695
    %v1537 = vpow.pop %v1536
    %v1538 = vmul.f32 %v1529, 1.442695
    %v1539 = vpow.pop %v1538
    %v1540 = vmul.f32 %v1530, 1.442695
    %v1541 = vpow.pop %v1540
    %v1542 = vmul.f32 %v1531, 1.442695
    %v1543 = vpow.pop %v1542
    %v1544 = vmul.f32 %v1532, 1.442695
    %v1545 = vpow.pop %v1544
    %v1546 = vmul.f32 %v1533, 1.442695
    %v1547 = vpow.pop %v1546
    %v1548 = vmul.f32 %v1534, 1.442695
    %v1549 = vpow.pop %v1548
    %v1550 = vmul.f32 %v1535, 1.442695
    %v1551 = vpow.pop %v1550
    %v1552 = vsel %vm1503, %v1537, 0.0
    %1553 = vadd.xlane.f32.xlu0 %v1552
    %v1554 = vpop.xlane.xlu0 %1553
    %v1555 = vsel %vm1503, %v1539, 0.0
    %1556 = vadd.xlane.f32.xlu0 %v1555
    %v1557 = vpop.xlane.xlu0 %1556
    %v1558 = vsel %vm1503, %v1541, 0.0
    %1559 = vadd.xlane.f32.xlu0 %v1558
    %v1560 = vpop.xlane.xlu0 %1559
    %v1561 = vsel %vm1503, %v1543, 0.0
    %1562 = vadd.xlane.f32.xlu0 %v1561
    %v1563 = vpop.xlane.xlu0 %1562
    %v1564 = vsel %vm1503, %v1545, 0.0
    %1565 = vadd.xlane.f32.xlu0 %v1564
    %v1566 = vpop.xlane.xlu0 %1565
    %v1567 = vsel %vm1503, %v1547, 0.0
    %1568 = vadd.xlane.f32.xlu0 %v1567
    %v1569 = vpop.xlane.xlu0 %1568
    %v1570 = vsel %vm1503, %v1549, 0.0
    %1571 = vadd.xlane.f32.xlu0 %v1570
    %v1572 = vpop.xlane.xlu0 %1571
    %v1573 = vsel %vm1503, %v1551, 0.0
    %1574 = vadd.xlane.f32.xlu0 %v1573
    %v1575 = vpop.xlane.xlu0 %1574
    %v1576 = vrcp.pop %v1554
    %v1577 = vrcp.pop %v1557
    %v1578 = vrcp.pop %v1560
    %v1579 = vrcp.pop %v1563
    %v1580 = vrcp.pop %v1566
    %v1581 = vrcp.pop %v1569
    %v1582 = vrcp.pop %v1572
    %v1583 = vrcp.pop %v1575
    %v1584 = vmul.f32 %v1537, %v1576
    %v1585 = vmul.f32 %v1539, %v1577
    %v1586 = vmul.f32 %v1541, %v1578
    %v1587 = vmul.f32 %v1543, %v1579
    %v1588 = vmul.f32 %v1545, %v1580
    %v1589 = vmul.f32 %v1547, %v1581
    %v1590 = vmul.f32 %v1549, %v1582
    %v1591 = vmul.f32 %v1551, %v1583
    %1597 = vrot.lane.b32.xlu0 %v1372, 64
    %v1598 = vpop.permute.xlu0 %1597
    %1599 = vrot.lane.b32.xlu0 %v1373, 64
    %v1600 = vpop.permute.xlu0 %1599
    %1601 = vrot.lane.b32.xlu0 %v1374, 64
    %v1602 = vpop.permute.xlu0 %1601
    %1603 = vrot.lane.b32.xlu0 %v1375, 64
    %v1604 = vpop.permute.xlu0 %1603
    %1605 = vrot.lane.b32.xlu0 %v1376, 64
    %v1606 = vpop.permute.xlu0 %1605
    %v1613 = vsel %vm1503, %v1584, 0
    %v1616 = vsel %vm1503, %v1585, 0
    %v1619 = vsel %vm1503, %v1586, 0
    %v1622 = vsel %vm1503, %v1587, 0
    %v1625 = vsel %vm1503, %v1588, 0
    %v1628 = vsel %vm1503, %v1589, 0
    %v1631 = vsel %vm1503, %v1590, 0
    %v1634 = vsel %vm1503, %v1591, 0
    %1636 = vmatprep.subr.mxu0 0.0
    %1637 = vmatpush1.msra.mxu0 %v1598
    %1638 = vmatprep.subr.mxu0 0.0
    %1639 = vmatpush1.msra.mxu0 %v1600
    %1640 = vmatprep.subr.mxu0 0.0
    %1641 = vmatpush1.msra.mxu0 %v1602
    %1642 = vmatprep.subr.mxu0 0.0
    %1643 = vmatpush1.msra.mxu0 %v1604
    %1644 = vmatprep.subr.mxu0 0.0
    %1645 = vmatpush1.msra.mxu0 %v1606
    %1646 = vmatprep.subr.mxu0 0.0
    %1647 = vmatpush1.msra.mxu0 0.0
    %1648 = vmatprep.subr.mxu0 0.0
    %1649 = vmatpush1.msra.mxu0 0.0
    %1650 = vmatprep.subr.mxu0 0.0
    %1651 = vmatpush1.msra.mxu0 0.0
    %1652 = vmatprep.subr.mxu0 0.0
    %1653 = vmatpush1.msra.mxu0 0.0
    %1654 = vmatprep.subr.mxu0 0.0
    %1655 = vmatpush1.msra.mxu0 0.0
    %1656 = vmatprep.subr.mxu0 0.0
    %1657 = vmatpush1.msra.mxu0 0.0
    %1658 = vmatprep.subr.mxu0 0.0
    %1659 = vmatpush1.msra.mxu0 0.0
    %1660 = vmatprep.subr.mxu0 0.0
    %1661 = vmatpush1.msra.mxu0 0.0
    %1662 = vmatprep.subr.mxu0 0.0
    %1663 = vmatpush1.msra.mxu0 0.0
    %1664 = vmatprep.subr.mxu0 0.0
    %1665 = vmatpush1.msra.mxu0 0.0
    %1666 = vmatprep.subr.mxu0 0.0
    %1667 = vmatpush1.msra.mxu0 0.0
    %1668 = vmatprep.subr.mxu0 0.0
    %1669 = vmatpush1.msra.mxu0 0.0
    %1670 = vmatprep.subr.mxu0 0.0
    %1671 = vmatpush1.msra.mxu0 0.0
    %1672 = vmatprep.subr.mxu0 0.0
    %1673 = vmatpush1.msra.mxu0 0.0
    %1674 = vmatprep.subr.mxu0 0.0
    %1675 = vmatpush1.msra.mxu0 0.0
    %1676 = vmatprep.subr.mxu0 0.0
    %1677 = vmatpush1.msra.mxu0 0.0
    %1678 = vmatprep.subr.mxu0 0.0
    %1679 = vmatpush1.msra.mxu0 0.0
    %1680 = vmatprep.subr.mxu0 0.0
    %1681 = vmatpush1.msra.mxu0 0.0
    %1682 = vmatprep.subr.mxu0 0.0
    %1683 = vmatpush1.msra.mxu0 0.0
    %1684 = vmatprep.subr.mxu0 0.0
    %1685 = vmatpush1.msra.mxu0 0.0
    %1686 = vmatprep.subr.mxu0 0.0
    %1687 = vmatpush1.msra.mxu0 0.0
    %1688 = vmatprep.subr.mxu0 0.0
    %1689 = vmatpush1.msra.mxu0 0.0
    %1690 = vmatprep.subr.mxu0 0.0
    %1691 = vmatpush1.msra.mxu0 0.0
    %1692 = vmatprep.subr.mxu0 0.0
    %1693 = vmatpush1.msra.mxu0 0.0
    %1694 = vmatprep.subr.mxu0 0.0
    %1695 = vmatpush1.msra.mxu0 0.0
    %1696 = vmatprep.subr.mxu0 0.0
    %1697 = vmatpush1.msra.mxu0 0.0
    %1698 = vmatprep.subr.mxu0 0.0
    %1699 = vmatpush1.msra.mxu0 0.0
    %1700 = vmatprep.mubr.f32.mxu0 0.0
    %1701 = vmatmul.mubr.f32.gmra.mrb[0].mxu0 %v1613
    %v1702 = vpop.f32.mrb[0].mxu0
    %v1703 = vadd.f32 0.0, %v1702
    %v1704 = vpop.f32.mrb[0].mxu0
    %1705 = vmatprep.mubr.f32.mxu0 0.0
    %1706 = vmatmul.mubr.f32.gmra.mrb[0].mxu0 %v1616
    %v1707 = vpop.f32.mrb[0].mxu0
    %v1708 = vadd.f32 0.0, %v1707
    %v1709 = vpop.f32.mrb[0].mxu0
    %1710 = vmatprep.mubr.f32.mxu0 0.0
    %1711 = vmatmul.mubr.f32.gmra.mrb[0].mxu0 %v1619
    %v1712 = vpop.f32.mrb[0].mxu0
    %v1713 = vadd.f32 0.0, %v1712
    %v1714 = vpop.f32.mrb[0].mxu0
    %1715 = vmatprep.mubr.f32.mxu0 0.0
    %1716 = vmatmul.mubr.f32.gmra.mrb[0].mxu0 %v1622
    %v1717 = vpop.f32.mrb[0].mxu0
    %v1718 = vadd.f32 0.0, %v1717
    %v1719 = vpop.f32.mrb[0].mxu0
    %1720 = vmatprep.mubr.f32.mxu0 0.0
    %1721 = vmatmul.mubr.f32.gmra.mrb[0].mxu0 %v1625
    %v1722 = vpop.f32.mrb[0].mxu0
    %v1723 = vadd.f32 0.0, %v1722
    %v1724 = vpop.f32.mrb[0].mxu0
    %1725 = vmatprep.mubr.f32.mxu0 0.0
    %1726 = vmatmul.mubr.f32.gmra.mrb[0].mxu0 %v1628
    %v1727 = vpop.f32.mrb[0].mxu0
    %v1728 = vadd.f32 0.0, %v1727
    %v1729 = vpop.f32.mrb[0].mxu0
    %1730 = vmatprep.mubr.f32.mxu0 0.0
    %1731 = vmatmul.mubr.f32.gmra.mrb[0].mxu0 %v1631
    %v1732 = vpop.f32.mrb[0].mxu0
    %v1733 = vadd.f32 0.0, %v1732
    %v1734 = vpop.f32.mrb[0].mxu0
    %1735 = vmatprep.mubr.f32.mxu0 0.0
    %1736 = vmatmul.mubr.f32.gmra.mrb[0].mxu0 %v1634
    %v1737 = vpop.f32.mrb[0].mxu0
    %v1738 = vadd.f32 0.0, %v1737
    %v1739 = vpop.f32.mrb[0].mxu0
    %1740 = vdwg.mxu0
    %v1741 = vadd.f32 %v1703, %v1713
    %v1742 = vadd.f32 %v1708, %v1718
    %v1743 = vadd.f32 %v1741, %v1723
    %v1744 = vadd.f32 %v1742, %v1728
    %v1745 = vadd.f32 %v1743, %v1733
    %v1746 = vadd.f32 %v1744, %v1738
    %v1748 = vsel %vm55, %v1745, 0
    %v1751 = vsel %vm55, %v1746, 0
    %1753 = vmatprep.subr.mxu0 0.0
    %1754 = vmatpush1.msra.mxu0 %v1315
    %1755 = vmatprep.subr.mxu0 0.0
    %1756 = vmatpush1.msra.mxu0 %v1316
    %1757 = vmatprep.subr.mxu0 0.0
    %1758 = vmatpush1.msra.mxu0 %v1317
    %1759 = vmatprep.subr.mxu0 0.0
    %1760 = vmatpush1.msra.mxu0 %v1318
    %1761 = vmatprep.subr.mxu0 0.0
    %1762 = vmatpush1.msra.mxu0 %v1319
    %1763 = vmatprep.subr.mxu0 0.0
    %1764 = vmatpush1.msra.mxu0 %v1320
    %1765 = vmatprep.subr.mxu0 0.0
    %1766 = vmatpush1.msra.mxu0 %v1321
    %1767 = vmatprep.subr.mxu0 0.0
    %1768 = vmatpush1.msra.mxu0 %v1322
    %1769 = vmatprep.subr.mxu0 0.0
    %1770 = vmatpush1.msra.mxu0 0.0
    %1771 = vmatprep.subr.mxu0 0.0
    %1772 = vmatpush1.msra.mxu0 0.0
    %1773 = vmatprep.subr.mxu0 0.0
    %1774 = vmatpush1.msra.mxu0 0.0
    %1775 = vmatprep.subr.mxu0 0.0
    %1776 = vmatpush1.msra.mxu0 0.0
    %1777 = vmatprep.subr.mxu0 0.0
    %1778 = vmatpush1.msra.mxu0 0.0
    %1779 = vmatprep.subr.mxu0 0.0
    %1780 = vmatpush1.msra.mxu0 0.0
    %1781 = vmatprep.subr.mxu0 0.0
    %1782 = vmatpush1.msra.mxu0 0.0
    %1783 = vmatprep.subr.mxu0 0.0
    %1784 = vmatpush1.msra.mxu0 0.0
    %1785 = vmatprep.subr.mxu0 0.0
    %1786 = vmatpush1.msra.mxu0 0.0
    %1787 = vmatprep.subr.mxu0 0.0
    %1788 = vmatpush1.msra.mxu0 0.0
    %1789 = vmatprep.subr.mxu0 0.0
    %1790 = vmatpush1.msra.mxu0 0.0
    %1791 = vmatprep.subr.mxu0 0.0
    %1792 = vmatpush1.msra.mxu0 0.0
    %1793 = vmatprep.subr.mxu0 0.0
    %1794 = vmatpush1.msra.mxu0 0.0
    %1795 = vmatprep.subr.mxu0 0.0
    %1796 = vmatpush1.msra.mxu0 0.0
    %1797 = vmatprep.subr.mxu0 0.0
    %1798 = vmatpush1.msra.mxu0 0.0
    %1799 = vmatprep.subr.mxu0 0.0
    %1800 = vmatpush1.msra.mxu0 0.0
    %1801 = vmatprep.subr.mxu0 0.0
    %1802 = vmatpush1.msra.mxu0 0.0
    %1803 = vmatprep.subr.mxu0 0.0
    %1804 = vmatpush1.msra.mxu0 0.0
    %1805 = vmatprep.subr.mxu0 0.0
    %1806 = vmatpush1.msra.mxu0 0.0
    %1807 = vmatprep.subr.mxu0 0.0
    %1808 = vmatpush1.msra.mxu0 0.0
    %1809 = vmatprep.subr.mxu0 0.0
    %1810 = vmatpush1.msra.mxu0 0.0
    %1811 = vmatprep.subr.mxu0 0.0
    %1812 = vmatpush1.msra.mxu0 0.0
    %1813 = vmatprep.subr.mxu0 0.0
    %1814 = vmatpush1.msra.mxu0 0.0
    %1815 = vmatprep.subr.mxu0 0.0
    %1816 = vmatpush1.msra.mxu0 0.0
    %1817 = vmatprep.mubr.f32.mxu0 0.0
    %1818 = vmatmul.mubr.f32.gmra.mrb[0].mxu0 %v1748
    %v1819 = vpop.f32.mrb[0].mxu0
    %v1820 = vadd.f32 %v1323, %v1819
    %v1821 = vpop.f32.mrb[0].mxu0
    %1822 = vmatprep.mubr.f32.mxu0 0.0
    %1823 = vmatmul.mubr.f32.gmra.mrb[0].mxu0 %v1751
    %v1824 = vpop.f32.mrb[0].mxu0
    %v1825 = vadd.f32 %v1323, %v1824
    %v1826 = vpop.f32.mrb[0].mxu0
    %1827 = vdwg.mxu0
    %v1828 = vadd.f32 %v1101, %v1820
    %v1829 = vadd.f32 %v1102, %v1825
    %v1830 = vld [vmem:[#allocation4 + $0x4] ss:$0 sm:$0xff]
    %v1831 = vld [vmem:[#allocation4 + $0x5] ss:$0 sm:$0xff]
    %v1832 = vsel %vm55, %v1828, 0.0
    %1833 = vadd.xlane.f32.xlu0 %v1832
    %v1834 = vpop.xlane.xlu0 %1833
    %v1835 = vsel %vm55, %v1829, 0.0
    %1836 = vadd.xlane.f32.xlu0 %v1835
    %v1837 = vpop.xlane.xlu0 %1836
    %v1838 = vmul.f32 %v1834, %v452
    %v1839 = vmul.f32 %v1837, %v452
    %v1840 = vsub.f32 %v1828, %v1838
    %v1841 = vsub.f32 %v1829, %v1839
    %v1842 = vmul.f32 %v1840, %v1840
    %v1843 = vmul.f32 %v1841, %v1841
    %v1844 = vsel %vm55, %v1842, 0.0
    %1845 = vadd.xlane.f32.xlu0 %v1844
    %v1846 = vpop.xlane.xlu0 %1845
    %v1847 = vsel %vm55, %v1843, 0.0
    %1848 = vadd.xlane.f32.xlu0 %v1847
    %v1849 = vpop.xlane.xlu0 %1848
    %v1850 = vmul.f32 %v1846, %v452
    %v1851 = vmul.f32 %v1849, %v452
    %v1852 = vadd.f32 %v1850, 1e-05
    %v1853 = vadd.f32 %v1851, 1e-05
    %v1854 = vrsqrt.pop %v1852
    %v1855 = vrsqrt.pop %v1853
    %v1856 = vmul.f32 %v1840, %v1854
    %v1857 = vmul.f32 %v1841, %v1855
    %v1858 = vmul.f32 %v1856, %v1830
    %v1859 = vmul.f32 %v1857, %v1830
    %v1860 = vadd.f32 %v1858, %v1831
    %v1861 = vadd.f32 %v1859, %v1831
    %v1862 = vld [vmem:[#allocation4 + $0x2a0] sm:$0xff]
    %v1863 = vld [vmem:[#allocation4 + $0x2a8] sm:$0xff]
    %v1864 = vld [vmem:[#allocation4 + $0x2b0] sm:$0xff]
    %v1865 = vld [vmem:[#allocation4 + $0x2b8] sm:$0xff]
    %v1866 = vld [vmem:[#allocation4 + $0x2c0] sm:$0xff]
    %v1867 = vld [vmem:[#allocation4 + $0x2c8] sm:$0xff]
    %v1868 = vld [vmem:[#allocation4 + $0x2d0] sm:$0xff]
    %v1869 = vld [vmem:[#allocation4 + $0x2d8] sm:$0xff]
    %v1870 = vld [vmem:[#allocation4 + $0x2e0] sm:$0xff]
    %v1871 = vld [vmem:[#allocation4 + $0x2e8] sm:$0xff]
    %v1872 = vld [vmem:[#allocation4 + $0x2f0] sm:$0xff]
    %v1873 = vld [vmem:[#allocation4 + $0x2f8] sm:$0xff]
    %v1874 = vld [vmem:[#allocation4 + $0x300] sm:$0xff]
    %v1875 = vld [vmem:[#allocation4 + $0x308] sm:$0xff]
    %v1876 = vld [vmem:[#allocation4 + $0x310] sm:$0xff]
    %v1877 = vld [vmem:[#allocation4 + $0x318] sm:$0xff]
    %s1878 = scalar_lea.vmem [#allocation4], 19
    %v1879 = vld [vmem:[%s1878] ss:$8 sm:$0x3]
    %v1881 = vlaneseq
    %v1882 = vshrl.u32 %v1881, 7
    %v1883 = vsub.s32 0, %v1882
    %v1884 = vrot.slane %v1879, %v1883
    %v1885 = vlaneseq
    %v1886 = vshrl.u32 %v1885, 7
    %v1887 = vsub.s32 1, %v1886
    %v1888 = vrot.slane %v1879, %v1887
    %v1892 = vsel %vm55, %v1860, 0
    %v1895 = vsel %vm55, %v1861, 0
    %1897 = vmatprep.subr.mxu0 %v1863
    %1898 = vmatpush1.msra.mxu0 %v1862
    %1899 = vmatprep.subr.mxu0 %v1865
    %1900 = vmatpush1.msra.mxu0 %v1864
    %1901 = vmatprep.subr.mxu0 %v1867
    %1902 = vmatpush1.msra.mxu0 %v1866
    %1903 = vmatprep.subr.mxu0 %v1869
    %1904 = vmatpush1.msra.mxu0 %v1868
    %1905 = vmatprep.subr.mxu0 %v1871
    %1906 = vmatpush1.msra.mxu0 %v1870
    %1907 = vmatprep.subr.mxu0 %v1873
    %1908 = vmatpush1.msra.mxu0 %v1872
    %1909 = vmatprep.subr.mxu0 %v1875
    %1910 = vmatpush1.msra.mxu0 %v1874
    %1911 = vmatprep.subr.mxu0 %v1877
    %1912 = vmatpush1.msra.mxu0 %v1876
    %1913 = vmatprep.subr.mxu0 0.0
    %1914 = vmatpush1.msra.mxu0 0.0
    %1915 = vmatprep.subr.mxu0 0.0
    %1916 = vmatpush1.msra.mxu0 0.0
    %1917 = vmatprep.subr.mxu0 0.0
    %1918 = vmatpush1.msra.mxu0 0.0
    %1919 = vmatprep.subr.mxu0 0.0
    %1920 = vmatpush1.msra.mxu0 0.0
    %1921 = vmatprep.subr.mxu0 0.0
    %1922 = vmatpush1.msra.mxu0 0.0
    %1923 = vmatprep.subr.mxu0 0.0
    %1924 = vmatpush1.msra.mxu0 0.0
    %1925 = vmatprep.subr.mxu0 0.0
    %1926 = vmatpush1.msra.mxu0 0.0
    %1927 = vmatprep.subr.mxu0 0.0
    %1928 = vmatpush1.msra.mxu0 0.0
    %1929 = vmatprep.subr.mxu0 0.0
    %1930 = vmatpush1.msra.mxu0 0.0
    %1931 = vmatprep.subr.mxu0 0.0
    %1932 = vmatpush1.msra.mxu0 0.0
    %1933 = vmatprep.subr.mxu0 0.0
    %1934 = vmatpush1.msra.mxu0 0.0
    %1935 = vmatprep.subr.mxu0 0.0
    %1936 = vmatpush1.msra.mxu0 0.0
    %1937 = vmatprep.subr.mxu0 0.0
    %1938 = vmatpush1.msra.mxu0 0.0
    %1939 = vmatprep.subr.mxu0 0.0
    %1940 = vmatpush1.msra.mxu0 0.0
    %1941 = vmatprep.subr.mxu0 0.0
    %1942 = vmatpush1.msra.mxu0 0.0
    %1943 = vmatprep.subr.mxu0 0.0
    %1944 = vmatpush1.msra.mxu0 0.0
    %1945 = vmatprep.subr.mxu0 0.0
    %1946 = vmatpush1.msra.mxu0 0.0
    %1947 = vmatprep.subr.mxu0 0.0
    %1948 = vmatpush1.msra.mxu0 0.0
    %1949 = vmatprep.subr.mxu0 0.0
    %1950 = vmatpush1.msra.mxu0 0.0
    %1951 = vmatprep.subr.mxu0 0.0
    %1952 = vmatpush1.msra.mxu0 0.0
    %1953 = vmatprep.subr.mxu0 0.0
    %1954 = vmatpush1.msra.mxu0 0.0
    %1955 = vmatprep.subr.mxu0 0.0
    %1956 = vmatpush1.msra.mxu0 0.0
    %1957 = vmatprep.subr.mxu0 0.0
    %1958 = vmatpush1.msra.mxu0 0.0
    %1959 = vmatprep.subr.mxu0 0.0
    %1960 = vmatpush1.msra.mxu0 0.0
    %1961 = vmatprep.mubr.f32.mxu0 0.0
    %1962 = vmatmul.mubr.f32.gmra.mrb[0].mxu0 %v1892
    %v1963 = vpop.f32.mrb[0].mxu0
    %v1964 = vadd.f32 %v1884, %v1963
    %v1965 = vpop.f32.mrb[0].mxu0
    %v1966 = vadd.f32 %v1888, %v1965
    %1967 = vmatprep.mubr.f32.mxu0 0.0
    %1968 = vmatmul.mubr.f32.gmra.mrb[0].mxu0 %v1895
    %v1969 = vpop.f32.mrb[0].mxu0
    %v1970 = vadd.f32 %v1884, %v1969
    %v1971 = vpop.f32.mrb[0].mxu0
    %v1972 = vadd.f32 %v1888, %v1971
    %1973 = vdwg.mxu0
    %v1974 = vmul.f32 %v1964, 0.5
    %v1975 = vmul.f32 %v1966, 0.5
    %v1976 = vmul.f32 %v1970, 0.5
    %v1977 = vmul.f32 %v1972, 0.5
    %v1978 = vmul.f32 %v1964, 0.044715
    %v1979 = vmul.f32 %v1966, 0.044715
    %v1980 = vmul.f32 %v1970, 0.044715
    %v1981 = vmul.f32 %v1972, 0.044715
    %v1982 = vmul.f32 %v1978, %v1964
    %v1983 = vmul.f32 %v1979, %v1966
    %v1984 = vmul.f32 %v1980, %v1970
    %v1985 = vmul.f32 %v1981, %v1972
    %v1986 = vmul.f32 %v1982, %v1964
    %v1987 = vmul.f32 %v1983, %v1966
    %v1988 = vmul.f32 %v1984, %v1970
    %v1989 = vmul.f32 %v1985, %v1972
    %v1990 = vadd.f32 %v1964, %v1986
    %v1991 = vadd.f32 %v1966, %v1987
    %v1992 = vadd.f32 %v1970, %v1988
    %v1993 = vadd.f32 %v1972, %v1989
    %v1994 = vmul.f32 %v1990, 0.7978846
    %v1995 = vmul.f32 %v1991, 0.7978846
    %v1996 = vmul.f32 %v1992, 0.7978846
    %v1997 = vmul.f32 %v1993, 0.7978846
    %v1998 = vtanh.pop %v1994
    %v1999 = vtanh.pop %v1995
    %v2000 = vtanh.pop %v1996
    %v2001 = vtanh.pop %v1997
    %v2002 = vadd.f32 %v1998, 1.0
    %v2003 = vadd.f32 %v1999, 1.0
    %v2004 = vadd.f32 %v2000, 1.0
    %v2005 = vadd.f32 %v2001, 1.0
    %v2006 = vmul.f32 %v1974, %v2002
    %v2007 = vmul.f32 %v1975, %v2003
    %v2008 = vmul.f32 %v1976, %v2004
    %v2009 = vmul.f32 %v1977, %v2005
    %v2010 = vld [vmem:[#allocation4 + $0x320] sm:$0xff]
    %v2011 = vld [vmem:[#allocation4 + $0x330] sm:$0xff]
    %v2012 = vld [vmem:[#allocation4 + $0x340] sm:$0xff]
    %v2013 = vld [vmem:[#allocation4 + $0x350] sm:$0xff]
    %v2014 = vld [vmem:[#allocation4 + $0x360] sm:$0xff]
    %v2015 = vld [vmem:[#allocation4 + $0x370] sm:$0xff]
    %v2016 = vld [vmem:[#allocation4 + $0x380] sm:$0xff]
    %v2017 = vld [vmem:[#allocation4 + $0x390] sm:$0xff]
    %v2018 = vld [vmem:[#allocation4 + $0x3a0] sm:$0xff]
    %v2019 = vld [vmem:[#allocation4 + $0x3b0] sm:$0xff]
    %v2020 = vld [vmem:[#allocation4 + $0x3c0] sm:$0xff]
    %v2021 = vld [vmem:[#allocation4 + $0x3d0] sm:$0xff]
    %v2022 = vld [vmem:[#allocation4 + $0x3e0] sm:$0xff]
    %v2023 = vld [vmem:[#allocation4 + $0x3f0] sm:$0xff]
    %v2024 = vld [vmem:[#allocation4 + $0x400] sm:$0xff]
    %v2025 = vld [vmem:[#allocation4 + $0x410] sm:$0xff]
    %v2026 = vld [vmem:[#allocation4 + $0x420] sm:$0xff]
    %v2027 = vld [vmem:[#allocation4 + $0x430] sm:$0xff]
    %v2028 = vld [vmem:[#allocation4 + $0x440] sm:$0xff]
    %v2029 = vld [vmem:[#allocation4 + $0x450] sm:$0xff]
    %v2030 = vld [vmem:[#allocation4 + $0x460] sm:$0xff]
    %v2031 = vld [vmem:[#allocation4 + $0x470] sm:$0xff]
    %v2032 = vld [vmem:[#allocation4 + $0x480] sm:$0xff]
    %v2033 = vld [vmem:[#allocation4 + $0x490] sm:$0xff]
    %v2034 = vld [vmem:[#allocation4 + $0x4a0] sm:$0xff]
    %v2035 = vld [vmem:[#allocation4 + $0x4b0] sm:$0xff]
    %v2036 = vld [vmem:[#allocation4 + $0x4c0] sm:$0xff]
    %v2037 = vld [vmem:[#allocation4 + $0x4d0] sm:$0xff]
    %v2038 = vld [vmem:[#allocation4 + $0x4e0] sm:$0xff]
    %v2039 = vld [vmem:[#allocation4 + $0x4f0] sm:$0xff]
    %v2040 = vld [vmem:[#allocation4 + $0x500] sm:$0xff]
    %v2041 = vld [vmem:[#allocation4 + $0x510] sm:$0xff]
    %v2042 = vld [vmem:[#allocation4 + $0x14] ss:$0 sm:$0xff]
    %2043 = vmatprep.subr.mxu0 0.0
    %2044 = vmatpush1.msra.mxu0 %v2010
    %2045 = vmatprep.subr.mxu0 0.0
    %2046 = vmatpush1.msra.mxu0 %v2011
    %2047 = vmatprep.subr.mxu0 0.0
    %2048 = vmatpush1.msra.mxu0 %v2012
    %2049 = vmatprep.subr.mxu0 0.0
    %2050 = vmatpush1.msra.mxu0 %v2013
    %2051 = vmatprep.subr.mxu0 0.0
    %2052 = vmatpush1.msra.mxu0 %v2014
    %2053 = vmatprep.subr.mxu0 0.0
    %2054 = vmatpush1.msra.mxu0 %v2015
    %2055 = vmatprep.subr.mxu0 0.0
    %2056 = vmatpush1.msra.mxu0 %v2016
    %2057 = vmatprep.subr.mxu0 0.0
    %2058 = vmatpush1.msra.mxu0 %v2017
    %2059 = vmatprep.subr.mxu0 0.0
    %2060 = vmatpush1.msra.mxu0 %v2018
    %2061 = vmatprep.subr.mxu0 0.0
    %2062 = vmatpush1.msra.mxu0 %v2019
    %2063 = vmatprep.subr.mxu0 0.0
    %2064 = vmatpush1.msra.mxu0 %v2020
    %2065 = vmatprep.subr.mxu0 0.0
    %2066 = vmatpush1.msra.mxu0 %v2021
    %2067 = vmatprep.subr.mxu0 0.0
    %2068 = vmatpush1.msra.mxu0 %v2022
    %2069 = vmatprep.subr.mxu0 0.0
    %2070 = vmatpush1.msra.mxu0 %v2023
    %2071 = vmatprep.subr.mxu0 0.0
    %2072 = vmatpush1.msra.mxu0 %v2024
    %2073 = vmatprep.subr.mxu0 0.0
    %2074 = vmatpush1.msra.mxu0 %v2025
    %2075 = vmatprep.subr.mxu0 0.0
    %2076 = vmatpush1.msra.mxu0 %v2026
    %2077 = vmatprep.subr.mxu0 0.0
    %2078 = vmatpush1.msra.mxu0 %v2027
    %2079 = vmatprep.subr.mxu0 0.0
    %2080 = vmatpush1.msra.mxu0 %v2028
    %2081 = vmatprep.subr.mxu0 0.0
    %2082 = vmatpush1.msra.mxu0 %v2029
    %2083 = vmatprep.subr.mxu0 0.0
    %2084 = vmatpush1.msra.mxu0 %v2030
    %2085 = vmatprep.subr.mxu0 0.0
    %2086 = vmatpush1.msra.mxu0 %v2031
    %2087 = vmatprep.subr.mxu0 0.0
    %2088 = vmatpush1.msra.mxu0 %v2032
    %2089 = vmatprep.subr.mxu0 0.0
    %2090 = vmatpush1.msra.mxu0 %v2033
    %2091 = vmatprep.subr.mxu0 0.0
    %2092 = vmatpush1.msra.mxu0 %v2034
    %2093 = vmatprep.subr.mxu0 0.0
    %2094 = vmatpush1.msra.mxu0 %v2035
    %2095 = vmatprep.subr.mxu0 0.0
    %2096 = vmatpush1.msra.mxu0 %v2036
    %2097 = vmatprep.subr.mxu0 0.0
    %2098 = vmatpush1.msra.mxu0 %v2037
    %2099 = vmatprep.subr.mxu0 0.0
    %2100 = vmatpush1.msra.mxu0 %v2038
    %2101 = vmatprep.subr.mxu0 0.0
    %2102 = vmatpush1.msra.mxu0 %v2039
    %2103 = vmatprep.subr.mxu0 0.0
    %2104 = vmatpush1.msra.mxu0 %v2040
    %2105 = vmatprep.subr.mxu0 0.0
    %2106 = vmatpush1.msra.mxu0 %v2041
    %2107 = vmatprep.mubr.f32.mxu0 %v2007
    %2108 = vmatmul.mubr.f32.gmra.mrb[0].mxu0 %v2006
    %v2109 = vpop.f32.mrb[0].mxu0
    %v2110 = vadd.f32 %v2042, %v2109
    %v2111 = vpop.f32.mrb[0].mxu0
    %2112 = vmatprep.mubr.f32.mxu0 %v2009
    %2113 = vmatmul.mubr.f32.gmra.mrb[0].mxu0 %v2008
    %v2114 = vpop.f32.mrb[0].mxu0
    %v2115 = vadd.f32 %v2042, %v2114
    %v2116 = vpop.f32.mrb[0].mxu0
    %2117 = vdwg.mxu0
    %v2118 = vadd.f32 %v1828, %v2110
    %v2119 = vadd.f32 %v1829, %v2115
    %s2120 = scalar_lea.vmem [#allocation4], 1312
    %v2121 = vld [vmem:[%s2120] ss:$0 sm:$0xff]
    %v2122 = vld [vmem:[%s2120 + $0x1] ss:$0 sm:$0xff]
    %v2123 = vsel %vm55, %v2118, 0.0
    %2124 = vadd.xlane.f32.xlu0 %v2123
    %v2125 = vpop.xlane.xlu0 %2124
    %v2126 = vsel %vm55, %v2119, 0.0
    %2127 = vadd.xlane.f32.xlu0 %v2126
    %v2128 = vpop.xlane.xlu0 %2127
    %v2129 = vmul.f32 %v2125, %v452
    %v2130 = vmul.f32 %v2128, %v452
    %v2131 = vsub.f32 %v2118, %v2129
    %v2132 = vsub.f32 %v2119, %v2130
    %v2133 = vmul.f32 %v2131, %v2131
    %v2134 = vmul.f32 %v2132, %v2132
    %v2135 = vsel %vm55, %v2133, 0.0
    %2136 = vadd.xlane.f32.xlu0 %v2135
    %v2137 = vpop.xlane.xlu0 %2136
    %v2138 = vsel %vm55, %v2134, 0.0
    %2139 = vadd.xlane.f32.xlu0 %v2138
    %v2140 = vpop.xlane.xlu0 %2139
    %v2141 = vmul.f32 %v2137, %v452
    %v2142 = vmul.f32 %v2140, %v452
    %v2143 = vadd.f32 %v2141, 1e-05
    %v2144 = vadd.f32 %v2142, 1e-05
    %v2145 = vrsqrt.pop %v2143
    %v2146 = vrsqrt.pop %v2144
    %v2147 = vmul.f32 %v2131, %v2145
    %v2148 = vmul.f32 %v2132, %v2146
    %v2149 = vmul.f32 %v2147, %v2121
    %v2150 = vmul.f32 %v2148, %v2121
    %v2151 = vadd.f32 %v2149, %v2122
    %v2152 = vadd.f32 %v2150, %v2122
    %v2153 = vld [vmem:[%s2120 + $0x20] sm:$0xff]
    %v2154 = vld [vmem:[%s2120 + $0x28] sm:$0xff]
    %v2155 = vld [vmem:[%s2120 + $0x30] sm:$0xff]
    %v2156 = vld [vmem:[%s2120 + $0x38] sm:$0xff]
    %v2157 = vld [vmem:[%s2120 + $0x40] sm:$0xff]
    %v2158 = vld [vmem:[%s2120 + $0x48] sm:$0xff]
    %v2159 = vld [vmem:[%s2120 + $0x50] sm:$0xff]
    %v2160 = vld [vmem:[%s2120 + $0x58] sm:$0xff]
    %v2161 = vld [vmem:[%s2120 + $0x60] sm:$0xff]
    %v2162 = vld [vmem:[%s2120 + $0x68] sm:$0xff]
    %v2163 = vld [vmem:[%s2120 + $0x70] sm:$0xff]
    %v2164 = vld [vmem:[%s2120 + $0x78] sm:$0xff]
    %v2165 = vld [vmem:[%s2120 + $0x80] sm:$0xff]
    %v2166 = vld [vmem:[%s2120 + $0x88] sm:$0xff]
    %v2167 = vld [vmem:[%s2120 + $0x90] sm:$0xff]
    %v2168 = vld [vmem:[%s2120 + $0x98] sm:$0xff]
    %s2169 = scalar_lea.vmem %s2120, 6 [#allocation4]
    %v2170 = vld [vmem:[%s2169] ss:$8 sm:$0x3]
    %v2172 = vlaneseq
    %v2173 = vshrl.u32 %v2172, 7
    %v2174 = vsub.s32 0, %v2173
    %v2175 = vrot.slane %v2170, %v2174
    %v2176 = vlaneseq
    %v2177 = vshrl.u32 %v2176, 7
    %v2178 = vsub.s32 1, %v2177
    %v2179 = vrot.slane %v2170, %v2178
    %v2183 = vsel %vm55, %v2151, 0
    %v2186 = vsel %vm55, %v2152, 0
    %2188 = vmatprep.subr.mxu0 %v2154
    %2189 = vmatpush1.msra.mxu0 %v2153
    %2190 = vmatprep.subr.mxu0 %v2156
    %2191 = vmatpush1.msra.mxu0 %v2155
    %2192 = vmatprep.subr.mxu0 %v2158
    %2193 = vmatpush1.msra.mxu0 %v2157
    %2194 = vmatprep.subr.mxu0 %v2160
    %2195 = vmatpush1.msra.mxu0 %v2159
    %2196 = vmatprep.subr.mxu0 %v2162
    %2197 = vmatpush1.msra.mxu0 %v2161
    %2198 = vmatprep.subr.mxu0 %v2164
    %2199 = vmatpush1.msra.mxu0 %v2163
    %2200 = vmatprep.subr.mxu0 %v2166
    %2201 = vmatpush1.msra.mxu0 %v2165
    %2202 = vmatprep.subr.mxu0 %v2168
    %2203 = vmatpush1.msra.mxu0 %v2167
    %2204 = vmatprep.subr.mxu0 0.0
    %2205 = vmatpush1.msra.mxu0 0.0
    %2206 = vmatprep.subr.mxu0 0.0
    %2207 = vmatpush1.msra.mxu0 0.0
    %2208 = vmatprep.subr.mxu0 0.0
    %2209 = vmatpush1.msra.mxu0 0.0
    %2210 = vmatprep.subr.mxu0 0.0
    %2211 = vmatpush1.msra.mxu0 0.0
    %2212 = vmatprep.subr.mxu0 0.0
    %2213 = vmatpush1.msra.mxu0 0.0
    %2214 = vmatprep.subr.mxu0 0.0
    %2215 = vmatpush1.msra.mxu0 0.0
    %2216 = vmatprep.subr.mxu0 0.0
    %2217 = vmatpush1.msra.mxu0 0.0
    %2218 = vmatprep.subr.mxu0 0.0
    %2219 = vmatpush1.msra.mxu0 0.0
    %2220 = vmatprep.subr.mxu0 0.0
    %2221 = vmatpush1.msra.mxu0 0.0
    %2222 = vmatprep.subr.mxu0 0.0
    %2223 = vmatpush1.msra.mxu0 0.0
    %2224 = vmatprep.subr.mxu0 0.0
    %2225 = vmatpush1.msra.mxu0 0.0
    %2226 = vmatprep.subr.mxu0 0.0
    %2227 = vmatpush1.msra.mxu0 0.0
    %2228 = vmatprep.subr.mxu0 0.0
    %2229 = vmatpush1.msra.mxu0 0.0
    %2230 = vmatprep.subr.mxu0 0.0
    %2231 = vmatpush1.msra.mxu0 0.0
    %2232 = vmatprep.subr.mxu0 0.0
    %2233 = vmatpush1.msra.mxu0 0.0
    %2234 = vmatprep.subr.mxu0 0.0
    %2235 = vmatpush1.msra.mxu0 0.0
    %2236 = vmatprep.subr.mxu0 0.0
    %2237 = vmatpush1.msra.mxu0 0.0
    %2238 = vmatprep.subr.mxu0 0.0
    %2239 = vmatpush1.msra.mxu0 0.0
    %2240 = vmatprep.subr.mxu0 0.0
    %2241 = vmatpush1.msra.mxu0 0.0
    %2242 = vmatprep.subr.mxu0 0.0
    %2243 = vmatpush1.msra.mxu0 0.0
    %2244 = vmatprep.subr.mxu0 0.0
    %2245 = vmatpush1.msra.mxu0 0.0
    %2246 = vmatprep.subr.mxu0 0.0
    %2247 = vmatpush1.msra.mxu0 0.0
    %2248 = vmatprep.subr.mxu0 0.0
    %2249 = vmatpush1.msra.mxu0 0.0
    %2250 = vmatprep.subr.mxu0 0.0
    %2251 = vmatpush1.msra.mxu0 0.0
    %2252 = vmatprep.mubr.f32.mxu0 0.0
    %2253 = vmatmul.mubr.f32.gmra.mrb[0].mxu0 %v2183
    %v2254 = vpop.f32.mrb[0].mxu0
    %v2255 = vadd.f32 %v2175, %v2254
    %v2256 = vpop.f32.mrb[0].mxu0
    %v2257 = vadd.f32 %v2179, %v2256
    %2258 = vmatprep.mubr.f32.mxu0 0.0
    %2259 = vmatmul.mubr.f32.gmra.mrb[0].mxu0 %v2186
    %v2260 = vpop.f32.mrb[0].mxu0
    %v2261 = vadd.f32 %v2175, %v2260
    %v2262 = vpop.f32.mrb[0].mxu0
    %v2263 = vadd.f32 %v2179, %v2262
    %2264 = vdwg.mxu0
    %v2265 = vld [vmem:[%s2120 + $0xa0] sm:$0xff]
    %v2266 = vld [vmem:[%s2120 + $0xb0] sm:$0xff]
    %v2267 = vld [vmem:[%s2120 + $0xc0] sm:$0xff]
    %v2268 = vld [vmem:[%s2120 + $0xd0] sm:$0xff]
    %v2269 = vld [vmem:[%s2120 + $0xe0] sm:$0xff]
    %v2270 = vld [vmem:[%s2120 + $0xf0] sm:$0xff]
    %v2271 = vld [vmem:[%s2120 + $0x100] sm:$0xff]
    %v2272 = vld [vmem:[%s2120 + $0x110] sm:$0xff]
    %v2273 = vld [vmem:[%s2120 + $0x7] ss:$0 sm:$0xff]
    %v2274 = vmul.f32 %v2255, %v607
    %v2275 = vmul.f32 %v2261, %v609
    %v2276 = vmul.f32 %v2255, %v611
    %v2277 = vmul.f32 %v2261, %v613
    %v2278 = vmul.f32 %v2255, %v615
    %v2279 = vmul.f32 %v2261, %v617
    %v2280 = vmul.f32 %v2255, %v619
    %v2281 = vmul.f32 %v2261, %v621
    %v2282 = vmul.f32 %v2257, %v429
    %v2283 = vmul.f32 %v2263, %v430
    %v2284 = vmul.f32 %v2257, %v431
    %v2285 = vmul.f32 %v2263, %v432
    %v2286 = vmul.f32 %v2257, %v433
    %v2287 = vmul.f32 %v2263, %v434
    %v2288 = vmul.f32 %v2257, %v435
    %v2289 = vmul.f32 %v2263, %v436
    %2298 = vrot.lane.b32.xlu0 %v2274, 64
    %v2299 = vpop.permute.xlu0 %2298
    %2300 = vrot.lane.b32.xlu0 %v2275, 64
    %v2301 = vpop.permute.xlu0 %2300
    %2302 = vrot.lane.b32.xlu0 %v2276, 64
    %v2303 = vpop.permute.xlu0 %2302
    %2304 = vrot.lane.b32.xlu0 %v2277, 64
    %v2305 = vpop.permute.xlu0 %2304
    %2306 = vrot.lane.b32.xlu0 %v2278, 64
    %v2307 = vpop.permute.xlu0 %2306
    %2308 = vrot.lane.b32.xlu0 %v2279, 64
    %v2309 = vpop.permute.xlu0 %2308
    %2310 = vrot.lane.b32.xlu0 %v2280, 64
    %v2311 = vpop.permute.xlu0 %2310
    %2312 = vrot.lane.b32.xlu0 %v2281, 64
    %v2313 = vpop.permute.xlu0 %2312
    %v2315 = vsel %vm55, %v2255, 0
    %v2318 = vsel %vm55, %v2261, 0
    %v2320 = vsel %vm55, %v2299, 0
    %v2322 = vsel %vm55, %v2301, 0
    %v2324 = vsel %vm55, %v2303, 0
    %v2326 = vsel %vm55, %v2305, 0
    %v2328 = vsel %vm55, %v2307, 0
    %v2330 = vsel %vm55, %v2309, 0
    %v2332 = vsel %vm55, %v2311, 0
    %v2334 = vsel %vm55, %v2313, 0
    %2336 = vmatprep.subr.mxu0 0.0
    %2337 = vmatpush1.xpose.msra.mxu0 %v2320
    %2338 = vmatprep.subr.mxu0 0.0
    %2339 = vmatpush1.xpose.msra.mxu0 %v2322
    %2340 = vmatprep.subr.mxu0 0.0
    %2341 = vmatpush1.xpose.msra.mxu0 %v2324
    %2342 = vmatprep.subr.mxu0 0.0
    %2343 = vmatpush1.xpose.msra.mxu0 %v2326
    %2344 = vmatprep.subr.mxu0 0.0
    %2345 = vmatpush1.xpose.msra.mxu0 %v2328
    %2346 = vmatprep.subr.mxu0 0.0
    %2347 = vmatpush1.xpose.msra.mxu0 %v2330
    %2348 = vmatprep.subr.mxu0 0.0
    %2349 = vmatpush1.xpose.msra.mxu0 %v2332
    %2350 = vmatprep.subr.mxu0 0.0
    %2351 = vmatpush1.xpose.msra.mxu0 %v2334
    %2352 = vmatprep.subr.mxu0 0.0
    %2353 = vmatpush1.xpose.msra.mxu0 0.0
    %2354 = vmatprep.subr.mxu0 0.0
    %2355 = vmatpush1.xpose.msra.mxu0 0.0
    %2356 = vmatprep.subr.mxu0 0.0
    %2357 = vmatpush1.xpose.msra.mxu0 0.0
    %2358 = vmatprep.subr.mxu0 0.0
    %2359 = vmatpush1.xpose.msra.mxu0 0.0
    %2360 = vmatprep.subr.mxu0 0.0
    %2361 = vmatpush1.xpose.msra.mxu0 0.0
    %2362 = vmatprep.subr.mxu0 0.0
    %2363 = vmatpush1.xpose.msra.mxu0 0.0
    %2364 = vmatprep.subr.mxu0 0.0
    %2365 = vmatpush1.xpose.msra.mxu0 0.0
    %2366 = vmatprep.subr.mxu0 0.0
    %2367 = vmatpush1.xpose.msra.mxu0 0.0
    %2368 = vmatprep.subr.mxu0 0.0
    %2369 = vmatpush1.xpose.msra.mxu0 0.0
    %2370 = vmatprep.subr.mxu0 0.0
    %2371 = vmatpush1.xpose.msra.mxu0 0.0
    %2372 = vmatprep.subr.mxu0 0.0
    %2373 = vmatpush1.xpose.msra.mxu0 0.0
    %2374 = vmatprep.subr.mxu0 0.0
    %2375 = vmatpush1.xpose.msra.mxu0 0.0
    %2376 = vmatprep.subr.mxu0 0.0
    %2377 = vmatpush1.xpose.msra.mxu0 0.0
    %2378 = vmatprep.subr.mxu0 0.0
    %2379 = vmatpush1.xpose.msra.mxu0 0.0
    %2380 = vmatprep.subr.mxu0 0.0
    %2381 = vmatpush1.xpose.msra.mxu0 0.0
    %2382 = vmatprep.subr.mxu0 0.0
    %2383 = vmatpush1.xpose.msra.mxu0 0.0
    %2384 = vmatprep.subr.mxu0 0.0
    %2385 = vmatpush1.xpose.msra.mxu0 0.0
    %2386 = vmatprep.subr.mxu0 0.0
    %2387 = vmatpush1.xpose.msra.mxu0 0.0
    %2388 = vmatprep.subr.mxu0 0.0
    %2389 = vmatpush1.xpose.msra.mxu0 0.0
    %2390 = vmatprep.subr.mxu0 0.0
    %2391 = vmatpush1.xpose.msra.mxu0 0.0
    %2392 = vmatprep.subr.mxu0 0.0
    %2393 = vmatpush1.xpose.msra.mxu0 0.0
    %2394 = vmatprep.subr.mxu0 0.0
    %2395 = vmatpush1.xpose.msra.mxu0 0.0
    %2396 = vmatprep.subr.mxu0 0.0
    %2397 = vmatpush1.xpose.msra.mxu0 0.0
    %2398 = vmatprep.subr.mxu0 0.0
    %2399 = vmatpush1.xpose.msra.mxu0 0.0
    %2400 = vmatprep.mubr.f32.mxu0 0.0
    %2401 = vmatmul.mubr.f32.gmra.mrb[0].mxu0 %v2315
    %v2402 = vpop.f32.mrb[0].mxu0
    %v2403 = vadd.f32 %v413, %v2402
    %v2404 = vpop.f32.mrb[0].mxu0
    %2405 = vmatprep.mubr.f32.mxu0 0.0
    %2406 = vmatmul.mubr.f32.gmra.mrb[0].mxu0 %v2318
    %v2407 = vpop.f32.mrb[0].mxu0
    %v2408 = vadd.f32 %v414, %v2407
    %v2409 = vpop.f32.mrb[0].mxu0
    %2410 = vmatprep.mubr.f32.mxu0 0.0
    %2411 = vmatmul.mubr.f32.gmra.mrb[0].mxu0 %v2315
    %v2412 = vpop.f32.mrb[0].mxu0
    %v2413 = vadd.f32 %v415, %v2412
    %v2414 = vpop.f32.mrb[0].mxu0
    %2415 = vmatprep.mubr.f32.mxu0 0.0
    %2416 = vmatmul.mubr.f32.gmra.mrb[0].mxu0 %v2318
    %v2417 = vpop.f32.mrb[0].mxu0
    %v2418 = vadd.f32 %v416, %v2417
    %v2419 = vpop.f32.mrb[0].mxu0
    %2420 = vmatprep.mubr.f32.mxu0 0.0
    %2421 = vmatmul.mubr.f32.gmra.mrb[0].mxu0 %v2315
    %v2422 = vpop.f32.mrb[0].mxu0
    %v2423 = vadd.f32 %v417, %v2422
    %v2424 = vpop.f32.mrb[0].mxu0
    %2425 = vmatprep.mubr.f32.mxu0 0.0
    %2426 = vmatmul.mubr.f32.gmra.mrb[0].mxu0 %v2318
    %v2427 = vpop.f32.mrb[0].mxu0
    %v2428 = vadd.f32 %v418, %v2427
    %v2429 = vpop.f32.mrb[0].mxu0
    %2430 = vmatprep.mubr.f32.mxu0 0.0
    %2431 = vmatmul.mubr.f32.gmra.mrb[0].mxu0 %v2315
    %v2432 = vpop.f32.mrb[0].mxu0
    %v2433 = vadd.f32 %v419, %v2432
    %v2434 = vpop.f32.mrb[0].mxu0
    %2435 = vmatprep.mubr.f32.mxu0 0.0
    %2436 = vmatmul.mubr.f32.gmra.mrb[0].mxu0 %v2318
    %v2437 = vpop.f32.mrb[0].mxu0
    %v2438 = vadd.f32 %v420, %v2437
    %v2439 = vpop.f32.mrb[0].mxu0
    %2440 = vdwg.mxu0
    %v2441 = vsel %vm55, %v2403, -inf
    %2442 = vmax.xlane.f32.xlu0 %v2441
    %v2443 = vpop.xlane.xlu0 %2442
    %v2444 = vsel %vm55, %v2408, -inf
    %2445 = vmax.xlane.f32.xlu0 %v2444
    %v2446 = vpop.xlane.xlu0 %2445
    %v2447 = vsel %vm55, %v2413, -inf
    %2448 = vmax.xlane.f32.xlu0 %v2447
    %v2449 = vpop.xlane.xlu0 %2448
    %v2450 = vsel %vm55, %v2418, -inf
    %2451 = vmax.xlane.f32.xlu0 %v2450
    %v2452 = vpop.xlane.xlu0 %2451
    %v2453 = vsel %vm55, %v2423, -inf
    %2454 = vmax.xlane.f32.xlu0 %v2453
    %v2455 = vpop.xlane.xlu0 %2454
    %v2456 = vsel %vm55, %v2428, -inf
    %2457 = vmax.xlane.f32.xlu0 %v2456
    %v2458 = vpop.xlane.xlu0 %2457
    %v2459 = vsel %vm55, %v2433, -inf
    %2460 = vmax.xlane.f32.xlu0 %v2459
    %v2461 = vpop.xlane.xlu0 %2460
    %v2462 = vsel %vm55, %v2438, -inf
    %2463 = vmax.xlane.f32.xlu0 %v2462
    %v2464 = vpop.xlane.xlu0 %2463
    %v2465 = vsub.f32 %v2403, %v2443
    %v2466 = vsub.f32 %v2408, %v2446
    %v2467 = vsub.f32 %v2413, %v2449
    %v2468 = vsub.f32 %v2418, %v2452
    %v2469 = vsub.f32 %v2423, %v2455
    %v2470 = vsub.f32 %v2428, %v2458
    %v2471 = vsub.f32 %v2433, %v2461
    %v2472 = vsub.f32 %v2438, %v2464
    %v2473 = vmul.f32 %v2465, 1.442695
    %v2474 = vpow.pop %v2473
    %v2475 = vmul.f32 %v2466, 1.442695
    %v2476 = vpow.pop %v2475
    %v2477 = vmul.f32 %v2467, 1.442695
    %v2478 = vpow.pop %v2477
    %v2479 = vmul.f32 %v2468, 1.442695
    %v2480 = vpow.pop %v2479
    %v2481 = vmul.f32 %v2469, 1.442695
    %v2482 = vpow.pop %v2481
    %v2483 = vmul.f32 %v2470, 1.442695
    %v2484 = vpow.pop %v2483
    %v2485 = vmul.f32 %v2471, 1.442695
    %v2486 = vpow.pop %v2485
    %v2487 = vmul.f32 %v2472, 1.442695
    %v2488 = vpow.pop %v2487
    %v2489 = vsel %vm55, %v2474, 0.0
    %2490 = vadd.xlane.f32.xlu0 %v2489
    %v2491 = vpop.xlane.xlu0 %2490
    %v2492 = vsel %vm55, %v2476, 0.0
    %2493 = vadd.xlane.f32.xlu0 %v2492
    %v2494 = vpop.xlane.xlu0 %2493
    %v2495 = vsel %vm55, %v2478, 0.0
    %2496 = vadd.xlane.f32.xlu0 %v2495
    %v2497 = vpop.xlane.xlu0 %2496
    %v2498 = vsel %vm55, %v2480, 0.0
    %2499 = vadd.xlane.f32.xlu0 %v2498
    %v2500 = vpop.xlane.xlu0 %2499
    %v2501 = vsel %vm55, %v2482, 0.0
    %2502 = vadd.xlane.f32.xlu0 %v2501
    %v2503 = vpop.xlane.xlu0 %2502
    %v2504 = vsel %vm55, %v2484, 0.0
    %2505 = vadd.xlane.f32.xlu0 %v2504
    %v2506 = vpop.xlane.xlu0 %2505
    %v2507 = vsel %vm55, %v2486, 0.0
    %2508 = vadd.xlane.f32.xlu0 %v2507
    %v2509 = vpop.xlane.xlu0 %2508
    %v2510 = vsel %vm55, %v2488, 0.0
    %2511 = vadd.xlane.f32.xlu0 %v2510
    %v2512 = vpop.xlane.xlu0 %2511
    %v2513 = vrcp.pop %v2491
    %v2514 = vrcp.pop %v2494
    %v2515 = vrcp.pop %v2497
    %v2516 = vrcp.pop %v2500
    %v2517 = vrcp.pop %v2503
    %v2518 = vrcp.pop %v2506
    %v2519 = vrcp.pop %v2509
    %v2520 = vrcp.pop %v2512
    %v2521 = vmul.f32 %v2474, %v2513
    %v2522 = vmul.f32 %v2476, %v2514
    %v2523 = vmul.f32 %v2478, %v2515
    %v2524 = vmul.f32 %v2480, %v2516
    %v2525 = vmul.f32 %v2482, %v2517
    %v2526 = vmul.f32 %v2484, %v2518
    %v2527 = vmul.f32 %v2486, %v2519
    %v2528 = vmul.f32 %v2488, %v2520
    %v2530 = vsel %vm55, %v2521, 0
    %v2533 = vsel %vm55, %v2522, 0
    %v2536 = vsel %vm55, %v2523, 0
    %v2539 = vsel %vm55, %v2524, 0
    %v2542 = vsel %vm55, %v2525, 0
    %v2545 = vsel %vm55, %v2526, 0
    %v2548 = vsel %vm55, %v2527, 0
    %v2551 = vsel %vm55, %v2528, 0
    %2553 = vmatprep.subr.mxu0 0.0
    %2554 = vmatpush1.msra.mxu0 %v2282
    %2555 = vmatprep.subr.mxu0 0.0
    %2556 = vmatpush1.msra.mxu0 %v2283
    %2557 = vmatprep.subr.mxu0 0.0
    %2558 = vmatpush1.msra.mxu0 %v2284
    %2559 = vmatprep.subr.mxu0 0.0
    %2560 = vmatpush1.msra.mxu0 %v2285
    %2561 = vmatprep.subr.mxu0 0.0
    %2562 = vmatpush1.msra.mxu0 %v2286
    %2563 = vmatprep.subr.mxu0 0.0
    %2564 = vmatpush1.msra.mxu0 %v2287
    %2565 = vmatprep.subr.mxu0 0.0
    %2566 = vmatpush1.msra.mxu0 %v2288
    %2567 = vmatprep.subr.mxu0 0.0
    %2568 = vmatpush1.msra.mxu0 %v2289
    %2569 = vmatprep.subr.mxu0 0.0
    %2570 = vmatpush1.msra.mxu0 0.0
    %2571 = vmatprep.subr.mxu0 0.0
    %2572 = vmatpush1.msra.mxu0 0.0
    %2573 = vmatprep.subr.mxu0 0.0
    %2574 = vmatpush1.msra.mxu0 0.0
    %2575 = vmatprep.subr.mxu0 0.0
    %2576 = vmatpush1.msra.mxu0 0.0
    %2577 = vmatprep.subr.mxu0 0.0
    %2578 = vmatpush1.msra.mxu0 0.0
    %2579 = vmatprep.subr.mxu0 0.0
    %2580 = vmatpush1.msra.mxu0 0.0
    %2581 = vmatprep.subr.mxu0 0.0
    %2582 = vmatpush1.msra.mxu0 0.0
    %2583 = vmatprep.subr.mxu0 0.0
    %2584 = vmatpush1.msra.mxu0 0.0
    %2585 = vmatprep.subr.mxu0 0.0
    %2586 = vmatpush1.msra.mxu0 0.0
    %2587 = vmatprep.subr.mxu0 0.0
    %2588 = vmatpush1.msra.mxu0 0.0
    %2589 = vmatprep.subr.mxu0 0.0
    %2590 = vmatpush1.msra.mxu0 0.0
    %2591 = vmatprep.subr.mxu0 0.0
    %2592 = vmatpush1.msra.mxu0 0.0
    %2593 = vmatprep.subr.mxu0 0.0
    %2594 = vmatpush1.msra.mxu0 0.0
    %2595 = vmatprep.subr.mxu0 0.0
    %2596 = vmatpush1.msra.mxu0 0.0
    %2597 = vmatprep.subr.mxu0 0.0
    %2598 = vmatpush1.msra.mxu0 0.0
    %2599 = vmatprep.subr.mxu0 0.0
    %2600 = vmatpush1.msra.mxu0 0.0
    %2601 = vmatprep.subr.mxu0 0.0
    %2602 = vmatpush1.msra.mxu0 0.0
    %2603 = vmatprep.subr.mxu0 0.0
    %2604 = vmatpush1.msra.mxu0 0.0
    %2605 = vmatprep.subr.mxu0 0.0
    %2606 = vmatpush1.msra.mxu0 0.0
    %2607 = vmatprep.subr.mxu0 0.0
    %2608 = vmatpush1.msra.mxu0 0.0
    %2609 = vmatprep.subr.mxu0 0.0
    %2610 = vmatpush1.msra.mxu0 0.0
    %2611 = vmatprep.subr.mxu0 0.0
    %2612 = vmatpush1.msra.mxu0 0.0
    %2613 = vmatprep.subr.mxu0 0.0
    %2614 = vmatpush1.msra.mxu0 0.0
    %2615 = vmatprep.subr.mxu0 0.0
    %2616 = vmatpush1.msra.mxu0 0.0
    %2617 = vmatprep.mubr.f32.mxu0 0.0
    %2618 = vmatmul.mubr.f32.gmra.mrb[0].mxu0 %v2530
    %v2619 = vpop.f32.mrb[0].mxu0
    %v2620 = vadd.f32 0.0, %v2619
    %v2621 = vpop.f32.mrb[0].mxu0
    %2622 = vmatprep.mubr.f32.mxu0 0.0
    %2623 = vmatmul.mubr.f32.gmra.mrb[0].mxu0 %v2533
    %v2624 = vpop.f32.mrb[0].mxu0
    %v2625 = vadd.f32 0.0, %v2624
    %v2626 = vpop.f32.mrb[0].mxu0
    %2627 = vmatprep.mubr.f32.mxu0 0.0
    %2628 = vmatmul.mubr.f32.gmra.mrb[0].mxu0 %v2536
    %v2629 = vpop.f32.mrb[0].mxu0
    %v2630 = vadd.f32 0.0, %v2629
    %v2631 = vpop.f32.mrb[0].mxu0
    %2632 = vmatprep.mubr.f32.mxu0 0.0
    %2633 = vmatmul.mubr.f32.gmra.mrb[0].mxu0 %v2539
    %v2634 = vpop.f32.mrb[0].mxu0
    %v2635 = vadd.f32 0.0, %v2634
    %v2636 = vpop.f32.mrb[0].mxu0
    %2637 = vmatprep.mubr.f32.mxu0 0.0
    %2638 = vmatmul.mubr.f32.gmra.mrb[0].mxu0 %v2542
    %v2639 = vpop.f32.mrb[0].mxu0
    %v2640 = vadd.f32 0.0, %v2639
    %v2641 = vpop.f32.mrb[0].mxu0
    %2642 = vmatprep.mubr.f32.mxu0 0.0
    %2643 = vmatmul.mubr.f32.gmra.mrb[0].mxu0 %v2545
    %v2644 = vpop.f32.mrb[0].mxu0
    %v2645 = vadd.f32 0.0, %v2644
    %v2646 = vpop.f32.mrb[0].mxu0
    %2647 = vmatprep.mubr.f32.mxu0 0.0
    %2648 = vmatmul.mubr.f32.gmra.mrb[0].mxu0 %v2548
    %v2649 = vpop.f32.mrb[0].mxu0
    %v2650 = vadd.f32 0.0, %v2649
    %v2651 = vpop.f32.mrb[0].mxu0
    %2652 = vmatprep.mubr.f32.mxu0 0.0
    %2653 = vmatmul.mubr.f32.gmra.mrb[0].mxu0 %v2551
    %v2654 = vpop.f32.mrb[0].mxu0
    %v2655 = vadd.f32 0.0, %v2654
    %v2656 = vpop.f32.mrb[0].mxu0
    %2657 = vdwg.mxu0
    %v2658 = vadd.f32 %v2620, %v2630
    %v2659 = vadd.f32 %v2625, %v2635
    %v2660 = vadd.f32 %v2658, %v2640
    %v2661 = vadd.f32 %v2659, %v2645
    %v2662 = vadd.f32 %v2660, %v2650
    %v2663 = vadd.f32 %v2661, %v2655
    %v2665 = vsel %vm55, %v2662, 0
    %v2668 = vsel %vm55, %v2663, 0
    %2670 = vmatprep.subr.mxu0 0.0
    %2671 = vmatpush1.msra.mxu0 %v2265
    %2672 = vmatprep.subr.mxu0 0.0
    %2673 = vmatpush1.msra.mxu0 %v2266
    %2674 = vmatprep.subr.mxu0 0.0
    %2675 = vmatpush1.msra.mxu0 %v2267
    %2676 = vmatprep.subr.mxu0 0.0
    %2677 = vmatpush1.msra.mxu0 %v2268
    %2678 = vmatprep.subr.mxu0 0.0
    %2679 = vmatpush1.msra.mxu0 %v2269
    %2680 = vmatprep.subr.mxu0 0.0
    %2681 = vmatpush1.msra.mxu0 %v2270
    %2682 = vmatprep.subr.mxu0 0.0
    %2683 = vmatpush1.msra.mxu0 %v2271
    %2684 = vmatprep.subr.mxu0 0.0
    %2685 = vmatpush1.msra.mxu0 %v2272
    %2686 = vmatprep.subr.mxu0 0.0
    %2687 = vmatpush1.msra.mxu0 0.0
    %2688 = vmatprep.subr.mxu0 0.0
    %2689 = vmatpush1.msra.mxu0 0.0
    %2690 = vmatprep.subr.mxu0 0.0
    %2691 = vmatpush1.msra.mxu0 0.0
    %2692 = vmatprep.subr.mxu0 0.0
    %2693 = vmatpush1.msra.mxu0 0.0
    %2694 = vmatprep.subr.mxu0 0.0
    %2695 = vmatpush1.msra.mxu0 0.0
    %2696 = vmatprep.subr.mxu0 0.0
    %2697 = vmatpush1.msra.mxu0 0.0
    %2698 = vmatprep.subr.mxu0 0.0
    %2699 = vmatpush1.msra.mxu0 0.0
    %2700 = vmatprep.subr.mxu0 0.0
    %2701 = vmatpush1.msra.mxu0 0.0
    %2702 = vmatprep.subr.mxu0 0.0
    %2703 = vmatpush1.msra.mxu0 0.0
    %2704 = vmatprep.subr.mxu0 0.0
    %2705 = vmatpush1.msra.mxu0 0.0
    %2706 = vmatprep.subr.mxu0 0.0
    %2707 = vmatpush1.msra.mxu0 0.0
    %2708 = vmatprep.subr.mxu0 0.0
    %2709 = vmatpush1.msra.mxu0 0.0
    %2710 = vmatprep.subr.mxu0 0.0
    %2711 = vmatpush1.msra.mxu0 0.0
    %2712 = vmatprep.subr.mxu0 0.0
    %2713 = vmatpush1.msra.mxu0 0.0
    %2714 = vmatprep.subr.mxu0 0.0
    %2715 = vmatpush1.msra.mxu0 0.0
    %2716 = vmatprep.subr.mxu0 0.0
    %2717 = vmatpush1.msra.mxu0 0.0
    %2718 = vmatprep.subr.mxu0 0.0
    %2719 = vmatpush1.msra.mxu0 0.0
    %2720 = vmatprep.subr.mxu0 0.0
    %2721 = vmatpush1.msra.mxu0 0.0
    %2722 = vmatprep.subr.mxu0 0.0
    %2723 = vmatpush1.msra.mxu0 0.0
    %2724 = vmatprep.subr.mxu0 0.0
    %2725 = vmatpush1.msra.mxu0 0.0
    %2726 = vmatprep.subr.mxu0 0.0
    %2727 = vmatpush1.msra.mxu0 0.0
    %2728 = vmatprep.subr.mxu0 0.0
    %2729 = vmatpush1.msra.mxu0 0.0
    %2730 = vmatprep.subr.mxu0 0.0
    %2731 = vmatpush1.msra.mxu0 0.0
    %2732 = vmatprep.subr.mxu0 0.0
    %2733 = vmatpush1.msra.mxu0 0.0
    %2734 = vmatprep.mubr.f32.mxu0 0.0
    %2735 = vmatmul.mubr.f32.gmra.mrb[0].mxu0 %v2665
    %v2736 = vpop.f32.mrb[0].mxu0
    %v2737 = vadd.f32 %v2273, %v2736
    %v2738 = vpop.f32.mrb[0].mxu0
    %2739 = vmatprep.mubr.f32.mxu0 0.0
    %2740 = vmatmul.mubr.f32.gmra.mrb[0].mxu0 %v2668
    %v2741 = vpop.f32.mrb[0].mxu0
    %v2742 = vadd.f32 %v2273, %v2741
    %v2743 = vpop.f32.mrb[0].mxu0
    %2744 = vdwg.mxu0
    %v2745 = vadd.f32 %v2118, %v2737
    %v2746 = vadd.f32 %v2119, %v2742
    %v2747 = vld [vmem:[%s2120 + $0x2] ss:$0 sm:$0xff]
    %v2748 = vld [vmem:[%s2120 + $0x3] ss:$0 sm:$0xff]
    %v2749 = vsel %vm55, %v2745, 0.0
    %2750 = vadd.xlane.f32.xlu0 %v2749
    %v2751 = vpop.xlane.xlu0 %2750
    %v2752 = vsel %vm55, %v2746, 0.0
    %2753 = vadd.xlane.f32.xlu0 %v2752
    %v2754 = vpop.xlane.xlu0 %2753
    %v2755 = vmul.f32 %v2751, %v452
    %v2756 = vmul.f32 %v2754, %v452
    %v2757 = vsub.f32 %v2745, %v2755
    %v2758 = vsub.f32 %v2746, %v2756
    %v2759 = vmul.f32 %v2757, %v2757
    %v2760 = vmul.f32 %v2758, %v2758
    %v2761 = vsel %vm55, %v2759, 0.0
    %2762 = vadd.xlane.f32.xlu0 %v2761
    %v2763 = vpop.xlane.xlu0 %2762
    %v2764 = vsel %vm55, %v2760, 0.0
    %2765 = vadd.xlane.f32.xlu0 %v2764
    %v2766 = vpop.xlane.xlu0 %2765
    %v2767 = vmul.f32 %v2763, %v452
    %v2768 = vmul.f32 %v2766, %v452
    %v2769 = vadd.f32 %v2767, 1e-05
    %v2770 = vadd.f32 %v2768, 1e-05
    %v2771 = vrsqrt.pop %v2769
    %v2772 = vrsqrt.pop %v2770
    %v2773 = vmul.f32 %v2757, %v2771
    %v2774 = vmul.f32 %v2758, %v2772
    %v2775 = vmul.f32 %v2773, %v2747
    %v2776 = vmul.f32 %v2774, %v2747
    %v2777 = vadd.f32 %v2775, %v2748
    %v2778 = vadd.f32 %v2776, %v2748
    %v2779 = vld [vmem:[%s2120 + $0x120] sm:$0xff]
    %v2780 = vld [vmem:[%s2120 + $0x130] sm:$0xff]
    %v2781 = vld [vmem:[%s2120 + $0x140] sm:$0xff]
    %v2782 = vld [vmem:[%s2120 + $0x150] sm:$0xff]
    %v2783 = vld [vmem:[%s2120 + $0x160] sm:$0xff]
    %v2784 = vld [vmem:[%s2120 + $0x170] sm:$0xff]
    %v2785 = vld [vmem:[%s2120 + $0x180] sm:$0xff]
    %v2786 = vld [vmem:[%s2120 + $0x190] sm:$0xff]
    %v2787 = vld [vmem:[%s2120 + $0x10] ss:$0 sm:$0xff]
    %v2789 = vsel %vm55, %v2777, 0
    %v2792 = vsel %vm55, %v2778, 0
    %2794 = vmatprep.subr.mxu0 0.0
    %2795 = vmatpush1.msra.mxu0 %v2779
    %2796 = vmatprep.subr.mxu0 0.0
    %2797 = vmatpush1.msra.mxu0 %v2780
    %2798 = vmatprep.subr.mxu0 0.0
    %2799 = vmatpush1.msra.mxu0 %v2781
    %2800 = vmatprep.subr.mxu0 0.0
    %2801 = vmatpush1.msra.mxu0 %v2782
    %2802 = vmatprep.subr.mxu0 0.0
    %2803 = vmatpush1.msra.mxu0 %v2783
    %2804 = vmatprep.subr.mxu0 0.0
    %2805 = vmatpush1.msra.mxu0 %v2784
    %2806 = vmatprep.subr.mxu0 0.0
    %2807 = vmatpush1.msra.mxu0 %v2785
    %2808 = vmatprep.subr.mxu0 0.0
    %2809 = vmatpush1.msra.mxu0 %v2786
    %2810 = vmatprep.subr.mxu0 0.0
    %2811 = vmatpush1.msra.mxu0 0.0
    %2812 = vmatprep.subr.mxu0 0.0
    %2813 = vmatpush1.msra.mxu0 0.0
    %2814 = vmatprep.subr.mxu0 0.0
    %2815 = vmatpush1.msra.mxu0 0.0
    %2816 = vmatprep.subr.mxu0 0.0
    %2817 = vmatpush1.msra.mxu0 0.0
    %2818 = vmatprep.subr.mxu0 0.0
    %2819 = vmatpush1.msra.mxu0 0.0
    %2820 = vmatprep.subr.mxu0 0.0
    %2821 = vmatpush1.msra.mxu0 0.0
    %2822 = vmatprep.subr.mxu0 0.0
    %2823 = vmatpush1.msra.mxu0 0.0
    %2824 = vmatprep.subr.mxu0 0.0
    %2825 = vmatpush1.msra.mxu0 0.0
    %2826 = vmatprep.subr.mxu0 0.0
    %2827 = vmatpush1.msra.mxu0 0.0
    %2828 = vmatprep.subr.mxu0 0.0
    %2829 = vmatpush1.msra.mxu0 0.0
    %2830 = vmatprep.subr.mxu0 0.0
    %2831 = vmatpush1.msra.mxu0 0.0
    %2832 = vmatprep.subr.mxu0 0.0
    %2833 = vmatpush1.msra.mxu0 0.0
    %2834 = vmatprep.subr.mxu0 0.0
    %2835 = vmatpush1.msra.mxu0 0.0
    %2836 = vmatprep.subr.mxu0 0.0
    %2837 = vmatpush1.msra.mxu0 0.0
    %2838 = vmatprep.subr.mxu0 0.0
    %2839 = vmatpush1.msra.mxu0 0.0
    %2840 = vmatprep.subr.mxu0 0.0
    %2841 = vmatpush1.msra.mxu0 0.0
    %2842 = vmatprep.subr.mxu0 0.0
    %2843 = vmatpush1.msra.mxu0 0.0
    %2844 = vmatprep.subr.mxu0 0.0
    %2845 = vmatpush1.msra.mxu0 0.0
    %2846 = vmatprep.subr.mxu0 0.0
    %2847 = vmatpush1.msra.mxu0 0.0
    %2848 = vmatprep.subr.mxu0 0.0
    %2849 = vmatpush1.msra.mxu0 0.0
    %2850 = vmatprep.subr.mxu0 0.0
    %2851 = vmatpush1.msra.mxu0 0.0
    %2852 = vmatprep.subr.mxu0 0.0
    %2853 = vmatpush1.msra.mxu0 0.0
    %2854 = vmatprep.subr.mxu0 0.0
    %2855 = vmatpush1.msra.mxu0 0.0
    %2856 = vmatprep.subr.mxu0 0.0
    %2857 = vmatpush1.msra.mxu0 0.0
    %2858 = vmatprep.mubr.f32.mxu0 0.0
    %2859 = vmatmul.mubr.f32.gmra.mrb[0].mxu0 %v2789
    %v2860 = vpop.f32.mrb[0].mxu0
    %v2861 = vadd.f32 %v2787, %v2860
    %v2862 = vpop.f32.mrb[0].mxu0
    %2863 = vmatprep.mubr.f32.mxu0 0.0
    %2864 = vmatmul.mubr.f32.gmra.mrb[0].mxu0 %v2792
    %v2865 = vpop.f32.mrb[0].mxu0
    %v2866 = vadd.f32 %v2787, %v2865
    %v2867 = vpop.f32.mrb[0].mxu0
    %2868 = vdwg.mxu0
    %v2869 = vld [vmem:[%s2120 + $0x1a0] sm:$0xff]
    %v2870 = vld [vmem:[%s2120 + $0x1b0] sm:$0xff]
    %v2871 = vld [vmem:[%s2120 + $0x1c0] sm:$0xff]
    %v2872 = vld [vmem:[%s2120 + $0x1d0] sm:$0xff]
    %v2873 = vld [vmem:[%s2120 + $0x1e0] sm:$0xff]
    %v2874 = vld [vmem:[%s2120 + $0x1f0] sm:$0xff]
    %v2875 = vld [vmem:[%s2120 + $0x200] sm:$0xff]
    %v2876 = vld [vmem:[%s2120 + $0x210] sm:$0xff]
    %v2877 = vld [vmem:[%s2120 + $0x11] ss:$0 sm:$0xff]
    %2878 = vmatprep.subr.mxu0 0.0
    %2879 = vmatpush1.msra.mxu0 %v2869
    %2880 = vmatprep.subr.mxu0 0.0
    %2881 = vmatpush1.msra.mxu0 %v2870
    %2882 = vmatprep.subr.mxu0 0.0
    %2883 = vmatpush1.msra.mxu0 %v2871
    %2884 = vmatprep.subr.mxu0 0.0
    %2885 = vmatpush1.msra.mxu0 %v2872
    %2886 = vmatprep.subr.mxu0 0.0
    %2887 = vmatpush1.msra.mxu0 %v2873
    %2888 = vmatprep.subr.mxu0 0.0
    %2889 = vmatpush1.msra.mxu0 %v2874
    %2890 = vmatprep.subr.mxu0 0.0
    %2891 = vmatpush1.msra.mxu0 %v2875
    %2892 = vmatprep.subr.mxu0 0.0
    %2893 = vmatpush1.msra.mxu0 %v2876
    %2894 = vmatprep.subr.mxu0 0.0
    %2895 = vmatpush1.msra.mxu0 0.0
    %2896 = vmatprep.subr.mxu0 0.0
    %2897 = vmatpush1.msra.mxu0 0.0
    %2898 = vmatprep.subr.mxu0 0.0
    %2899 = vmatpush1.msra.mxu0 0.0
    %2900 = vmatprep.subr.mxu0 0.0
    %2901 = vmatpush1.msra.mxu0 0.0
    %2902 = vmatprep.subr.mxu0 0.0
    %2903 = vmatpush1.msra.mxu0 0.0
    %2904 = vmatprep.subr.mxu0 0.0
    %2905 = vmatpush1.msra.mxu0 0.0
    %2906 = vmatprep.subr.mxu0 0.0
    %2907 = vmatpush1.msra.mxu0 0.0
    %2908 = vmatprep.subr.mxu0 0.0
    %2909 = vmatpush1.msra.mxu0 0.0
    %2910 = vmatprep.subr.mxu0 0.0
    %2911 = vmatpush1.msra.mxu0 0.0
    %2912 = vmatprep.subr.mxu0 0.0
    %2913 = vmatpush1.msra.mxu0 0.0
    %2914 = vmatprep.subr.mxu0 0.0
    %2915 = vmatpush1.msra.mxu0 0.0
    %2916 = vmatprep.subr.mxu0 0.0
    %2917 = vmatpush1.msra.mxu0 0.0
    %2918 = vmatprep.subr.mxu0 0.0
    %2919 = vmatpush1.msra.mxu0 0.0
    %2920 = vmatprep.subr.mxu0 0.0
    %2921 = vmatpush1.msra.mxu0 0.0
    %2922 = vmatprep.subr.mxu0 0.0
    %2923 = vmatpush1.msra.mxu0 0.0
    %2924 = vmatprep.subr.mxu0 0.0
    %2925 = vmatpush1.msra.mxu0 0.0
    %2926 = vmatprep.subr.mxu0 0.0
    %2927 = vmatpush1.msra.mxu0 0.0
    %2928 = vmatprep.subr.mxu0 0.0
    %2929 = vmatpush1.msra.mxu0 0.0
    %2930 = vmatprep.subr.mxu0 0.0
    %2931 = vmatpush1.msra.mxu0 0.0
    %2932 = vmatprep.subr.mxu0 0.0
    %2933 = vmatpush1.msra.mxu0 0.0
    %2934 = vmatprep.subr.mxu0 0.0
    %2935 = vmatpush1.msra.mxu0 0.0
    %2936 = vmatprep.subr.mxu0 0.0
    %2937 = vmatpush1.msra.mxu0 0.0
    %2938 = vmatprep.subr.mxu0 0.0
    %2939 = vmatpush1.msra.mxu0 0.0
    %2940 = vmatprep.subr.mxu0 0.0
    %2941 = vmatpush1.msra.mxu0 0.0
    %2942 = vmatprep.mubr.f32.mxu0 0.0
    %2943 = vmatmul.mubr.f32.gmra.mrb[0].mxu0 %v1235
    %v2944 = vpop.f32.mrb[0].mxu0
    %v2945 = vadd.f32 %v2877, %v2944
    %v2946 = vpop.f32.mrb[0].mxu0
    %2947 = vmatprep.mubr.f32.mxu0 0.0
    %2948 = vmatmul.mubr.f32.gmra.mrb[0].mxu0 %v1238
    %v2949 = vpop.f32.mrb[0].mxu0
    %v2950 = vadd.f32 %v2877, %v2949
    %v2951 = vpop.f32.mrb[0].mxu0
    %2952 = vdwg.mxu0
    %v2953 = vld [vmem:[%s2120 + $0x220] sm:$0xff]
    %v2954 = vld [vmem:[%s2120 + $0x230] sm:$0xff]
    %v2955 = vld [vmem:[%s2120 + $0x240] sm:$0xff]
    %v2956 = vld [vmem:[%s2120 + $0x250] sm:$0xff]
    %v2957 = vld [vmem:[%s2120 + $0x260] sm:$0xff]
    %v2958 = vld [vmem:[%s2120 + $0x270] sm:$0xff]
    %v2959 = vld [vmem:[%s2120 + $0x280] sm:$0xff]
    %v2960 = vld [vmem:[%s2120 + $0x290] sm:$0xff]
    %v2961 = vld [vmem:[%s2120 + $0x12] ss:$0 sm:$0xff]
    %v2964 = vrot.slane %v2945, 6
    %v2965 = vrot.slane %v2950, 6
    %v2966 = vsel %vm1326, %v2964, %v2965
    %v2969 = vrot.slane %v2945, 4
    %v2970 = vrot.slane %v2950, 4
    %v2971 = vsel %vm1332, %v2969, %v2970
    %v2974 = vrot.slane %v2945, 2
    %v2975 = vrot.slane %v2950, 2
    %v2976 = vsel %vm1338, %v2974, %v2975
    %v2979 = vsel %vm1326, %v2950, %v2964
    %v2980 = vsel %vm1332, %v2966, %v2969
    %v2981 = vsel %vm1338, %v2971, %v2974
    %v2982 = vmul.f32 %v2945, %v437
    %v2983 = vmul.f32 %v2979, %v438
    %v2984 = vmul.f32 %v2980, %v439
    %v2985 = vmul.f32 %v2981, %v440
    %v2986 = vmul.f32 %v2976, %v441
    %v2987 = vmul.f32 %v2945, %v1358
    %v2988 = vmul.f32 %v2979, %v1360
    %v2989 = vmul.f32 %v2980, %v1362
    %v2990 = vmul.f32 %v2981, %v1364
    %v2991 = vmul.f32 %v2976, %v1366
    %v2993 = vsel %vm55, %v2861, 0
    %v2996 = vsel %vm55, %v2866, 0
    %v2999 = vsel %vm55, %v2982, 0
    %v3002 = vsel %vm55, %v2983, 0
    %v3005 = vsel %vm55, %v2984, 0
    %v3008 = vsel %vm55, %v2985, 0
    %v3011 = vsel %vm55, %v2986, 0
    %3013 = vmatprep.subr.mxu0 0.0
    %3014 = vmatpush1.xpose.msra.mxu0 %v2999
    %3015 = vmatprep.subr.mxu0 0.0
    %3016 = vmatpush1.xpose.msra.mxu0 %v3002
    %3017 = vmatprep.subr.mxu0 0.0
    %3018 = vmatpush1.xpose.msra.mxu0 %v3005
    %3019 = vmatprep.subr.mxu0 0.0
    %3020 = vmatpush1.xpose.msra.mxu0 %v3008
    %3021 = vmatprep.subr.mxu0 0.0
    %3022 = vmatpush1.xpose.msra.mxu0 %v3011
    %3023 = vmatprep.subr.mxu0 0.0
    %3024 = vmatpush1.xpose.msra.mxu0 0.0
    %3025 = vmatprep.subr.mxu0 0.0
    %3026 = vmatpush1.xpose.msra.mxu0 0.0
    %3027 = vmatprep.subr.mxu0 0.0
    %3028 = vmatpush1.xpose.msra.mxu0 0.0
    %3029 = vmatprep.subr.mxu0 0.0
    %3030 = vmatpush1.xpose.msra.mxu0 0.0
    %3031 = vmatprep.subr.mxu0 0.0
    %3032 = vmatpush1.xpose.msra.mxu0 0.0
    %3033 = vmatprep.subr.mxu0 0.0
    %3034 = vmatpush1.xpose.msra.mxu0 0.0
    %3035 = vmatprep.subr.mxu0 0.0
    %3036 = vmatpush1.xpose.msra.mxu0 0.0
    %3037 = vmatprep.subr.mxu0 0.0
    %3038 = vmatpush1.xpose.msra.mxu0 0.0
    %3039 = vmatprep.subr.mxu0 0.0
    %3040 = vmatpush1.xpose.msra.mxu0 0.0
    %3041 = vmatprep.subr.mxu0 0.0
    %3042 = vmatpush1.xpose.msra.mxu0 0.0
    %3043 = vmatprep.subr.mxu0 0.0
    %3044 = vmatpush1.xpose.msra.mxu0 0.0
    %3045 = vmatprep.subr.mxu0 0.0
    %3046 = vmatpush1.xpose.msra.mxu0 0.0
    %3047 = vmatprep.subr.mxu0 0.0
    %3048 = vmatpush1.xpose.msra.mxu0 0.0
    %3049 = vmatprep.subr.mxu0 0.0
    %3050 = vmatpush1.xpose.msra.mxu0 0.0
    %3051 = vmatprep.subr.mxu0 0.0
    %3052 = vmatpush1.xpose.msra.mxu0 0.0
    %3053 = vmatprep.subr.mxu0 0.0
    %3054 = vmatpush1.xpose.msra.mxu0 0.0
    %3055 = vmatprep.subr.mxu0 0.0
    %3056 = vmatpush1.xpose.msra.mxu0 0.0
    %3057 = vmatprep.subr.mxu0 0.0
    %3058 = vmatpush1.xpose.msra.mxu0 0.0
    %3059 = vmatprep.subr.mxu0 0.0
    %3060 = vmatpush1.xpose.msra.mxu0 0.0
    %3061 = vmatprep.subr.mxu0 0.0
    %3062 = vmatpush1.xpose.msra.mxu0 0.0
    %3063 = vmatprep.subr.mxu0 0.0
    %3064 = vmatpush1.xpose.msra.mxu0 0.0
    %3065 = vmatprep.subr.mxu0 0.0
    %3066 = vmatpush1.xpose.msra.mxu0 0.0
    %3067 = vmatprep.subr.mxu0 0.0
    %3068 = vmatpush1.xpose.msra.mxu0 0.0
    %3069 = vmatprep.subr.mxu0 0.0
    %3070 = vmatpush1.xpose.msra.mxu0 0.0
    %3071 = vmatprep.subr.mxu0 0.0
    %3072 = vmatpush1.xpose.msra.mxu0 0.0
    %3073 = vmatprep.subr.mxu0 0.0
    %3074 = vmatpush1.xpose.msra.mxu0 0.0
    %3075 = vmatprep.subr.mxu0 0.0
    %3076 = vmatpush1.xpose.msra.mxu0 0.0
    %3077 = vmatprep.mubr.f32.mxu0 0.0
    %3078 = vmatmul.mubr.f32.gmra.mrb[0].mxu0 %v2993
    %v3079 = vpop.f32.mrb[0].mxu0
    %v3080 = vadd.f32 %v421, %v3079
    %v3081 = vpop.f32.mrb[0].mxu0
    %3082 = vmatprep.mubr.f32.mxu0 0.0
    %3083 = vmatmul.mubr.f32.gmra.mrb[0].mxu0 %v2996
    %v3084 = vpop.f32.mrb[0].mxu0
    %v3085 = vadd.f32 %v422, %v3084
    %v3086 = vpop.f32.mrb[0].mxu0
    %3087 = vmatprep.mubr.f32.mxu0 0.0
    %3088 = vmatmul.mubr.f32.gmra.mrb[0].mxu0 %v2993
    %v3089 = vpop.f32.mrb[0].mxu0
    %v3090 = vadd.f32 %v423, %v3089
    %v3091 = vpop.f32.mrb[0].mxu0
    %3092 = vmatprep.mubr.f32.mxu0 0.0
    %3093 = vmatmul.mubr.f32.gmra.mrb[0].mxu0 %v2996
    %v3094 = vpop.f32.mrb[0].mxu0
    %v3095 = vadd.f32 %v424, %v3094
    %v3096 = vpop.f32.mrb[0].mxu0
    %3097 = vmatprep.mubr.f32.mxu0 0.0
    %3098 = vmatmul.mubr.f32.gmra.mrb[0].mxu0 %v2993
    %v3099 = vpop.f32.mrb[0].mxu0
    %v3100 = vadd.f32 %v425, %v3099
    %v3101 = vpop.f32.mrb[0].mxu0
    %3102 = vmatprep.mubr.f32.mxu0 0.0
    %3103 = vmatmul.mubr.f32.gmra.mrb[0].mxu0 %v2996
    %v3104 = vpop.f32.mrb[0].mxu0
    %v3105 = vadd.f32 %v426, %v3104
    %v3106 = vpop.f32.mrb[0].mxu0
    %3107 = vmatprep.mubr.f32.mxu0 0.0
    %3108 = vmatmul.mubr.f32.gmra.mrb[0].mxu0 %v2993
    %v3109 = vpop.f32.mrb[0].mxu0
    %v3110 = vadd.f32 %v427, %v3109
    %v3111 = vpop.f32.mrb[0].mxu0
    %3112 = vmatprep.mubr.f32.mxu0 0.0
    %3113 = vmatmul.mubr.f32.gmra.mrb[0].mxu0 %v2996
    %v3114 = vpop.f32.mrb[0].mxu0
    %v3115 = vadd.f32 %v428, %v3114
    %v3116 = vpop.f32.mrb[0].mxu0
    %3117 = vdwg.mxu0
    %v3118 = vsel %vm1503, %v3080, -inf
    %3119 = vmax.xlane.f32.xlu0 %v3118
    %v3120 = vpop.xlane.xlu0 %3119
    %v3121 = vsel %vm1503, %v3085, -inf
    %3122 = vmax.xlane.f32.xlu0 %v3121
    %v3123 = vpop.xlane.xlu0 %3122
    %v3124 = vsel %vm1503, %v3090, -inf
    %3125 = vmax.xlane.f32.xlu0 %v3124
    %v3126 = vpop.xlane.xlu0 %3125
    %v3127 = vsel %vm1503, %v3095, -inf
    %3128 = vmax.xlane.f32.xlu0 %v3127
    %v3129 = vpop.xlane.xlu0 %3128
    %v3130 = vsel %vm1503, %v3100, -inf
    %3131 = vmax.xlane.f32.xlu0 %v3130
    %v3132 = vpop.xlane.xlu0 %3131
    %v3133 = vsel %vm1503, %v3105, -inf
    %3134 = vmax.xlane.f32.xlu0 %v3133
    %v3135 = vpop.xlane.xlu0 %3134
    %v3136 = vsel %vm1503, %v3110, -inf
    %3137 = vmax.xlane.f32.xlu0 %v3136
    %v3138 = vpop.xlane.xlu0 %3137
    %v3139 = vsel %vm1503, %v3115, -inf
    %3140 = vmax.xlane.f32.xlu0 %v3139
    %v3141 = vpop.xlane.xlu0 %3140
    %v3142 = vsub.f32 %v3080, %v3120
    %v3143 = vsub.f32 %v3085, %v3123
    %v3144 = vsub.f32 %v3090, %v3126
    %v3145 = vsub.f32 %v3095, %v3129
    %v3146 = vsub.f32 %v3100, %v3132
    %v3147 = vsub.f32 %v3105, %v3135
    %v3148 = vsub.f32 %v3110, %v3138
    %v3149 = vsub.f32 %v3115, %v3141
    %v3150 = vmul.f32 %v3142, 1.442695
    %v3151 = vpow.pop %v3150
    %v3152 = vmul.f32 %v3143, 1.442695
    %v3153 = vpow.pop %v3152
    %v3154 = vmul.f32 %v3144, 1.442695
    %v3155 = vpow.pop %v3154
    %v3156 = vmul.f32 %v3145, 1.442695
    %v3157 = vpow.pop %v3156
    %v3158 = vmul.f32 %v3146, 1.442695
    %v3159 = vpow.pop %v3158
    %v3160 = vmul.f32 %v3147, 1.442695
    %v3161 = vpow.pop %v3160
    %v3162 = vmul.f32 %v3148, 1.442695
    %v3163 = vpow.pop %v3162
    %v3164 = vmul.f32 %v3149, 1.442695
    %v3165 = vpow.pop %v3164
    %v3166 = vsel %vm1503, %v3151, 0.0
    %3167 = vadd.xlane.f32.xlu0 %v3166
    %v3168 = vpop.xlane.xlu0 %3167
    %v3169 = vsel %vm1503, %v3153, 0.0
    %3170 = vadd.xlane.f32.xlu0 %v3169
    %v3171 = vpop.xlane.xlu0 %3170
    %v3172 = vsel %vm1503, %v3155, 0.0
    %3173 = vadd.xlane.f32.xlu0 %v3172
    %v3174 = vpop.xlane.xlu0 %3173
    %v3175 = vsel %vm1503, %v3157, 0.0
    %3176 = vadd.xlane.f32.xlu0 %v3175
    %v3177 = vpop.xlane.xlu0 %3176
    %v3178 = vsel %vm1503, %v3159, 0.0
    %3179 = vadd.xlane.f32.xlu0 %v3178
    %v3180 = vpop.xlane.xlu0 %3179
    %v3181 = vsel %vm1503, %v3161, 0.0
    %3182 = vadd.xlane.f32.xlu0 %v3181
    %v3183 = vpop.xlane.xlu0 %3182
    %v3184 = vsel %vm1503, %v3163, 0.0
    %3185 = vadd.xlane.f32.xlu0 %v3184
    %v3186 = vpop.xlane.xlu0 %3185
    %v3187 = vsel %vm1503, %v3165, 0.0
    %3188 = vadd.xlane.f32.xlu0 %v3187
    %v3189 = vpop.xlane.xlu0 %3188
    %v3190 = vrcp.pop %v3168
    %v3191 = vrcp.pop %v3171
    %v3192 = vrcp.pop %v3174
    %v3193 = vrcp.pop %v3177
    %v3194 = vrcp.pop %v3180
    %v3195 = vrcp.pop %v3183
    %v3196 = vrcp.pop %v3186
    %v3197 = vrcp.pop %v3189
    %v3198 = vmul.f32 %v3151, %v3190
    %v3199 = vmul.f32 %v3153, %v3191
    %v3200 = vmul.f32 %v3155, %v3192
    %v3201 = vmul.f32 %v3157, %v3193
    %v3202 = vmul.f32 %v3159, %v3194
    %v3203 = vmul.f32 %v3161, %v3195
    %v3204 = vmul.f32 %v3163, %v3196
    %v3205 = vmul.f32 %v3165, %v3197
    %3211 = vrot.lane.b32.xlu0 %v2987, 64
    %v3212 = vpop.permute.xlu0 %3211
    %3213 = vrot.lane.b32.xlu0 %v2988, 64
    %v3214 = vpop.permute.xlu0 %3213
    %3215 = vrot.lane.b32.xlu0 %v2989, 64
    %v3216 = vpop.permute.xlu0 %3215
    %3217 = vrot.lane.b32.xlu0 %v2990, 64
    %v3218 = vpop.permute.xlu0 %3217
    %3219 = vrot.lane.b32.xlu0 %v2991, 64
    %v3220 = vpop.permute.xlu0 %3219
    %v3227 = vsel %vm1503, %v3198, 0
    %v3230 = vsel %vm1503, %v3199, 0
    %v3233 = vsel %vm1503, %v3200, 0
    %v3236 = vsel %vm1503, %v3201, 0
    %v3239 = vsel %vm1503, %v3202, 0
    %v3242 = vsel %vm1503, %v3203, 0
    %v3245 = vsel %vm1503, %v3204, 0
    %v3248 = vsel %vm1503, %v3205, 0
    %3250 = vmatprep.subr.mxu0 0.0
    %3251 = vmatpush1.msra.mxu0 %v3212
    %3252 = vmatprep.subr.mxu0 0.0
    %3253 = vmatpush1.msra.mxu0 %v3214
    %3254 = vmatprep.subr.mxu0 0.0
    %3255 = vmatpush1.msra.mxu0 %v3216
    %3256 = vmatprep.subr.mxu0 0.0
    %3257 = vmatpush1.msra.mxu0 %v3218
    %3258 = vmatprep.subr.mxu0 0.0
    %3259 = vmatpush1.msra.mxu0 %v3220
    %3260 = vmatprep.subr.mxu0 0.0
    %3261 = vmatpush1.msra.mxu0 0.0
    %3262 = vmatprep.subr.mxu0 0.0
    %3263 = vmatpush1.msra.mxu0 0.0
    %3264 = vmatprep.subr.mxu0 0.0
    %3265 = vmatpush1.msra.mxu0 0.0
    %3266 = vmatprep.subr.mxu0 0.0
    %3267 = vmatpush1.msra.mxu0 0.0
    %3268 = vmatprep.subr.mxu0 0.0
    %3269 = vmatpush1.msra.mxu0 0.0
    %3270 = vmatprep.subr.mxu0 0.0
    %3271 = vmatpush1.msra.mxu0 0.0
    %3272 = vmatprep.subr.mxu0 0.0
    %3273 = vmatpush1.msra.mxu0 0.0
    %3274 = vmatprep.subr.mxu0 0.0
    %3275 = vmatpush1.msra.mxu0 0.0
    %3276 = vmatprep.subr.mxu0 0.0
    %3277 = vmatpush1.msra.mxu0 0.0
    %3278 = vmatprep.subr.mxu0 0.0
    %3279 = vmatpush1.msra.mxu0 0.0
    %3280 = vmatprep.subr.mxu0 0.0
    %3281 = vmatpush1.msra.mxu0 0.0
    %3282 = vmatprep.subr.mxu0 0.0
    %3283 = vmatpush1.msra.mxu0 0.0
    %3284 = vmatprep.subr.mxu0 0.0
    %3285 = vmatpush1.msra.mxu0 0.0
    %3286 = vmatprep.subr.mxu0 0.0
    %3287 = vmatpush1.msra.mxu0 0.0
    %3288 = vmatprep.subr.mxu0 0.0
    %3289 = vmatpush1.msra.mxu0 0.0
    %3290 = vmatprep.subr.mxu0 0.0
    %3291 = vmatpush1.msra.mxu0 0.0
    %3292 = vmatprep.subr.mxu0 0.0
    %3293 = vmatpush1.msra.mxu0 0.0
    %3294 = vmatprep.subr.mxu0 0.0
    %3295 = vmatpush1.msra.mxu0 0.0
    %3296 = vmatprep.subr.mxu0 0.0
    %3297 = vmatpush1.msra.mxu0 0.0
    %3298 = vmatprep.subr.mxu0 0.0
    %3299 = vmatpush1.msra.mxu0 0.0
    %3300 = vmatprep.subr.mxu0 0.0
    %3301 = vmatpush1.msra.mxu0 0.0
    %3302 = vmatprep.subr.mxu0 0.0
    %3303 = vmatpush1.msra.mxu0 0.0
    %3304 = vmatprep.subr.mxu0 0.0
    %3305 = vmatpush1.msra.mxu0 0.0
    %3306 = vmatprep.subr.mxu0 0.0
    %3307 = vmatpush1.msra.mxu0 0.0
    %3308 = vmatprep.subr.mxu0 0.0
    %3309 = vmatpush1.msra.mxu0 0.0
    %3310 = vmatprep.subr.mxu0 0.0
    %3311 = vmatpush1.msra.mxu0 0.0
    %3312 = vmatprep.subr.mxu0 0.0
    %3313 = vmatpush1.msra.mxu0 0.0
    %3314 = vmatprep.mubr.f32.mxu0 0.0
    %3315 = vmatmul.mubr.f32.gmra.mrb[0].mxu0 %v3227
    %v3316 = vpop.f32.mrb[0].mxu0
    %v3317 = vadd.f32 0.0, %v3316
    %v3318 = vpop.f32.mrb[0].mxu0
    %3319 = vmatprep.mubr.f32.mxu0 0.0
    %3320 = vmatmul.mubr.f32.gmra.mrb[0].mxu0 %v3230
    %v3321 = vpop.f32.mrb[0].mxu0
    %v3322 = vadd.f32 0.0, %v3321
    %v3323 = vpop.f32.mrb[0].mxu0
    %3324 = vmatprep.mubr.f32.mxu0 0.0
    %3325 = vmatmul.mubr.f32.gmra.mrb[0].mxu0 %v3233
    %v3326 = vpop.f32.mrb[0].mxu0
    %v3327 = vadd.f32 0.0, %v3326
    %v3328 = vpop.f32.mrb[0].mxu0
    %3329 = vmatprep.mubr.f32.mxu0 0.0
    %3330 = vmatmul.mubr.f32.gmra.mrb[0].mxu0 %v3236
    %v3331 = vpop.f32.mrb[0].mxu0
    %v3332 = vadd.f32 0.0, %v3331
    %v3333 = vpop.f32.mrb[0].mxu0
    %3334 = vmatprep.mubr.f32.mxu0 0.0
    %3335 = vmatmul.mubr.f32.gmra.mrb[0].mxu0 %v3239
    %v3336 = vpop.f32.mrb[0].mxu0
    %v3337 = vadd.f32 0.0, %v3336
    %v3338 = vpop.f32.mrb[0].mxu0
    %3339 = vmatprep.mubr.f32.mxu0 0.0
    %3340 = vmatmul.mubr.f32.gmra.mrb[0].mxu0 %v3242
    %v3341 = vpop.f32.mrb[0].mxu0
    %v3342 = vadd.f32 0.0, %v3341
    %v3343 = vpop.f32.mrb[0].mxu0
    %3344 = vmatprep.mubr.f32.mxu0 0.0
    %3345 = vmatmul.mubr.f32.gmra.mrb[0].mxu0 %v3245
    %v3346 = vpop.f32.mrb[0].mxu0
    %v3347 = vadd.f32 0.0, %v3346
    %v3348 = vpop.f32.mrb[0].mxu0
    %3349 = vmatprep.mubr.f32.mxu0 0.0
    %3350 = vmatmul.mubr.f32.gmra.mrb[0].mxu0 %v3248
    %v3351 = vpop.f32.mrb[0].mxu0
    %v3352 = vadd.f32 0.0, %v3351
    %v3353 = vpop.f32.mrb[0].mxu0
    %3354 = vdwg.mxu0
    %v3355 = vadd.f32 %v3317, %v3327
    %v3356 = vadd.f32 %v3322, %v3332
    %v3357 = vadd.f32 %v3355, %v3337
    %v3358 = vadd.f32 %v3356, %v3342
    %v3359 = vadd.f32 %v3357, %v3347
    %v3360 = vadd.f32 %v3358, %v3352
    %v3362 = vsel %vm55, %v3359, 0
    %v3365 = vsel %vm55, %v3360, 0
    %3367 = vmatprep.subr.mxu0 0.0
    %3368 = vmatpush1.msra.mxu0 %v2953
    %3369 = vmatprep.subr.mxu0 0.0
    %3370 = vmatpush1.msra.mxu0 %v2954
    %3371 = vmatprep.subr.mxu0 0.0
    %3372 = vmatpush1.msra.mxu0 %v2955
    %3373 = vmatprep.subr.mxu0 0.0
    %3374 = vmatpush1.msra.mxu0 %v2956
    %3375 = vmatprep.subr.mxu0 0.0
    %3376 = vmatpush1.msra.mxu0 %v2957
    %3377 = vmatprep.subr.mxu0 0.0
    %3378 = vmatpush1.msra.mxu0 %v2958
    %3379 = vmatprep.subr.mxu0 0.0
    %3380 = vmatpush1.msra.mxu0 %v2959
    %3381 = vmatprep.subr.mxu0 0.0
    %3382 = vmatpush1.msra.mxu0 %v2960
    %3383 = vmatprep.subr.mxu0 0.0
    %3384 = vmatpush1.msra.mxu0 0.0
    %3385 = vmatprep.subr.mxu0 0.0
    %3386 = vmatpush1.msra.mxu0 0.0
    %3387 = vmatprep.subr.mxu0 0.0
    %3388 = vmatpush1.msra.mxu0 0.0
    %3389 = vmatprep.subr.mxu0 0.0
    %3390 = vmatpush1.msra.mxu0 0.0
    %3391 = vmatprep.subr.mxu0 0.0
    %3392 = vmatpush1.msra.mxu0 0.0
    %3393 = vmatprep.subr.mxu0 0.0
    %3394 = vmatpush1.msra.mxu0 0.0
    %3395 = vmatprep.subr.mxu0 0.0
    %3396 = vmatpush1.msra.mxu0 0.0
    %3397 = vmatprep.subr.mxu0 0.0
    %3398 = vmatpush1.msra.mxu0 0.0
    %3399 = vmatprep.subr.mxu0 0.0
    %3400 = vmatpush1.msra.mxu0 0.0
    %3401 = vmatprep.subr.mxu0 0.0
    %3402 = vmatpush1.msra.mxu0 0.0
    %3403 = vmatprep.subr.mxu0 0.0
    %3404 = vmatpush1.msra.mxu0 0.0
    %3405 = vmatprep.subr.mxu0 0.0
    %3406 = vmatpush1.msra.mxu0 0.0
    %3407 = vmatprep.subr.mxu0 0.0
    %3408 = vmatpush1.msra.mxu0 0.0
    %3409 = vmatprep.subr.mxu0 0.0
    %3410 = vmatpush1.msra.mxu0 0.0
    %3411 = vmatprep.subr.mxu0 0.0
    %3412 = vmatpush1.msra.mxu0 0.0
    %3413 = vmatprep.subr.mxu0 0.0
    %3414 = vmatpush1.msra.mxu0 0.0
    %3415 = vmatprep.subr.mxu0 0.0
    %3416 = vmatpush1.msra.mxu0 0.0
    %3417 = vmatprep.subr.mxu0 0.0
    %3418 = vmatpush1.msra.mxu0 0.0
    %3419 = vmatprep.subr.mxu0 0.0
    %3420 = vmatpush1.msra.mxu0 0.0
    %3421 = vmatprep.subr.mxu0 0.0
    %3422 = vmatpush1.msra.mxu0 0.0
    %3423 = vmatprep.subr.mxu0 0.0
    %3424 = vmatpush1.msra.mxu0 0.0
    %3425 = vmatprep.subr.mxu0 0.0
    %3426 = vmatpush1.msra.mxu0 0.0
    %3427 = vmatprep.subr.mxu0 0.0
    %3428 = vmatpush1.msra.mxu0 0.0
    %3429 = vmatprep.subr.mxu0 0.0
    %3430 = vmatpush1.msra.mxu0 0.0
    %3431 = vmatprep.mubr.f32.mxu0 0.0
    %3432 = vmatmul.mubr.f32.gmra.mrb[0].mxu0 %v3362
    %v3433 = vpop.f32.mrb[0].mxu0
    %v3434 = vadd.f32 %v2961, %v3433
    %v3435 = vpop.f32.mrb[0].mxu0
    %3436 = vmatprep.mubr.f32.mxu0 0.0
    %3437 = vmatmul.mubr.f32.gmra.mrb[0].mxu0 %v3365
    %v3438 = vpop.f32.mrb[0].mxu0
    %v3439 = vadd.f32 %v2961, %v3438
    %v3440 = vpop.f32.mrb[0].mxu0
    %3441 = vdwg.mxu0
    %v3442 = vadd.f32 %v2745, %v3434
    %v3443 = vadd.f32 %v2746, %v3439
    %v3444 = vld [vmem:[%s2120 + $0x4] ss:$0 sm:$0xff]
    %v3445 = vld [vmem:[%s2120 + $0x5] ss:$0 sm:$0xff]
    %v3446 = vsel %vm55, %v3442, 0.0
    %3447 = vadd.xlane.f32.xlu0 %v3446
    %v3448 = vpop.xlane.xlu0 %3447
    %v3449 = vsel %vm55, %v3443, 0.0
    %3450 = vadd.xlane.f32.xlu0 %v3449
    %v3451 = vpop.xlane.xlu0 %3450
    %v3452 = vmul.f32 %v3448, %v452
    %v3453 = vmul.f32 %v3451, %v452
    %v3454 = vsub.f32 %v3442, %v3452
    %v3455 = vsub.f32 %v3443, %v3453
    %v3456 = vmul.f32 %v3454, %v3454
    %v3457 = vmul.f32 %v3455, %v3455
    %v3458 = vsel %vm55, %v3456, 0.0
    %3459 = vadd.xlane.f32.xlu0 %v3458
    %v3460 = vpop.xlane.xlu0 %3459
    %v3461 = vsel %vm55, %v3457, 0.0
    %3462 = vadd.xlane.f32.xlu0 %v3461
    %v3463 = vpop.xlane.xlu0 %3462
    %v3464 = vmul.f32 %v3460, %v452
    %v3465 = vmul.f32 %v3463, %v452
    %v3466 = vadd.f32 %v3464, 1e-05
    %v3467 = vadd.f32 %v3465, 1e-05
    %v3468 = vrsqrt.pop %v3466
    %v3469 = vrsqrt.pop %v3467
    %v3470 = vmul.f32 %v3454, %v3468
    %v3471 = vmul.f32 %v3455, %v3469
    %v3472 = vmul.f32 %v3470, %v3444
    %v3473 = vmul.f32 %v3471, %v3444
    %v3474 = vadd.f32 %v3472, %v3445
    %v3475 = vadd.f32 %v3473, %v3445
    %v3476 = vld [vmem:[%s2120 + $0x2a0] sm:$0xff]
    %v3477 = vld [vmem:[%s2120 + $0x2a8] sm:$0xff]
    %v3478 = vld [vmem:[%s2120 + $0x2b0] sm:$0xff]
    %v3479 = vld [vmem:[%s2120 + $0x2b8] sm:$0xff]
    %v3480 = vld [vmem:[%s2120 + $0x2c0] sm:$0xff]
    %v3481 = vld [vmem:[%s2120 + $0x2c8] sm:$0xff]
    %v3482 = vld [vmem:[%s2120 + $0x2d0] sm:$0xff]
    %v3483 = vld [vmem:[%s2120 + $0x2d8] sm:$0xff]
    %v3484 = vld [vmem:[%s2120 + $0x2e0] sm:$0xff]
    %v3485 = vld [vmem:[%s2120 + $0x2e8] sm:$0xff]
    %v3486 = vld [vmem:[%s2120 + $0x2f0] sm:$0xff]
    %v3487 = vld [vmem:[%s2120 + $0x2f8] sm:$0xff]
    %v3488 = vld [vmem:[%s2120 + $0x300] sm:$0xff]
    %v3489 = vld [vmem:[%s2120 + $0x308] sm:$0xff]
    %v3490 = vld [vmem:[%s2120 + $0x310] sm:$0xff]
    %v3491 = vld [vmem:[%s2120 + $0x318] sm:$0xff]
    %s3492 = scalar_lea.vmem %s2120, 19 [#allocation4]
    %v3493 = vld [vmem:[%s3492] ss:$8 sm:$0x3]
    %v3495 = vlaneseq
    %v3496 = vshrl.u32 %v3495, 7
    %v3497 = vsub.s32 0, %v3496
    %v3498 = vrot.slane %v3493, %v3497
    %v3499 = vlaneseq
    %v3500 = vshrl.u32 %v3499, 7
    %v3501 = vsub.s32 1, %v3500
    %v3502 = vrot.slane %v3493, %v3501
    %v3506 = vsel %vm55, %v3474, 0
    %v3509 = vsel %vm55, %v3475, 0
    %3511 = vmatprep.subr.mxu0 %v3477
    %3512 = vmatpush1.msra.mxu0 %v3476
    %3513 = vmatprep.subr.mxu0 %v3479
    %3514 = vmatpush1.msra.mxu0 %v3478
    %3515 = vmatprep.subr.mxu0 %v3481
    %3516 = vmatpush1.msra.mxu0 %v3480
    %3517 = vmatprep.subr.mxu0 %v3483
    %3518 = vmatpush1.msra.mxu0 %v3482
    %3519 = vmatprep.subr.mxu0 %v3485
    %3520 = vmatpush1.msra.mxu0 %v3484
    %3521 = vmatprep.subr.mxu0 %v3487
    %3522 = vmatpush1.msra.mxu0 %v3486
    %3523 = vmatprep.subr.mxu0 %v3489
    %3524 = vmatpush1.msra.mxu0 %v3488
    %3525 = vmatprep.subr.mxu0 %v3491
    %3526 = vmatpush1.msra.mxu0 %v3490
    %3527 = vmatprep.subr.mxu0 0.0
    %3528 = vmatpush1.msra.mxu0 0.0
    %3529 = vmatprep.subr.mxu0 0.0
    %3530 = vmatpush1.msra.mxu0 0.0
    %3531 = vmatprep.subr.mxu0 0.0
    %3532 = vmatpush1.msra.mxu0 0.0
    %3533 = vmatprep.subr.mxu0 0.0
    %3534 = vmatpush1.msra.mxu0 0.0
    %3535 = vmatprep.subr.mxu0 0.0
    %3536 = vmatpush1.msra.mxu0 0.0
    %3537 = vmatprep.subr.mxu0 0.0
    %3538 = vmatpush1.msra.mxu0 0.0
    %3539 = vmatprep.subr.mxu0 0.0
    %3540 = vmatpush1.msra.mxu0 0.0
    %3541 = vmatprep.subr.mxu0 0.0
    %3542 = vmatpush1.msra.mxu0 0.0
    %3543 = vmatprep.subr.mxu0 0.0
    %3544 = vmatpush1.msra.mxu0 0.0
    %3545 = vmatprep.subr.mxu0 0.0
    %3546 = vmatpush1.msra.mxu0 0.0
    %3547 = vmatprep.subr.mxu0 0.0
    %3548 = vmatpush1.msra.mxu0 0.0
    %3549 = vmatprep.subr.mxu0 0.0
    %3550 = vmatpush1.msra.mxu0 0.0
    %3551 = vmatprep.subr.mxu0 0.0
    %3552 = vmatpush1.msra.mxu0 0.0
    %3553 = vmatprep.subr.mxu0 0.0
    %3554 = vmatpush1.msra.mxu0 0.0
    %3555 = vmatprep.subr.mxu0 0.0
    %3556 = vmatpush1.msra.mxu0 0.0
    %3557 = vmatprep.subr.mxu0 0.0
    %3558 = vmatpush1.msra.mxu0 0.0
    %3559 = vmatprep.subr.mxu0 0.0
    %3560 = vmatpush1.msra.mxu0 0.0
    %3561 = vmatprep.subr.mxu0 0.0
    %3562 = vmatpush1.msra.mxu0 0.0
    %3563 = vmatprep.subr.mxu0 0.0
    %3564 = vmatpush1.msra.mxu0 0.0
    %3565 = vmatprep.subr.mxu0 0.0
    %3566 = vmatpush1.msra.mxu0 0.0
    %3567 = vmatprep.subr.mxu0 0.0
    %3568 = vmatpush1.msra.mxu0 0.0
    %3569 = vmatprep.subr.mxu0 0.0
    %3570 = vmatpush1.msra.mxu0 0.0
    %3571 = vmatprep.subr.mxu0 0.0
    %3572 = vmatpush1.msra.mxu0 0.0
    %3573 = vmatprep.subr.mxu0 0.0
    %3574 = vmatpush1.msra.mxu0 0.0
    %3575 = vmatprep.mubr.f32.mxu0 0.0
    %3576 = vmatmul.mubr.f32.gmra.mrb[0].mxu0 %v3506
    %v3577 = vpop.f32.mrb[0].mxu0
    %v3578 = vadd.f32 %v3498, %v3577
    %v3579 = vpop.f32.mrb[0].mxu0
    %v3580 = vadd.f32 %v3502, %v3579
    %3581 = vmatprep.mubr.f32.mxu0 0.0
    %3582 = vmatmul.mubr.f32.gmra.mrb[0].mxu0 %v3509
    %v3583 = vpop.f32.mrb[0].mxu0
    %v3584 = vadd.f32 %v3498, %v3583
    %v3585 = vpop.f32.mrb[0].mxu0
    %v3586 = vadd.f32 %v3502, %v3585
    %3587 = vdwg.mxu0
    %v3588 = vmul.f32 %v3578, 0.5
    %v3589 = vmul.f32 %v3580, 0.5
    %v3590 = vmul.f32 %v3584, 0.5
    %v3591 = vmul.f32 %v3586, 0.5
    %v3592 = vmul.f32 %v3578, 0.044715
    %v3593 = vmul.f32 %v3580, 0.044715
    %v3594 = vmul.f32 %v3584, 0.044715
    %v3595 = vmul.f32 %v3586, 0.044715
    %v3596 = vmul.f32 %v3592, %v3578
    %v3597 = vmul.f32 %v3593, %v3580
    %v3598 = vmul.f32 %v3594, %v3584
    %v3599 = vmul.f32 %v3595, %v3586
    %v3600 = vmul.f32 %v3596, %v3578
    %v3601 = vmul.f32 %v3597, %v3580
    %v3602 = vmul.f32 %v3598, %v3584
    %v3603 = vmul.f32 %v3599, %v3586
    %v3604 = vadd.f32 %v3578, %v3600
    %v3605 = vadd.f32 %v3580, %v3601
    %v3606 = vadd.f32 %v3584, %v3602
    %v3607 = vadd.f32 %v3586, %v3603
    %v3608 = vmul.f32 %v3604, 0.7978846
    %v3609 = vmul.f32 %v3605, 0.7978846
    %v3610 = vmul.f32 %v3606, 0.7978846
    %v3611 = vmul.f32 %v3607, 0.7978846
    %v3612 = vtanh.pop %v3608
    %v3613 = vtanh.pop %v3609
    %v3614 = vtanh.pop %v3610
    %v3615 = vtanh.pop %v3611
    %v3616 = vadd.f32 %v3612, 1.0
    %v3617 = vadd.f32 %v3613, 1.0
    %v3618 = vadd.f32 %v3614, 1.0
    %v3619 = vadd.f32 %v3615, 1.0
    %v3620 = vmul.f32 %v3588, %v3616
    %v3621 = vmul.f32 %v3589, %v3617
    %v3622 = vmul.f32 %v3590, %v3618
    %v3623 = vmul.f32 %v3591, %v3619
    %v3624 = vld [vmem:[%s2120 + $0x320] sm:$0xff]
    %v3625 = vld [vmem:[%s2120 + $0x330] sm:$0xff]
    %v3626 = vld [vmem:[%s2120 + $0x340] sm:$0xff]
    %v3627 = vld [vmem:[%s2120 + $0x350] sm:$0xff]
    %v3628 = vld [vmem:[%s2120 + $0x360] sm:$0xff]
    %v3629 = vld [vmem:[%s2120 + $0x370] sm:$0xff]
    %v3630 = vld [vmem:[%s2120 + $0x380] sm:$0xff]
    %v3631 = vld [vmem:[%s2120 + $0x390] sm:$0xff]
    %v3632 = vld [vmem:[%s2120 + $0x3a0] sm:$0xff]
    %v3633 = vld [vmem:[%s2120 + $0x3b0] sm:$0xff]
    %v3634 = vld [vmem:[%s2120 + $0x3c0] sm:$0xff]
    %v3635 = vld [vmem:[%s2120 + $0x3d0] sm:$0xff]
    %v3636 = vld [vmem:[%s2120 + $0x3e0] sm:$0xff]
    %v3637 = vld [vmem:[%s2120 + $0x3f0] sm:$0xff]
    %v3638 = vld [vmem:[%s2120 + $0x400] sm:$0xff]
    %v3639 = vld [vmem:[%s2120 + $0x410] sm:$0xff]
    %v3640 = vld [vmem:[%s2120 + $0x420] sm:$0xff]
    %v3641 = vld [vmem:[%s2120 + $0x430] sm:$0xff]
    %v3642 = vld [vmem:[%s2120 + $0x440] sm:$0xff]
    %v3643 = vld [vmem:[%s2120 + $0x450] sm:$0xff]
    %v3644 = vld [vmem:[%s2120 + $0x460] sm:$0xff]
    %v3645 = vld [vmem:[%s2120 + $0x470] sm:$0xff]
    %v3646 = vld [vmem:[%s2120 + $0x480] sm:$0xff]
    %v3647 = vld [vmem:[%s2120 + $0x490] sm:$0xff]
    %v3648 = vld [vmem:[%s2120 + $0x4a0] sm:$0xff]
    %v3649 = vld [vmem:[%s2120 + $0x4b0] sm:$0xff]
    %v3650 = vld [vmem:[%s2120 + $0x4c0] sm:$0xff]
    %v3651 = vld [vmem:[%s2120 + $0x4d0] sm:$0xff]
    %v3652 = vld [vmem:[%s2120 + $0x4e0] sm:$0xff]
    %v3653 = vld [vmem:[%s2120 + $0x4f0] sm:$0xff]
    %v3654 = vld [vmem:[%s2120 + $0x500] sm:$0xff]
    %v3655 = vld [vmem:[%s2120 + $0x510] sm:$0xff]
    %v3656 = vld [vmem:[%s2120 + $0x14] ss:$0 sm:$0xff]
    %3657 = vmatprep.subr.mxu0 0.0
    %3658 = vmatpush1.msra.mxu0 %v3624
    %3659 = vmatprep.subr.mxu0 0.0
    %3660 = vmatpush1.msra.mxu0 %v3625
    %3661 = vmatprep.subr.mxu0 0.0
    %3662 = vmatpush1.msra.mxu0 %v3626
    %3663 = vmatprep.subr.mxu0 0.0
    %3664 = vmatpush1.msra.mxu0 %v3627
    %3665 = vmatprep.subr.mxu0 0.0
    %3666 = vmatpush1.msra.mxu0 %v3628
    %3667 = vmatprep.subr.mxu0 0.0
    %3668 = vmatpush1.msra.mxu0 %v3629
    %3669 = vmatprep.subr.mxu0 0.0
    %3670 = vmatpush1.msra.mxu0 %v3630
    %3671 = vmatprep.subr.mxu0 0.0
    %3672 = vmatpush1.msra.mxu0 %v3631
    %3673 = vmatprep.subr.mxu0 0.0
    %3674 = vmatpush1.msra.mxu0 %v3632
    %3675 = vmatprep.subr.mxu0 0.0
    %3676 = vmatpush1.msra.mxu0 %v3633
    %3677 = vmatprep.subr.mxu0 0.0
    %3678 = vmatpush1.msra.mxu0 %v3634
    %3679 = vmatprep.subr.mxu0 0.0
    %3680 = vmatpush1.msra.mxu0 %v3635
    %3681 = vmatprep.subr.mxu0 0.0
    %3682 = vmatpush1.msra.mxu0 %v3636
    %3683 = vmatprep.subr.mxu0 0.0
    %3684 = vmatpush1.msra.mxu0 %v3637
    %3685 = vmatprep.subr.mxu0 0.0
    %3686 = vmatpush1.msra.mxu0 %v3638
    %3687 = vmatprep.subr.mxu0 0.0
    %3688 = vmatpush1.msra.mxu0 %v3639
    %3689 = vmatprep.subr.mxu0 0.0
    %3690 = vmatpush1.msra.mxu0 %v3640
    %3691 = vmatprep.subr.mxu0 0.0
    %3692 = vmatpush1.msra.mxu0 %v3641
    %3693 = vmatprep.subr.mxu0 0.0
    %3694 = vmatpush1.msra.mxu0 %v3642
    %3695 = vmatprep.subr.mxu0 0.0
    %3696 = vmatpush1.msra.mxu0 %v3643
    %3697 = vmatprep.subr.mxu0 0.0
    %3698 = vmatpush1.msra.mxu0 %v3644
    %3699 = vmatprep.subr.mxu0 0.0
    %3700 = vmatpush1.msra.mxu0 %v3645
    %3701 = vmatprep.subr.mxu0 0.0
    %3702 = vmatpush1.msra.mxu0 %v3646
    %3703 = vmatprep.subr.mxu0 0.0
    %3704 = vmatpush1.msra.mxu0 %v3647
    %3705 = vmatprep.subr.mxu0 0.0
    %3706 = vmatpush1.msra.mxu0 %v3648
    %3707 = vmatprep.subr.mxu0 0.0
    %3708 = vmatpush1.msra.mxu0 %v3649
    %3709 = vmatprep.subr.mxu0 0.0
    %3710 = vmatpush1.msra.mxu0 %v3650
    %3711 = vmatprep.subr.mxu0 0.0
    %3712 = vmatpush1.msra.mxu0 %v3651
    %3713 = vmatprep.subr.mxu0 0.0
    %3714 = vmatpush1.msra.mxu0 %v3652
    %3715 = vmatprep.subr.mxu0 0.0
    %3716 = vmatpush1.msra.mxu0 %v3653
    %3717 = vmatprep.subr.mxu0 0.0
    %3718 = vmatpush1.msra.mxu0 %v3654
    %3719 = vmatprep.subr.mxu0 0.0
    %3720 = vmatpush1.msra.mxu0 %v3655
    %3721 = vmatprep.mubr.f32.mxu0 %v3621
    %3722 = vmatmul.mubr.f32.gmra.mrb[0].mxu0 %v3620
    %v3723 = vpop.f32.mrb[0].mxu0
    %v3724 = vadd.f32 %v3656, %v3723
    %v3725 = vpop.f32.mrb[0].mxu0
    %3726 = vmatprep.mubr.f32.mxu0 %v3623
    %3727 = vmatmul.mubr.f32.gmra.mrb[0].mxu0 %v3622
    %v3728 = vpop.f32.mrb[0].mxu0
    %v3729 = vadd.f32 %v3656, %v3728
    %v3730 = vpop.f32.mrb[0].mxu0
    %3731 = vdwg.mxu0
    %v3732 = vadd.f32 %v3442, %v3724
    %v3733 = vadd.f32 %v3443, %v3729
    %v3734 = vld [vmem:[#allocation2 + $0x3] ss:$0 sm:$0xff]
    %v3735 = vld [vmem:[#allocation2 + $0x4] ss:$0 sm:$0xff]
    %v3736 = vsel %vm55, %v3732, 0.0
    %3737 = vadd.xlane.f32.xlu0 %v3736
    %v3738 = vpop.xlane.xlu0 %3737
    %v3739 = vsel %vm55, %v3733, 0.0
    %3740 = vadd.xlane.f32.xlu0 %v3739
    %v3741 = vpop.xlane.xlu0 %3740
    %v3742 = vmul.f32 %v3738, %v452
    %v3743 = vmul.f32 %v3741, %v452
    %v3744 = vsub.f32 %v3732, %v3742
    %v3745 = vsub.f32 %v3733, %v3743
    %v3746 = vmul.f32 %v3744, %v3744
    %v3747 = vmul.f32 %v3745, %v3745
    %v3748 = vsel %vm55, %v3746, 0.0
    %3749 = vadd.xlane.f32.xlu0 %v3748
    %v3750 = vpop.xlane.xlu0 %3749
    %v3751 = vsel %vm55, %v3747, 0.0
    %3752 = vadd.xlane.f32.xlu0 %v3751
    %v3753 = vpop.xlane.xlu0 %3752
    %v3754 = vmul.f32 %v3750, %v452
    %v3755 = vmul.f32 %v3753, %v452
    %v3756 = vadd.f32 %v3754, 1e-05
    %v3757 = vadd.f32 %v3755, 1e-05
    %v3758 = vrsqrt.pop %v3756
    %v3759 = vrsqrt.pop %v3757
    %v3760 = vmul.f32 %v3744, %v3758
    %v3761 = vmul.f32 %v3745, %v3759
    %v3762 = vmul.f32 %v3760, %v3734
    %v3763 = vmul.f32 %v3761, %v3734
    %v3764 = vadd.f32 %v3762, %v3735
    %v3765 = vadd.f32 %v3763, %v3735
    %v3766 = vld [vmem:[#allocation2 + $0x540] sm:$0xff]
    %v3767 = vld [vmem:[#allocation2 + $0x550] sm:$0xff]
    %v3768 = vld [vmem:[#allocation2 + $0x560] sm:$0xff]
    %v3769 = vld [vmem:[#allocation2 + $0x570] sm:$0xff]
    %v3770 = vld [vmem:[#allocation2 + $0x580] sm:$0xff]
    %v3771 = vld [vmem:[#allocation2 + $0x590] sm:$0xff]
    %v3772 = vld [vmem:[#allocation2 + $0x5a0] sm:$0xff]
    %v3773 = vld [vmem:[#allocation2 + $0x5b0] sm:$0xff]
    %v3774 = vld [vmem:[#allocation2 + $0x5] ss:$0 sm:$0xff]
    %v3776 = vsel %vm55, %v3764, 0
    %v3779 = vsel %vm55, %v3765, 0
    %3781 = vmatprep.subr.mxu0 0.0
    %3782 = vmatpush1.msra.mxu0 %v3766
    %3783 = vmatprep.subr.mxu0 0.0
    %3784 = vmatpush1.msra.mxu0 %v3767
    %3785 = vmatprep.subr.mxu0 0.0
    %3786 = vmatpush1.msra.mxu0 %v3768
    %3787 = vmatprep.subr.mxu0 0.0
    %3788 = vmatpush1.msra.mxu0 %v3769
    %3789 = vmatprep.subr.mxu0 0.0
    %3790 = vmatpush1.msra.mxu0 %v3770
    %3791 = vmatprep.subr.mxu0 0.0
    %3792 = vmatpush1.msra.mxu0 %v3771
    %3793 = vmatprep.subr.mxu0 0.0
    %3794 = vmatpush1.msra.mxu0 %v3772
    %3795 = vmatprep.subr.mxu0 0.0
    %3796 = vmatpush1.msra.mxu0 %v3773
    %3797 = vmatprep.subr.mxu0 0.0
    %3798 = vmatpush1.msra.mxu0 0.0
    %3799 = vmatprep.subr.mxu0 0.0
    %3800 = vmatpush1.msra.mxu0 0.0
    %3801 = vmatprep.subr.mxu0 0.0
    %3802 = vmatpush1.msra.mxu0 0.0
    %3803 = vmatprep.subr.mxu0 0.0
    %3804 = vmatpush1.msra.mxu0 0.0
    %3805 = vmatprep.subr.mxu0 0.0
    %3806 = vmatpush1.msra.mxu0 0.0
    %3807 = vmatprep.subr.mxu0 0.0
    %3808 = vmatpush1.msra.mxu0 0.0
    %3809 = vmatprep.subr.mxu0 0.0
    %3810 = vmatpush1.msra.mxu0 0.0
    %3811 = vmatprep.subr.mxu0 0.0
    %3812 = vmatpush1.msra.mxu0 0.0
    %3813 = vmatprep.subr.mxu0 0.0
    %3814 = vmatpush1.msra.mxu0 0.0
    %3815 = vmatprep.subr.mxu0 0.0
    %3816 = vmatpush1.msra.mxu0 0.0
    %3817 = vmatprep.subr.mxu0 0.0
    %3818 = vmatpush1.msra.mxu0 0.0
    %3819 = vmatprep.subr.mxu0 0.0
    %3820 = vmatpush1.msra.mxu0 0.0
    %3821 = vmatprep.subr.mxu0 0.0
    %3822 = vmatpush1.msra.mxu0 0.0
    %3823 = vmatprep.subr.mxu0 0.0
    %3824 = vmatpush1.msra.mxu0 0.0
    %3825 = vmatprep.subr.mxu0 0.0
    %3826 = vmatpush1.msra.mxu0 0.0
    %3827 = vmatprep.subr.mxu0 0.0
    %3828 = vmatpush1.msra.mxu0 0.0
    %3829 = vmatprep.subr.mxu0 0.0
    %3830 = vmatpush1.msra.mxu0 0.0
    %3831 = vmatprep.subr.mxu0 0.0
    %3832 = vmatpush1.msra.mxu0 0.0
    %3833 = vmatprep.subr.mxu0 0.0
    %3834 = vmatpush1.msra.mxu0 0.0
    %3835 = vmatprep.subr.mxu0 0.0
    %3836 = vmatpush1.msra.mxu0 0.0
    %3837 = vmatprep.subr.mxu0 0.0
    %3838 = vmatpush1.msra.mxu0 0.0
    %3839 = vmatprep.subr.mxu0 0.0
    %3840 = vmatpush1.msra.mxu0 0.0
    %3841 = vmatprep.subr.mxu0 0.0
    %3842 = vmatpush1.msra.mxu0 0.0
    %3843 = vmatprep.subr.mxu0 0.0
    %3844 = vmatpush1.msra.mxu0 0.0
    %3845 = vmatprep.mubr.f32.mxu0 0.0
    %3846 = vmatmul.mubr.f32.gmra.mrb[0].mxu0 %v3776
    %v3847 = vpop.f32.mrb[0].mxu0
    %v3848 = vadd.f32 %v3774, %v3847
    %v3849 = vpop.f32.mrb[0].mxu0
    %3850 = vmatprep.mubr.f32.mxu0 0.0
    %3851 = vmatmul.mubr.f32.gmra.mrb[0].mxu0 %v3779
    %v3852 = vpop.f32.mrb[0].mxu0
    %v3853 = vadd.f32 %v3774, %v3852
    %v3854 = vpop.f32.mrb[0].mxu0
    %3855 = vdwg.mxu0
    %3856 = vst [vmem:[%s3] sm:$0xff] %v3848
    %3857 = vst [vmem:[%s3 + $0x8] sm:$0xff] %v3853
    // Predicated region
    $region22: #{transformer_backbone_forward.1} parent=1 // pred_check
      _
    $region23: #{transformer_backbone_forward.1} parent=1 // pred_check_branch
      %3859 = sbr.rel (0) target = $region25
    $region24: #{transformer_backbone_forward.1} parent=1 // pred_region
      _
    $region25: #{transformer_backbone_forward.1} parent=1 // pred_fallthru
      _
    // Predicated region
    $region26: #{transformer_backbone_forward.1} parent=1 // pred_check
      _
    $region27: #{transformer_backbone_forward.1} parent=1 // pred_check_branch
      %3861 = sbr.rel (0) target = $region29
    $region28: #{transformer_backbone_forward.1} parent=1 // pred_region
      _
    $region29: #{transformer_backbone_forward.1} parent=1 // pred_fallthru
      _
    %3862 = vsyncpa [#allocation3], 1
    %3863 = vsyncpa [#allocation5], 1

</llo_original>
